<compile_context>
chip_gen: v7x
topology: tpu7x:2x2x1
jax: 0.10.0
libtpu: 0.0.40
codegen_flags: <defaults>
</compile_context>

<pallas_src>
import functools

import jax
import jax.numpy as jnp
from jax import lax
from jax.experimental import pallas as pl
from jax.experimental.pallas import tpu as pltpu

# Module hyper-parameters (from model.py)
N_EMBD = 256
NUM_HEADS = 4
HEAD_SIZE = N_EMBD // NUM_HEADS  # 64


def _mha_kernel(x_ref, wqkv_ref, wp_ref, bp_ref, o_ref, *, num_heads, head_size):
    # x_ref   : (B_TILE, T, C)
    # wqkv_ref: (C, 3*H*hs)   fused [Q | K | V], head-major columns; scale folded into Q cols
    # wp_ref  : (C, C)        output projection (already transposed: y = o_all @ wp + b)
    # bp_ref  : (1, C)
    # o_ref   : (B_TILE, T, C)
    bt, T, C = x_ref.shape
    hhs = num_heads * head_size
    M = bt * T

    # ---- fused QKV projection: one lane-dense (M, C) @ (C, 3*H*hs) MXU matmul ----
    x2d = x_ref[...].reshape(M, C)                     # leading-dim merge (layout-friendly)
    qkv = jnp.dot(x2d, wqkv_ref[...], preferred_element_type=jnp.float32)
    qkv = qkv.astype(x2d.dtype)                        # keep MXU operands in compute dtype

    # Split once into three lane-aligned (M, 256) slabs (offsets 0/256/512 are 128-aligned).
    q_all = qkv[:, :hhs].reshape(bt, T, hhs)
    k_all = qkv[:, hhs:2 * hhs].reshape(bt, T, hhs)
    v_all = qkv[:, 2 * hhs:].reshape(bt, T, hhs)

    # Causal mask built once with 2-D iotas, reused by every head / batch row.
    row = lax.broadcasted_iota(jnp.int32, (T, T), 0)
    col = lax.broadcasted_iota(jnp.int32, (T, T), 1)
    causal = (col <= row)[None, :, :]                  # (1, T, T); diagonal always unmasked

    head_outs = []
    for h in range(num_heads):                         # static (unrolled) loop over 4 heads
        lo = h * head_size
        q_h = q_all[:, :, lo:lo + head_size]
        k_h = k_all[:, :, lo:lo + head_size]
        v_h = v_all[:, :, lo:lo + head_size]

        # Scale already folded into Q weights; f32 accumulate + f32 softmax.
        s = jnp.einsum('btd,bsd->bts', q_h, k_h, preferred_element_type=jnp.float32)
        s = jnp.where(causal, s, -jnp.inf)             # safe: diagonal never masked

        m = jnp.max(s, axis=-1, keepdims=True)
        e = jnp.exp(s - m)
        den = jnp.sum(e, axis=-1, keepdims=True)
        p = e * pl.reciprocal(den, approx=True)        # EUP vrcp slot -> effectively free

        o_h = jnp.einsum('bts,bsd->btd', p.astype(v_h.dtype), v_h,
                         preferred_element_type=jnp.float32)        # (bt, T, hs)
        head_outs.append(o_h.reshape(M, head_size))

    # Head-concat into one (M, C) slab, then a SINGLE K=256 projection matmul:
    # MXU does the cross-head accumulation, no running f32 accumulator in VMEM.
    o_all = jnp.concatenate(head_outs, axis=1).astype(wp_ref.dtype)  # (M, C)
    y = jnp.dot(o_all, wp_ref[...], preferred_element_type=jnp.float32)
    y = y + bp_ref[...].astype(jnp.float32)

    o_ref[...] = y.reshape(bt, T, C).astype(o_ref.dtype)


def _pick_batch_tile(batch, seq_len, target_rows=256, min_steps=4):
    """Largest divisor of `batch` with tile*T <= ~target_rows, preferring >= min_steps grid
    steps so both v7x TensorCores get >= 2 pipelined steps each."""
    divisors = [d for d in range(1, batch + 1) if batch % d == 0]
    cap = max(target_rows, seq_len)
    good = [d for d in divisors if d * seq_len <= cap and batch // d >= min_steps]
    if good:
        return max(good)
    fitting = [d for d in divisors if d * seq_len <= cap]
    return max(fitting) if fitting else 1


def multi_head_attention(x, wq, wk, wv, w_proj, b_proj,
                         num_heads=NUM_HEADS, head_size=HEAD_SIZE,
                         batch_tile=None, compute_dtype=None):
    """x: (B, T, C); wq/wk/wv: (H, C, hs) (so q = x @ wq[h]); w_proj: (C, C) already
    transposed so y = out @ w_proj + b_proj; b_proj: (C,).

    compute_dtype: optional override (e.g. jnp.bfloat16 for v5e/v6e/v7x MXU throughput);
    all matmuls still accumulate in f32 via preferred_element_type.
    """
    B, T, C = x.shape
    H, hs = num_heads, head_size
    dt = compute_dtype if compute_dtype is not None else x.dtype

    # One-time weight packing in the wrapper (grid-invariant, DMA'd once, amortized).
    scale = jnp.asarray(C, jnp.float32) ** -0.5        # PyTorch scales by n_embd**-0.5
    wq_cols = (jnp.transpose(wq, (1, 0, 2)).reshape(C, H * hs)
               * scale.astype(wq.dtype))               # fold scale into Q weight columns
    wk_cols = jnp.transpose(wk, (1, 0, 2)).reshape(C, H * hs)
    wv_cols = jnp.transpose(wv, (1, 0, 2)).reshape(C, H * hs)
    w_qkv = jnp.concatenate([wq_cols, wk_cols, wv_cols], axis=1).astype(dt)  # (C, 3*H*hs)
    w_p = w_proj.astype(dt)                                                  # (C, C)
    b_p = b_proj.reshape(1, C).astype(dt)                                    # (1, C)
    x_c = x.astype(dt)

    bt = batch_tile if batch_tile is not None else _pick_batch_tile(B, T)
    assert B % bt == 0, "batch must be divisible by the batch tile"

    kernel = functools.partial(_mha_kernel, num_heads=H, head_size=hs)

    return pl.pallas_call(
        kernel,
        out_shape=jax.ShapeDtypeStruct((B, T, C), x.dtype),
        grid_spec=pltpu.PrefetchScalarGridSpec(
            num_scalar_prefetch=0,
            grid=(B // bt,),
            in_specs=[
                pl.BlockSpec((bt, T, C), lambda b: (b, 0, 0)),        # x tile
                pl.BlockSpec((C, 3 * H * hs), lambda b: (0, 0)),      # fused QKV weights
                pl.BlockSpec((C, C), lambda b: (0, 0)),               # output projection
                pl.BlockSpec((1, C), lambda b: (0, 0)),               # proj bias
            ],
            out_specs=pl.BlockSpec((bt, T, C), lambda b: (b, 0, 0)),
        ),
        compiler_params=pltpu.CompilerParams(dimension_semantics=("parallel",)),
    )(x_c, w_qkv, w_p, b_p)


def _reference(x, wq, wk, wv, w_proj, b_proj):
    """Pure-JAX reference mirroring the PyTorch forward (dropout p=0.0 -> identity)."""
    B, T, C = x.shape
    scale = C ** (-0.5)
    outs = []
    for h in range(wq.shape[0]):
        q = x @ wq[h]
        k = x @ wk[h]
        v = x @ wv[h]
        wei = (q @ jnp.swapaxes(k, -2, -1)) * scale
        mask = jnp.tril(jnp.ones((T, T), dtype=bool))
        wei = jnp.where(mask, wei, -jnp.inf)
        wei = jax.nn.softmax(wei, axis=-1)
        outs.append(wei @ v)
    out = jnp.concatenate(outs, axis=-1)
    return out @ w_proj + b_proj


if __name__ == "__main__":
    key = jax.random.PRNGKey(0)
    kx, kq, kk, kv, kp, kb = jax.random.split(key, 6)

    B, T, C = 16, 32, N_EMBD          # bt=4 -> (4, 32, 256) tiles, grid=(4,) parallel steps
    H, HS = NUM_HEADS, HEAD_SIZE

    x = jax.random.normal(kx, (B, T, C), dtype=jnp.float32)
    wq = jax.random.normal(kq, (H, C, HS), dtype=jnp.float32) * 0.02
    wk = jax.random.normal(kk, (H, C, HS), dtype=jnp.float32) * 0.02
    wv = jax.random.normal(kv, (H, C, HS), dtype=jnp.float32) * 0.02
    w_proj = jax.random.normal(kp, (C, C), dtype=jnp.float32) * 0.02
    b_proj = jax.random.normal(kb, (C,), dtype=jnp.float32) * 0.02

    out = multi_head_attention(x, wq, wk, wv, w_proj, b_proj)
    out = jax.block_until_ready(out)

    ref = jax.block_until_ready(_reference(x, wq, wk, wv, w_proj, b_proj))
    assert out.shape == (B, T, C)
    # Tolerance loosened vs. 2e-4: pl.reciprocal(approx=True) is ~1e-3 relative-error class.
    assert jnp.allclose(out, ref, atol=2e-3, rtol=2e-3), "mismatch vs pure-JAX reference"

    print("KERNEL_OK")
</pallas_src>

<mosaic_0001>
module attributes {stable_mosaic.version = 11 : i64} {
  func.func @_mha_kernel(%arg0: i32, %arg1: memref<4x32x256xf32, #tpu.memory_space<vmem>>, %arg2: memref<256x768xf32, #tpu.memory_space<vmem>>, %arg3: memref<256x256xf32, #tpu.memory_space<vmem>>, %arg4: memref<1x256xf32, #tpu.memory_space<vmem>>, %arg5: memref<4x32x256xf32, #tpu.memory_space<vmem>>) attributes {dimension_semantics = [#tpu.dimension_semantics<parallel>], iteration_bounds = array<i64: 4>, scalar_prefetch = 0 : i64, scratch_operands = 0 : i64, tpu.core_type = #tpu.core_type<tc>, window_params = [{transform_indices = @transform_0, window_bounds = array<i64: 4, 32, 256>}, {pipeline_mode = #tpu.pipeline_mode<synchronous>, transform_indices = @transform_1, window_bounds = array<i64: 256, 768>}, {pipeline_mode = #tpu.pipeline_mode<synchronous>, transform_indices = @transform_2, window_bounds = array<i64: 256, 256>}, {pipeline_mode = #tpu.pipeline_mode<synchronous>, transform_indices = @transform_3, window_bounds = array<i64: 1, 256>}, {transform_indices = @transform_4, window_bounds = array<i64: 4, 32, 256>}]} {
    %c0 = arith.constant 0 : index
    %c0_0 = arith.constant 0 : index
    %c0_1 = arith.constant 0 : index
    %0 = vector.load %arg1[%c0, %c0_0, %c0_1] : memref<4x32x256xf32, #tpu.memory_space<vmem>>, vector<4x32x256xf32>
    %1 = vector.shape_cast %0 : vector<4x32x256xf32> to vector<128x256xf32>
    %c0_2 = arith.constant 0 : index
    %c0_3 = arith.constant 0 : index
    %2 = vector.load %arg2[%c0_2, %c0_3] : memref<256x768xf32, #tpu.memory_space<vmem>>, vector<256x768xf32>
    %cst = arith.constant dense<0.000000e+00> : vector<128x768xf32>
    %3 = tpu.matmul %1, %2, %cst {dimension_numbers = #tpu.dot_dimension_numbers<[1], [0], [0], [1], [0, 0, 1, 1], [], []>} : vector<128x256xf32>, vector<256x768xf32>, vector<128x768xf32> -> vector<128x768xf32>
    %4 = vector.extract_strided_slice %3 {offsets = [0, 0], sizes = [128, 256], strides = [1, 1]} : vector<128x768xf32> to vector<128x256xf32>
    %5 = vector.shape_cast %4 : vector<128x256xf32> to vector<4x32x256xf32>
    %6 = vector.extract_strided_slice %3 {offsets = [0, 256], sizes = [128, 256], strides = [1, 1]} : vector<128x768xf32> to vector<128x256xf32>
    %7 = vector.shape_cast %6 : vector<128x256xf32> to vector<4x32x256xf32>
    %8 = vector.extract_strided_slice %3 {offsets = [0, 512], sizes = [128, 256], strides = [1, 1]} : vector<128x768xf32> to vector<128x256xf32>
    %9 = vector.shape_cast %8 : vector<128x256xf32> to vector<4x32x256xf32>
    %10 = tpu.iota {dimensions = array<i32: 0>} : vector<32x32xi32>
    %11 = tpu.iota {dimensions = array<i32: 1>} : vector<32x32xi32>
    %12 = arith.cmpi sle, %11, %10 : vector<32x32xi32>
    %13 = vector.shape_cast %12 : vector<32x32xi1> to vector<1x32x32xi1>
    %14 = vector.extract_strided_slice %5 {offsets = [0, 0, 0], sizes = [4, 32, 64], strides = [1, 1, 1]} : vector<4x32x256xf32> to vector<4x32x64xf32>
    %15 = vector.extract_strided_slice %7 {offsets = [0, 0, 0], sizes = [4, 32, 64], strides = [1, 1, 1]} : vector<4x32x256xf32> to vector<4x32x64xf32>
    %16 = vector.extract_strided_slice %9 {offsets = [0, 0, 0], sizes = [4, 32, 64], strides = [1, 1, 1]} : vector<4x32x256xf32> to vector<4x32x64xf32>
    "tpu.trace_start"() <{level = 10 : i32, message = "btd,bsd->bts"}> : () -> ()
    %cst_4 = arith.constant dense<0.000000e+00> : vector<4x32x32xf32>
    %17 = tpu.matmul %14, %15, %cst_4 {dimension_numbers = #tpu.dot_dimension_numbers<[2], [2], [1], [1], [0, 0, 0, 1, 1, 1], [0], [0]>} : vector<4x32x64xf32>, vector<4x32x64xf32>, vector<4x32x32xf32> -> vector<4x32x32xf32>
    %cst_5 = arith.constant 0xFF800000 : f32
    "tpu.trace_stop"() : () -> ()
    %18 = vector.shape_cast %13 : vector<1x32x32xi1> to vector<1x32x32xi1>
    %19 = vector.broadcast %18 : vector<1x32x32xi1> to vector<4x32x32xi1>
    %20 = vector.broadcast %cst_5 : f32 to vector<4x32x32xf32>
    %21 = arith.select %19, %17, %20 : vector<4x32x32xi1>, vector<4x32x32xf32>
    %cst_6 = arith.constant dense<0xFF800000> : vector<4x32xf32>
    %22 = vector.multi_reduction <maximumf>, %21, %cst_6 [2] : vector<4x32x32xf32> to vector<4x32xf32>
    %23 = vector.shape_cast %22 : vector<4x32xf32> to vector<4x32x1xf32>
    %24 = vector.broadcast %23 : vector<4x32x1xf32> to vector<4x32x32xf32>
    %25 = arith.subf %21, %24 : vector<4x32x32xf32>
    %26 = math.exp %25 : vector<4x32x32xf32>
    %cst_7 = arith.constant dense<0.000000e+00> : vector<4x32xf32>
    %27 = vector.multi_reduction <add>, %26, %cst_7 [2] : vector<4x32x32xf32> to vector<4x32xf32>
    %28 = vector.shape_cast %27 : vector<4x32xf32> to vector<4x32x1xf32>
    %29 = tpu.reciprocal %28 {approx = true} : vector<4x32x1xf32> -> vector<4x32x1xf32>
    %30 = vector.broadcast %29 : vector<4x32x1xf32> to vector<4x32x32xf32>
    %31 = arith.mulf %26, %30 : vector<4x32x32xf32>
    "tpu.trace_start"() <{level = 10 : i32, message = "bts,bsd->btd"}> : () -> ()
    %cst_8 = arith.constant dense<0.000000e+00> : vector<4x32x64xf32>
    %32 = tpu.matmul %31, %16, %cst_8 {dimension_numbers = #tpu.dot_dimension_numbers<[2], [1], [1], [2], [0, 0, 0, 1, 1, 2], [0], [0]>} : vector<4x32x32xf32>, vector<4x32x64xf32>, vector<4x32x64xf32> -> vector<4x32x64xf32>
    "tpu.trace_stop"() : () -> ()
    %33 = vector.shape_cast %32 : vector<4x32x64xf32> to vector<128x64xf32>
    %34 = vector.extract_strided_slice %5 {offsets = [0, 0, 64], sizes = [4, 32, 64], strides = [1, 1, 1]} : vector<4x32x256xf32> to vector<4x32x64xf32>
    %35 = vector.extract_strided_slice %7 {offsets = [0, 0, 64], sizes = [4, 32, 64], strides = [1, 1, 1]} : vector<4x32x256xf32> to vector<4x32x64xf32>
    %36 = vector.extract_strided_slice %9 {offsets = [0, 0, 64], sizes = [4, 32, 64], strides = [1, 1, 1]} : vector<4x32x256xf32> to vector<4x32x64xf32>
    "tpu.trace_start"() <{level = 10 : i32, message = "btd,bsd->bts"}> : () -> ()
    %cst_9 = arith.constant dense<0.000000e+00> : vector<4x32x32xf32>
    %37 = tpu.matmul %34, %35, %cst_9 {dimension_numbers = #tpu.dot_dimension_numbers<[2], [2], [1], [1], [0, 0, 0, 1, 1, 1], [0], [0]>} : vector<4x32x64xf32>, vector<4x32x64xf32>, vector<4x32x32xf32> -> vector<4x32x32xf32>
    %cst_10 = arith.constant 0xFF800000 : f32
    "tpu.trace_stop"() : () -> ()
    %38 = vector.shape_cast %13 : vector<1x32x32xi1> to vector<1x32x32xi1>
    %39 = vector.broadcast %38 : vector<1x32x32xi1> to vector<4x32x32xi1>
    %40 = vector.broadcast %cst_10 : f32 to vector<4x32x32xf32>
    %41 = arith.select %39, %37, %40 : vector<4x32x32xi1>, vector<4x32x32xf32>
    %cst_11 = arith.constant dense<0xFF800000> : vector<4x32xf32>
    %42 = vector.multi_reduction <maximumf>, %41, %cst_11 [2] : vector<4x32x32xf32> to vector<4x32xf32>
    %43 = vector.shape_cast %42 : vector<4x32xf32> to vector<4x32x1xf32>
    %44 = vector.broadcast %43 : vector<4x32x1xf32> to vector<4x32x32xf32>
    %45 = arith.subf %41, %44 : vector<4x32x32xf32>
    %46 = math.exp %45 : vector<4x32x32xf32>
    %cst_12 = arith.constant dense<0.000000e+00> : vector<4x32xf32>
    %47 = vector.multi_reduction <add>, %46, %cst_12 [2] : vector<4x32x32xf32> to vector<4x32xf32>
    %48 = vector.shape_cast %47 : vector<4x32xf32> to vector<4x32x1xf32>
    %49 = tpu.reciprocal %48 {approx = true} : vector<4x32x1xf32> -> vector<4x32x1xf32>
    %50 = vector.broadcast %49 : vector<4x32x1xf32> to vector<4x32x32xf32>
    %51 = arith.mulf %46, %50 : vector<4x32x32xf32>
    "tpu.trace_start"() <{level = 10 : i32, message = "bts,bsd->btd"}> : () -> ()
    %cst_13 = arith.constant dense<0.000000e+00> : vector<4x32x64xf32>
    %52 = tpu.matmul %51, %36, %cst_13 {dimension_numbers = #tpu.dot_dimension_numbers<[2], [1], [1], [2], [0, 0, 0, 1, 1, 2], [0], [0]>} : vector<4x32x32xf32>, vector<4x32x64xf32>, vector<4x32x64xf32> -> vector<4x32x64xf32>
    "tpu.trace_stop"() : () -> ()
    %53 = vector.shape_cast %52 : vector<4x32x64xf32> to vector<128x64xf32>
    %54 = vector.extract_strided_slice %5 {offsets = [0, 0, 128], sizes = [4, 32, 64], strides = [1, 1, 1]} : vector<4x32x256xf32> to vector<4x32x64xf32>
    %55 = vector.extract_strided_slice %7 {offsets = [0, 0, 128], sizes = [4, 32, 64], strides = [1, 1, 1]} : vector<4x32x256xf32> to vector<4x32x64xf32>
    %56 = vector.extract_strided_slice %9 {offsets = [0, 0, 128], sizes = [4, 32, 64], strides = [1, 1, 1]} : vector<4x32x256xf32> to vector<4x32x64xf32>
    "tpu.trace_start"() <{level = 10 : i32, message = "btd,bsd->bts"}> : () -> ()
    %cst_14 = arith.constant dense<0.000000e+00> : vector<4x32x32xf32>
    %57 = tpu.matmul %54, %55, %cst_14 {dimension_numbers = #tpu.dot_dimension_numbers<[2], [2], [1], [1], [0, 0, 0, 1, 1, 1], [0], [0]>} : vector<4x32x64xf32>, vector<4x32x64xf32>, vector<4x32x32xf32> -> vector<4x32x32xf32>
    %cst_15 = arith.constant 0xFF800000 : f32
    "tpu.trace_stop"() : () -> ()
    %58 = vector.shape_cast %13 : vector<1x32x32xi1> to vector<1x32x32xi1>
    %59 = vector.broadcast %58 : vector<1x32x32xi1> to vector<4x32x32xi1>
    %60 = vector.broadcast %cst_15 : f32 to vector<4x32x32xf32>
    %61 = arith.select %59, %57, %60 : vector<4x32x32xi1>, vector<4x32x32xf32>
    %cst_16 = arith.constant dense<0xFF800000> : vector<4x32xf32>
    %62 = vector.multi_reduction <maximumf>, %61, %cst_16 [2] : vector<4x32x32xf32> to vector<4x32xf32>
    %63 = vector.shape_cast %62 : vector<4x32xf32> to vector<4x32x1xf32>
    %64 = vector.broadcast %63 : vector<4x32x1xf32> to vector<4x32x32xf32>
    %65 = arith.subf %61, %64 : vector<4x32x32xf32>
    %66 = math.exp %65 : vector<4x32x32xf32>
    %cst_17 = arith.constant dense<0.000000e+00> : vector<4x32xf32>
    %67 = vector.multi_reduction <add>, %66, %cst_17 [2] : vector<4x32x32xf32> to vector<4x32xf32>
    %68 = vector.shape_cast %67 : vector<4x32xf32> to vector<4x32x1xf32>
    %69 = tpu.reciprocal %68 {approx = true} : vector<4x32x1xf32> -> vector<4x32x1xf32>
    %70 = vector.broadcast %69 : vector<4x32x1xf32> to vector<4x32x32xf32>
    %71 = arith.mulf %66, %70 : vector<4x32x32xf32>
    "tpu.trace_start"() <{level = 10 : i32, message = "bts,bsd->btd"}> : () -> ()
    %cst_18 = arith.constant dense<0.000000e+00> : vector<4x32x64xf32>
    %72 = tpu.matmul %71, %56, %cst_18 {dimension_numbers = #tpu.dot_dimension_numbers<[2], [1], [1], [2], [0, 0, 0, 1, 1, 2], [0], [0]>} : vector<4x32x32xf32>, vector<4x32x64xf32>, vector<4x32x64xf32> -> vector<4x32x64xf32>
    "tpu.trace_stop"() : () -> ()
    %73 = vector.shape_cast %72 : vector<4x32x64xf32> to vector<128x64xf32>
    %74 = vector.extract_strided_slice %5 {offsets = [0, 0, 192], sizes = [4, 32, 64], strides = [1, 1, 1]} : vector<4x32x256xf32> to vector<4x32x64xf32>
    %75 = vector.extract_strided_slice %7 {offsets = [0, 0, 192], sizes = [4, 32, 64], strides = [1, 1, 1]} : vector<4x32x256xf32> to vector<4x32x64xf32>
    %76 = vector.extract_strided_slice %9 {offsets = [0, 0, 192], sizes = [4, 32, 64], strides = [1, 1, 1]} : vector<4x32x256xf32> to vector<4x32x64xf32>
    "tpu.trace_start"() <{level = 10 : i32, message = "btd,bsd->bts"}> : () -> ()
    %cst_19 = arith.constant dense<0.000000e+00> : vector<4x32x32xf32>
    %77 = tpu.matmul %74, %75, %cst_19 {dimension_numbers = #tpu.dot_dimension_numbers<[2], [2], [1], [1], [0, 0, 0, 1, 1, 1], [0], [0]>} : vector<4x32x64xf32>, vector<4x32x64xf32>, vector<4x32x32xf32> -> vector<4x32x32xf32>
    %cst_20 = arith.constant 0xFF800000 : f32
    "tpu.trace_stop"() : () -> ()
    %78 = vector.shape_cast %13 : vector<1x32x32xi1> to vector<1x32x32xi1>
    %79 = vector.broadcast %78 : vector<1x32x32xi1> to vector<4x32x32xi1>
    %80 = vector.broadcast %cst_20 : f32 to vector<4x32x32xf32>
    %81 = arith.select %79, %77, %80 : vector<4x32x32xi1>, vector<4x32x32xf32>
    %cst_21 = arith.constant dense<0xFF800000> : vector<4x32xf32>
    %82 = vector.multi_reduction <maximumf>, %81, %cst_21 [2] : vector<4x32x32xf32> to vector<4x32xf32>
    %83 = vector.shape_cast %82 : vector<4x32xf32> to vector<4x32x1xf32>
    %84 = vector.broadcast %83 : vector<4x32x1xf32> to vector<4x32x32xf32>
    %85 = arith.subf %81, %84 : vector<4x32x32xf32>
    %86 = math.exp %85 : vector<4x32x32xf32>
    %cst_22 = arith.constant dense<0.000000e+00> : vector<4x32xf32>
    %87 = vector.multi_reduction <add>, %86, %cst_22 [2] : vector<4x32x32xf32> to vector<4x32xf32>
    %88 = vector.shape_cast %87 : vector<4x32xf32> to vector<4x32x1xf32>
    %89 = tpu.reciprocal %88 {approx = true} : vector<4x32x1xf32> -> vector<4x32x1xf32>
    %90 = vector.broadcast %89 : vector<4x32x1xf32> to vector<4x32x32xf32>
    %91 = arith.mulf %86, %90 : vector<4x32x32xf32>
    "tpu.trace_start"() <{level = 10 : i32, message = "bts,bsd->btd"}> : () -> ()
    %cst_23 = arith.constant dense<0.000000e+00> : vector<4x32x64xf32>
    %92 = tpu.matmul %91, %76, %cst_23 {dimension_numbers = #tpu.dot_dimension_numbers<[2], [1], [1], [2], [0, 0, 0, 1, 1, 2], [0], [0]>} : vector<4x32x32xf32>, vector<4x32x64xf32>, vector<4x32x64xf32> -> vector<4x32x64xf32>
    "tpu.trace_stop"() : () -> ()
    %93 = vector.shape_cast %92 : vector<4x32x64xf32> to vector<128x64xf32>
    %94 = tpu.concatenate %33, %53, %73, %93 in 1 : vector<128x64xf32>, vector<128x64xf32>, vector<128x64xf32>, vector<128x64xf32> -> vector<128x256xf32>
    %c0_24 = arith.constant 0 : index
    %c0_25 = arith.constant 0 : index
    %95 = vector.load %arg3[%c0_24, %c0_25] : memref<256x256xf32, #tpu.memory_space<vmem>>, vector<256x256xf32>
    %cst_26 = arith.constant dense<0.000000e+00> : vector<128x256xf32>
    %96 = tpu.matmul %94, %95, %cst_26 {dimension_numbers = #tpu.dot_dimension_numbers<[1], [0], [0], [1], [0, 0, 1, 1], [], []>} : vector<128x256xf32>, vector<256x256xf32>, vector<128x256xf32> -> vector<128x256xf32>
    %c0_27 = arith.constant 0 : index
    %c0_28 = arith.constant 0 : index
    %97 = vector.load %arg4[%c0_27, %c0_28] : memref<1x256xf32, #tpu.memory_space<vmem>>, vector<1x256xf32>
    %98 = vector.broadcast %97 : vector<1x256xf32> to vector<128x256xf32>
    %99 = arith.addf %96, %98 : vector<128x256xf32>
    %100 = vector.shape_cast %99 : vector<128x256xf32> to vector<4x32x256xf32>
    %c0_29 = arith.constant 0 : index
    %c0_30 = arith.constant 0 : index
    %c0_31 = arith.constant 0 : index
    %101 = vector.load %arg5[%c0_29, %c0_30, %c0_31] : memref<4x32x256xf32, #tpu.memory_space<vmem>>, vector<4x32x256xf32>
    tpu.vector_store %arg5[%c0_29, %c0_30, %c0_31], %100 {strides = array<i32>} : memref<4x32x256xf32, #tpu.memory_space<vmem>>, vector<4x32x256xf32>,
    return
  }
  func.func @transform_0(%arg0: i32) -> (i32, i32, i32) {
    %c0_i32 = arith.constant 0 : i32
    %c0_i32_0 = arith.constant 0 : i32
    %c0_i32_1 = arith.constant 0 : i32
    return %arg0, %c0_i32, %c0_i32_0 : i32, i32, i32
  }
  func.func @transform_1(%arg0: i32) -> (i32, i32) {
    %c0_i32 = arith.constant 0 : i32
    %c0_i32_0 = arith.constant 0 : i32
    %c0_i32_1 = arith.constant 0 : i32
    return %c0_i32, %c0_i32_0 : i32, i32
  }
  func.func @transform_2(%arg0: i32) -> (i32, i32) {
    %c0_i32 = arith.constant 0 : i32
    %c0_i32_0 = arith.constant 0 : i32
    %c0_i32_1 = arith.constant 0 : i32
    return %c0_i32, %c0_i32_0 : i32, i32
  }
  func.func @transform_3(%arg0: i32) -> (i32, i32) {
    %c0_i32 = arith.constant 0 : i32
    %c0_i32_0 = arith.constant 0 : i32
    %c0_i32_1 = arith.constant 0 : i32
    return %c0_i32, %c0_i32_0 : i32, i32
  }
  func.func @transform_4(%arg0: i32) -> (i32, i32, i32) {
    %c0_i32 = arith.constant 0 : i32
    %c0_i32_0 = arith.constant 0 : i32
    %c0_i32_1 = arith.constant 0 : i32
    return %arg0, %c0_i32, %c0_i32_0 : i32, i32, i32
  }
}

</mosaic_0001>

<llo_original>
// kernel: tpu_custom_call.1
$region0: #{tpu_custom_call.1}
  #allocation0 [shape = 'u32[]', space=smem, size = 0x4, offset = 0x4, fixed_abs, tag = 'smem constant byte address 0x4 - core index']
  #allocation1 [shape = 'u32[144,128]{1,0:T(1,128)}', space=vmem, size = 0x12000, scoped, tag = 'internal scratch']
  %s0 = inlined_call_operand.hbm [shape: f32[16,32,256], index: 0, kind: input, shape index: {}]
  %s1 = inlined_call_operand.hbm [shape: f32[256,768], index: 1, kind: input, shape index: {}]
  %s2 = inlined_call_operand.hbm [shape: f32[256,256], index: 2, kind: input, shape index: {}]
  %s3 = inlined_call_operand.vmem [shape: f32[1,256], index: 3, kind: input, shape index: {}]
  %s4 = inlined_call_operand.hbm [shape: f32[16,32,256], index: 4, kind: output, shape index: {}]
  %s5 = sld [smem:[#allocation0]]
  $region61: #{tpu_custom_call.1} parent=0
    _
  %s7 = ssub.s32 1, %s5
  %s8 = scalar_select 0, %s7, %s5
  $region1: #{tpu_custom_call.1} parent=0
    #allocation2 [shape = 'u8[262144]{0}', space=vmem, size = 0x40000, scoped, tag = 'input window, operand 0']
    #allocation3 [shape = 's32[2]{0}', space=sflag, size = 0x8, scoped, tag = 'scoped memory for tpu_custom_call.1']
    #allocation4 [shape = 's32[2]{0}', space=sflag, size = 0x8, scoped, tag = 'scoped memory for tpu_custom_call.1']
    #allocation5 [shape = 'u8[786432]{0}', space=vmem, size = 0xc0000, scoped, tag = 'input window, operand 1, single buffered']
    #allocation6 [shape = 's32[1]{0}', space=sflag, size = 0x4, scoped, tag = 'scoped memory for tpu_custom_call.1']
    #allocation7 [shape = 'u8[262144]{0}', space=vmem, size = 0x40000, scoped, tag = 'input window, operand 2, single buffered']
    #allocation8 [shape = 'u8[262144]{0}', space=vmem, size = 0x40000, scoped, tag = 'output window, operand 0']
    %9 = vsyncpa [#allocation3], 0
    %s10 = scalar_lea.sflag [#allocation3], 1
    %11 = vsyncpa %s10, 0
    %12 = vsyncpa [#allocation6], 0
    %13 = vsyncpa [#allocation4], 0
    %s14 = scalar_lea.sflag [#allocation4], 1
    %15 = vsyncpa %s14, 0
    loop: start=0, step=1, limit=6
    $region2: #{tpu_custom_call.1} parent=1 // loop_pre_header
      _
    $region3: #{tpu_custom_call.1} parent=1 // loop_header
      %s17 = sphi 0, %s21
      %p18 = scmp.ge.s32.totalorder %s17, 6
      %s27 = sphi 0, %s29
      %s30 = sphi 0, %s27
      %s31 = sphi 0, %s30
      %s47 = sphi 0, %s31
      %s51 = sphi 0, %s51
      %s53 = sphi 0, %s51
      %s54 = sphi 0, %s53
      %s68 = sphi 0, %s54
      %s72 = sphi 0, %s72
      %s74 = sphi 0, %s72
      %s75 = sphi 0, %s74
      %s89 = sphi 0, %s75
      %s93 = sphi 0, %s93
      %s95 = sphi 0, %s93
      %s96 = sphi 0, %s95
      %s110 = sphi 0, %s96
      %s116 = sphi 0, %s118
      %s119 = sphi 0, %s116
      %s120 = sphi 0, %s119
      %s136 = sphi 0, %s120
    $region4: #{tpu_custom_call.1} parent=1 // loop_header_branch
      %20 = sbr.rel (%p18) target = $region8
    $region5: #{tpu_custom_call.1} parent=1 // loop_body
      %s22 = ssub.s32 %s17, 1
      %s23 = ssub.s32 %s17, 2
      %s24 = sadd.s32 %s17, 1
      %s25 = ssub.s32 %s17, %s24
      %p26 = scmp.eq.s32.totalorder %s25, 0
      %s28 = sadd.s32 %s27, 1
      %s29 = scalar_select %p26, %s27, %s28
      %p32 = pneg %p26
      %p33 = scmp.eq.s32.totalorder %s17, 3
      %p34 = por %p32, %p33
      %p35 = scmp.ne.s32.totalorder %s27, %s30
      %p36 = scmp.eq.s32.totalorder %s17, 0
      %p37 = por %p35, %p36
      %p38 = scmp.ne.s32.totalorder %s27, %s30
      %p39 = scmp.eq.s32.totalorder %s22, 3
      %p40 = por %p38, %p39
      %p41 = scmp.ne.s32.totalorder %s30, %s31
      %p42 = scmp.eq.s32.totalorder %s22, 0
      %p43 = por %p41, %p42
      %p44 = scmp.ne.s32.totalorder %s30, %s31
      %p45 = scmp.eq.s32.totalorder %s23, 3
      %p46 = por %p44, %p45
      %p48 = scmp.ne.s32.totalorder %s31, %s47
      %p49 = scmp.eq.s32.totalorder %s23, 0
      %p50 = por %p48, %p49
      %s52 = sadd.s32 %s51, 1
      %p55 = scmp.eq.s32.totalorder %s17, 3
      %p56 = scmp.ne.s32.totalorder %s51, %s53
      %p57 = scmp.eq.s32.totalorder %s17, 0
      %p58 = por %p56, %p57
      %p59 = scmp.ne.s32.totalorder %s51, %s53
      %p60 = scmp.eq.s32.totalorder %s22, 3
      %p61 = por %p59, %p60
      %p62 = scmp.ne.s32.totalorder %s53, %s54
      %p63 = scmp.eq.s32.totalorder %s22, 0
      %p64 = por %p62, %p63
      %p65 = scmp.ne.s32.totalorder %s53, %s54
      %p66 = scmp.eq.s32.totalorder %s23, 3
      %p67 = por %p65, %p66
      %p69 = scmp.ne.s32.totalorder %s54, %s68
      %p70 = scmp.eq.s32.totalorder %s23, 0
      %p71 = por %p69, %p70
      %s73 = sadd.s32 %s72, 1
      %p76 = scmp.eq.s32.totalorder %s17, 3
      %p77 = scmp.ne.s32.totalorder %s72, %s74
      %p78 = scmp.eq.s32.totalorder %s17, 0
      %p79 = por %p77, %p78
      %p80 = scmp.ne.s32.totalorder %s72, %s74
      %p81 = scmp.eq.s32.totalorder %s22, 3
      %p82 = por %p80, %p81
      %p83 = scmp.ne.s32.totalorder %s74, %s75
      %p84 = scmp.eq.s32.totalorder %s22, 0
      %p85 = por %p83, %p84
      %p86 = scmp.ne.s32.totalorder %s74, %s75
      %p87 = scmp.eq.s32.totalorder %s23, 3
      %p88 = por %p86, %p87
      %p90 = scmp.ne.s32.totalorder %s75, %s89
      %p91 = scmp.eq.s32.totalorder %s23, 0
      %p92 = por %p90, %p91
      %s94 = sadd.s32 %s93, 1
      %p97 = scmp.eq.s32.totalorder %s17, 3
      %p98 = scmp.ne.s32.totalorder %s93, %s95
      %p99 = scmp.eq.s32.totalorder %s17, 0
      %p100 = por %p98, %p99
      %p101 = scmp.ne.s32.totalorder %s93, %s95
      %p102 = scmp.eq.s32.totalorder %s22, 3
      %p103 = por %p101, %p102
      %p104 = scmp.ne.s32.totalorder %s95, %s96
      %p105 = scmp.eq.s32.totalorder %s22, 0
      %p106 = por %p104, %p105
      %p107 = scmp.ne.s32.totalorder %s95, %s96
      %p108 = scmp.eq.s32.totalorder %s23, 3
      %p109 = por %p107, %p108
      %p111 = scmp.ne.s32.totalorder %s96, %s110
      %p112 = scmp.eq.s32.totalorder %s23, 0
      %p113 = por %p111, %p112
      %s114 = ssub.s32 %s17, %s24
      %p115 = scmp.eq.s32.totalorder %s114, 0
      %s117 = sadd.s32 %s116, 1
      %s118 = scalar_select %p115, %s116, %s117
      %p121 = pneg %p115
      %p122 = scmp.eq.s32.totalorder %s17, 3
      %p123 = por %p121, %p122
      %p124 = scmp.ne.s32.totalorder %s116, %s119
      %p125 = scmp.eq.s32.totalorder %s17, 0
      %p126 = por %p124, %p125
      %p127 = scmp.ne.s32.totalorder %s116, %s119
      %p128 = scmp.eq.s32.totalorder %s22, 3
      %p129 = por %p127, %p128
      %p130 = scmp.ne.s32.totalorder %s119, %s120
      %p131 = scmp.eq.s32.totalorder %s22, 0
      %p132 = por %p130, %p131
      %p133 = scmp.ne.s32.totalorder %s119, %s120
      %p134 = scmp.eq.s32.totalorder %s23, 3
      %p135 = por %p133, %p134
      %p137 = scmp.ne.s32.totalorder %s120, %s136
      %p138 = scmp.eq.s32.totalorder %s23, 0
      %p139 = por %p137, %p138
      %p140 = scmp.le.s32.totalorder 1, %s17
      %p141 = scmp.lt.s32.totalorder %s17, 5
      %p142 = pnand %p140, %p141
      %p143 = pneg %p142
      // Predicated region
      $region9: #{tpu_custom_call.1} parent=5 // pred_check
        _
      $region10: #{tpu_custom_call.1} parent=5 // pred_check_branch
        %145 = sbr.rel (%p142) target = $region12
      $region11: #{tpu_custom_call.1} parent=5 // pred_region
        %s146 = ssub.s32 %s17, 1
        // Predicated region
        $region13: #{tpu_custom_call.1} parent=11 // pred_check
          %p147 = pneg %p64
        $region14: #{tpu_custom_call.1} parent=11 // pred_check_branch
          %149 = sbr.rel (%p147) target = $region16
        $region15: #{tpu_custom_call.1} parent=11 // pred_region
          %s151 = ssub.s32 24576, 24576
          %152 = vsyncadd [#allocation6], %s151
          %s153 = sshll.u32 [#allocation5], 4
          %s154 = int_to_ptr.vmem [resolvable:$true] %s153
          %159 = dma.hbm_to_vmem [thread:$0]  %s1, 24576, %s154, [#allocation6], 768, 768, 48
        $region16: #{tpu_custom_call.1} parent=11 // pred_fallthru
          _
        // Predicated region
        $region17: #{tpu_custom_call.1} parent=11 // pred_check
          %p160 = pneg %p85
        $region18: #{tpu_custom_call.1} parent=11 // pred_check_branch
          %162 = sbr.rel (%p160) target = $region20
        $region19: #{tpu_custom_call.1} parent=11 // pred_region
          %s164 = ssub.s32 8192, 8192
          %165 = vsyncadd [#allocation6], %s164
          %s166 = sshll.u32 [#allocation7], 4
          %s167 = int_to_ptr.vmem [resolvable:$true] %s166
          %172 = dma.hbm_to_vmem [thread:$0]  %s2, 8192, %s167, [#allocation6], 256, 256, 16
        $region20: #{tpu_custom_call.1} parent=11 // pred_fallthru
          _
        // Predicated region
        $region21: #{tpu_custom_call.1} parent=11 // pred_check
          %p173 = pneg %p106
        $region22: #{tpu_custom_call.1} parent=11 // pred_check_branch
          %175 = sbr.rel (%p173) target = $region24
        $region23: #{tpu_custom_call.1} parent=11 // pred_region
          _
        $region24: #{tpu_custom_call.1} parent=11 // pred_fallthru
          _
      $region12: #{tpu_custom_call.1} parent=5 // pred_fallthru
        _
      %p176 = scmp.lt.s32.totalorder %s17, 4
      // Predicated region
      $region25: #{tpu_custom_call.1} parent=5 // pred_check
        %p177 = pneg %p176
      $region26: #{tpu_custom_call.1} parent=5 // pred_check_branch
        %179 = sbr.rel (%p177) target = $region28
      $region27: #{tpu_custom_call.1} parent=5 // pred_region
        // Predicated region
        $region29: #{tpu_custom_call.1} parent=27 // pred_check
          %p180 = pneg %p37
        $region30: #{tpu_custom_call.1} parent=27 // pred_check_branch
          %182 = sbr.rel (%p180) target = $region32
        $region31: #{tpu_custom_call.1} parent=27 // pred_region
          %s183 = sand.u32 %s27, 1
          %s184 = scalar_lea.sflag [#allocation3], %s183
          %s185 = sand.u32 %s27, 1
          %s186 = smul.addr %s185, 256
          %s187 = scalar_lea.vmem [#allocation2], %s186
          %s188 = smul.u32 4, %s17
          %s190 = ssub.s32 4096, 4096
          %191 = vsyncadd %s184, %s190
          %s192 = smul.addr %s188, 8
          %s193 = smul.addr %s192, 128
          %s194 = scalar_lea.hbm %s0, %s193
          %s195 = sshll.u32 %s187, 4
          %s196 = int_to_ptr.vmem [resolvable:$true] %s195
          %201 = dma.hbm_to_vmem [thread:$0]  %s194, 4096, %s196, %s184, 256, 256, 16
        $region32: #{tpu_custom_call.1} parent=27 // pred_fallthru
          _
      $region28: #{tpu_custom_call.1} parent=5 // pred_fallthru
        _
      %p202 = scmp.le.s32.totalorder 1, %s17
      %p203 = scmp.lt.s32.totalorder %s17, 5
      %p204 = pnand %p202, %p203
      %p205 = pneg %p204
      // Predicated region
      $region33: #{tpu_custom_call.1} parent=5 // pred_check
        _
      $region34: #{tpu_custom_call.1} parent=5 // pred_check_branch
        %207 = sbr.rel (%p204) target = $region36
      $region35: #{tpu_custom_call.1} parent=5 // pred_region
        %s208 = ssub.s32 %s17, 1
        %s209 = sand.u32 %s30, 1
        %s210 = scalar_lea.sflag [#allocation3], %s209
        %s211 = sand.u32 %s30, 1
        %s212 = smul.addr %s211, 256
        %s213 = scalar_lea.vmem [#allocation2], %s212
        // Predicated region
        $region37: #{tpu_custom_call.1} parent=35 // pred_check
          %p214 = pneg %p43
        $region38: #{tpu_custom_call.1} parent=35 // pred_check_branch
          %216 = sbr.rel (%p214) target = $region40
        $region39: #{tpu_custom_call.1} parent=35 // pred_region
          %217 = dma.done %s210, 4096
        $region40: #{tpu_custom_call.1} parent=35 // pred_fallthru
          _
        // Predicated region
        $region41: #{tpu_custom_call.1} parent=35 // pred_check
          %p218 = pneg %p64
        $region42: #{tpu_custom_call.1} parent=35 // pred_check_branch
          %220 = sbr.rel (%p218) target = $region44
        $region43: #{tpu_custom_call.1} parent=35 // pred_region
          %221 = dma.done [#allocation6], 24576
        $region44: #{tpu_custom_call.1} parent=35 // pred_fallthru
          _
        // Predicated region
        $region45: #{tpu_custom_call.1} parent=35 // pred_check
          %p222 = pneg %p85
        $region46: #{tpu_custom_call.1} parent=35 // pred_check_branch
          %224 = sbr.rel (%p222) target = $region48
        $region47: #{tpu_custom_call.1} parent=35 // pred_region
          %225 = dma.done [#allocation6], 8192
        $region48: #{tpu_custom_call.1} parent=35 // pred_fallthru
          _
        %s226 = sand.u32 %s30, 1
        %s227 = scalar_lea.sflag [#allocation3], %s226
        %s228 = sand.u32 %s30, 1
        %s229 = smul.addr %s228, 256
        %s230 = scalar_lea.vmem [#allocation2], %s229
        %p231 = pneg %p43
        %p232 = pneg %p40
        %p233 = pneg %p64
        %p234 = pneg %p61
        %p235 = pneg %p85
        %p236 = pneg %p82
        %p237 = pneg %p106
        %p238 = pneg %p103
        %p239 = pneg %p132
        %p240 = pneg %p129
        %s241 = sand.u32 %s119, 1
        %s242 = scalar_lea.sflag [#allocation4], %s241
        %s243 = sand.u32 %s119, 1
        %s244 = smul.addr %s243, 256
        %s245 = scalar_lea.vmem [#allocation8], %s244
        %s246 = smul.u32 4, %s22
        %s247 = smul.u32 4, %s22
        %v248 = vld [vmem:[%s213] sm:$0xff]
        %v249 = vld [vmem:[%s213 + $0x8] sm:$0xff]
        %v250 = vld [vmem:[%s213 + $0x10] sm:$0xff]
        %v251 = vld [vmem:[%s213 + $0x18] sm:$0xff]
        %v252 = vld [vmem:[%s213 + $0x20] sm:$0xff]
        %v253 = vld [vmem:[%s213 + $0x28] sm:$0xff]
        %v254 = vld [vmem:[%s213 + $0x30] sm:$0xff]
        %v255 = vld [vmem:[%s213 + $0x38] sm:$0xff]
        %v256 = vld [vmem:[%s213 + $0x40] sm:$0xff]
        %v257 = vld [vmem:[%s213 + $0x48] sm:$0xff]
        %v258 = vld [vmem:[%s213 + $0x50] sm:$0xff]
        %v259 = vld [vmem:[%s213 + $0x58] sm:$0xff]
        %v260 = vld [vmem:[%s213 + $0x60] sm:$0xff]
        %v261 = vld [vmem:[%s213 + $0x68] sm:$0xff]
        %v262 = vld [vmem:[%s213 + $0x70] sm:$0xff]
        %v263 = vld [vmem:[%s213 + $0x78] sm:$0xff]
        %v264 = vld [vmem:[%s213 + $0x80] sm:$0xff]
        %v265 = vld [vmem:[%s213 + $0x88] sm:$0xff]
        %v266 = vld [vmem:[%s213 + $0x90] sm:$0xff]
        %v267 = vld [vmem:[%s213 + $0x98] sm:$0xff]
        %v268 = vld [vmem:[%s213 + $0xa0] sm:$0xff]
        %v269 = vld [vmem:[%s213 + $0xa8] sm:$0xff]
        %v270 = vld [vmem:[%s213 + $0xb0] sm:$0xff]
        %v271 = vld [vmem:[%s213 + $0xb8] sm:$0xff]
        %v272 = vld [vmem:[%s213 + $0xc0] sm:$0xff]
        %v273 = vld [vmem:[%s213 + $0xc8] sm:$0xff]
        %v274 = vld [vmem:[%s213 + $0xd0] sm:$0xff]
        %v275 = vld [vmem:[%s213 + $0xd8] sm:$0xff]
        %v276 = vld [vmem:[%s213 + $0xe0] sm:$0xff]
        %v277 = vld [vmem:[%s213 + $0xe8] sm:$0xff]
        %v278 = vld [vmem:[%s213 + $0xf0] sm:$0xff]
        %v279 = vld [vmem:[%s213 + $0xf8] sm:$0xff]
        %v280 = vld [vmem:[#allocation5] sm:$0xff]
        %v281 = vld [vmem:[#allocation5 + $0x8] sm:$0xff]
        %v282 = vld [vmem:[#allocation5 + $0x10] sm:$0xff]
        %v283 = vld [vmem:[#allocation5 + $0x18] sm:$0xff]
        %v284 = vld [vmem:[#allocation5 + $0x20] sm:$0xff]
        %v285 = vld [vmem:[#allocation5 + $0x28] sm:$0xff]
        %v286 = vld [vmem:[#allocation5 + $0x30] sm:$0xff]
        %v287 = vld [vmem:[#allocation5 + $0x38] sm:$0xff]
        %v288 = vld [vmem:[#allocation5 + $0x40] sm:$0xff]
        %v289 = vld [vmem:[#allocation5 + $0x48] sm:$0xff]
        %v290 = vld [vmem:[#allocation5 + $0x50] sm:$0xff]
        %v291 = vld [vmem:[#allocation5 + $0x58] sm:$0xff]
        %v292 = vld [vmem:[#allocation5 + $0x60] sm:$0xff]
        %v293 = vld [vmem:[#allocation5 + $0x68] sm:$0xff]
        %v294 = vld [vmem:[#allocation5 + $0x70] sm:$0xff]
        %v295 = vld [vmem:[#allocation5 + $0x78] sm:$0xff]
        %v296 = vld [vmem:[#allocation5 + $0x80] sm:$0xff]
        %v297 = vld [vmem:[#allocation5 + $0x88] sm:$0xff]
        %v298 = vld [vmem:[#allocation5 + $0x90] sm:$0xff]
        %v299 = vld [vmem:[#allocation5 + $0x98] sm:$0xff]
        %v300 = vld [vmem:[#allocation5 + $0xa0] sm:$0xff]
        %v301 = vld [vmem:[#allocation5 + $0xa8] sm:$0xff]
        %v302 = vld [vmem:[#allocation5 + $0xb0] sm:$0xff]
        %v303 = vld [vmem:[#allocation5 + $0xb8] sm:$0xff]
        %v304 = vld [vmem:[#allocation5 + $0xc0] sm:$0xff]
        %v305 = vld [vmem:[#allocation5 + $0xc8] sm:$0xff]
        %v306 = vld [vmem:[#allocation5 + $0xd0] sm:$0xff]
        %v307 = vld [vmem:[#allocation5 + $0xd8] sm:$0xff]
        %v308 = vld [vmem:[#allocation5 + $0xe0] sm:$0xff]
        %v309 = vld [vmem:[#allocation5 + $0xe8] sm:$0xff]
        %v310 = vld [vmem:[#allocation5 + $0xf0] sm:$0xff]
        %v311 = vld [vmem:[#allocation5 + $0xf8] sm:$0xff]
        %v312 = vld [vmem:[#allocation5 + $0x100] sm:$0xff]
        %v313 = vld [vmem:[#allocation5 + $0x108] sm:$0xff]
        %v314 = vld [vmem:[#allocation5 + $0x110] sm:$0xff]
        %v315 = vld [vmem:[#allocation5 + $0x118] sm:$0xff]
        %v316 = vld [vmem:[#allocation5 + $0x120] sm:$0xff]
        %v317 = vld [vmem:[#allocation5 + $0x128] sm:$0xff]
        %v318 = vld [vmem:[#allocation5 + $0x130] sm:$0xff]
        %v319 = vld [vmem:[#allocation5 + $0x138] sm:$0xff]
        %v320 = vld [vmem:[#allocation5 + $0x140] sm:$0xff]
        %v321 = vld [vmem:[#allocation5 + $0x148] sm:$0xff]
        %v322 = vld [vmem:[#allocation5 + $0x150] sm:$0xff]
        %v323 = vld [vmem:[#allocation5 + $0x158] sm:$0xff]
        %v324 = vld [vmem:[#allocation5 + $0x160] sm:$0xff]
        %v325 = vld [vmem:[#allocation5 + $0x168] sm:$0xff]
        %v326 = vld [vmem:[#allocation5 + $0x170] sm:$0xff]
        %v327 = vld [vmem:[#allocation5 + $0x178] sm:$0xff]
        %v328 = vld [vmem:[#allocation5 + $0x180] sm:$0xff]
        %v329 = vld [vmem:[#allocation5 + $0x188] sm:$0xff]
        %v330 = vld [vmem:[#allocation5 + $0x190] sm:$0xff]
        %v331 = vld [vmem:[#allocation5 + $0x198] sm:$0xff]
        %v332 = vld [vmem:[#allocation5 + $0x1a0] sm:$0xff]
        %v333 = vld [vmem:[#allocation5 + $0x1a8] sm:$0xff]
        %v334 = vld [vmem:[#allocation5 + $0x1b0] sm:$0xff]
        %v335 = vld [vmem:[#allocation5 + $0x1b8] sm:$0xff]
        %v336 = vld [vmem:[#allocation5 + $0x1c0] sm:$0xff]
        %v337 = vld [vmem:[#allocation5 + $0x1c8] sm:$0xff]
        %v338 = vld [vmem:[#allocation5 + $0x1d0] sm:$0xff]
        %v339 = vld [vmem:[#allocation5 + $0x1d8] sm:$0xff]
        %v340 = vld [vmem:[#allocation5 + $0x1e0] sm:$0xff]
        %v341 = vld [vmem:[#allocation5 + $0x1e8] sm:$0xff]
        %v342 = vld [vmem:[#allocation5 + $0x1f0] sm:$0xff]
        %v343 = vld [vmem:[#allocation5 + $0x1f8] sm:$0xff]
        %v344 = vld [vmem:[#allocation5 + $0x200] sm:$0xff]
        %v345 = vld [vmem:[#allocation5 + $0x208] sm:$0xff]
        %v346 = vld [vmem:[#allocation5 + $0x210] sm:$0xff]
        %v347 = vld [vmem:[#allocation5 + $0x218] sm:$0xff]
        %v348 = vld [vmem:[#allocation5 + $0x220] sm:$0xff]
        %v349 = vld [vmem:[#allocation5 + $0x228] sm:$0xff]
        %v350 = vld [vmem:[#allocation5 + $0x230] sm:$0xff]
        %v351 = vld [vmem:[#allocation5 + $0x238] sm:$0xff]
        %v352 = vld [vmem:[#allocation5 + $0x240] sm:$0xff]
        %v353 = vld [vmem:[#allocation5 + $0x248] sm:$0xff]
        %v354 = vld [vmem:[#allocation5 + $0x250] sm:$0xff]
        %v355 = vld [vmem:[#allocation5 + $0x258] sm:$0xff]
        %v356 = vld [vmem:[#allocation5 + $0x260] sm:$0xff]
        %v357 = vld [vmem:[#allocation5 + $0x268] sm:$0xff]
        %v358 = vld [vmem:[#allocation5 + $0x270] sm:$0xff]
        %v359 = vld [vmem:[#allocation5 + $0x278] sm:$0xff]
        %v360 = vld [vmem:[#allocation5 + $0x280] sm:$0xff]
        %v361 = vld [vmem:[#allocation5 + $0x288] sm:$0xff]
        %v362 = vld [vmem:[#allocation5 + $0x290] sm:$0xff]
        %v363 = vld [vmem:[#allocation5 + $0x298] sm:$0xff]
        %v364 = vld [vmem:[#allocation5 + $0x2a0] sm:$0xff]
        %v365 = vld [vmem:[#allocation5 + $0x2a8] sm:$0xff]
        %v366 = vld [vmem:[#allocation5 + $0x2b0] sm:$0xff]
        %v367 = vld [vmem:[#allocation5 + $0x2b8] sm:$0xff]
        %v368 = vld [vmem:[#allocation5 + $0x2c0] sm:$0xff]
        %v369 = vld [vmem:[#allocation5 + $0x2c8] sm:$0xff]
        %v370 = vld [vmem:[#allocation5 + $0x2d0] sm:$0xff]
        %v371 = vld [vmem:[#allocation5 + $0x2d8] sm:$0xff]
        %v372 = vld [vmem:[#allocation5 + $0x2e0] sm:$0xff]
        %v373 = vld [vmem:[#allocation5 + $0x2e8] sm:$0xff]
        %v374 = vld [vmem:[#allocation5 + $0x2f0] sm:$0xff]
        %v375 = vld [vmem:[#allocation5 + $0x2f8] sm:$0xff]
        %v376 = vld [vmem:[#allocation5 + $0x300] sm:$0xff]
        %v377 = vld [vmem:[#allocation5 + $0x308] sm:$0xff]
        %v378 = vld [vmem:[#allocation5 + $0x310] sm:$0xff]
        %v379 = vld [vmem:[#allocation5 + $0x318] sm:$0xff]
        %v380 = vld [vmem:[#allocation5 + $0x320] sm:$0xff]
        %v381 = vld [vmem:[#allocation5 + $0x328] sm:$0xff]
        %v382 = vld [vmem:[#allocation5 + $0x330] sm:$0xff]
        %v383 = vld [vmem:[#allocation5 + $0x338] sm:$0xff]
        %v384 = vld [vmem:[#allocation5 + $0x340] sm:$0xff]
        %v385 = vld [vmem:[#allocation5 + $0x348] sm:$0xff]
        %v386 = vld [vmem:[#allocation5 + $0x350] sm:$0xff]
        %v387 = vld [vmem:[#allocation5 + $0x358] sm:$0xff]
        %v388 = vld [vmem:[#allocation5 + $0x360] sm:$0xff]
        %v389 = vld [vmem:[#allocation5 + $0x368] sm:$0xff]
        %v390 = vld [vmem:[#allocation5 + $0x370] sm:$0xff]
        %v391 = vld [vmem:[#allocation5 + $0x378] sm:$0xff]
        %v392 = vld [vmem:[#allocation5 + $0x380] sm:$0xff]
        %v393 = vld [vmem:[#allocation5 + $0x388] sm:$0xff]
        %v394 = vld [vmem:[#allocation5 + $0x390] sm:$0xff]
        %v395 = vld [vmem:[#allocation5 + $0x398] sm:$0xff]
        %v396 = vld [vmem:[#allocation5 + $0x3a0] sm:$0xff]
        %v397 = vld [vmem:[#allocation5 + $0x3a8] sm:$0xff]
        %v398 = vld [vmem:[#allocation5 + $0x3b0] sm:$0xff]
        %v399 = vld [vmem:[#allocation5 + $0x3b8] sm:$0xff]
        %v400 = vld [vmem:[#allocation5 + $0x3c0] sm:$0xff]
        %v401 = vld [vmem:[#allocation5 + $0x3c8] sm:$0xff]
        %v402 = vld [vmem:[#allocation5 + $0x3d0] sm:$0xff]
        %v403 = vld [vmem:[#allocation5 + $0x3d8] sm:$0xff]
        %v404 = vld [vmem:[#allocation5 + $0x3e0] sm:$0xff]
        %v405 = vld [vmem:[#allocation5 + $0x3e8] sm:$0xff]
        %v406 = vld [vmem:[#allocation5 + $0x3f0] sm:$0xff]
        %v407 = vld [vmem:[#allocation5 + $0x3f8] sm:$0xff]
        %v408 = vld [vmem:[#allocation5 + $0x400] sm:$0xff]
        %v409 = vld [vmem:[#allocation5 + $0x408] sm:$0xff]
        %v410 = vld [vmem:[#allocation5 + $0x410] sm:$0xff]
        %v411 = vld [vmem:[#allocation5 + $0x418] sm:$0xff]
        %v412 = vld [vmem:[#allocation5 + $0x420] sm:$0xff]
        %v413 = vld [vmem:[#allocation5 + $0x428] sm:$0xff]
        %v414 = vld [vmem:[#allocation5 + $0x430] sm:$0xff]
        %v415 = vld [vmem:[#allocation5 + $0x438] sm:$0xff]
        %v416 = vld [vmem:[#allocation5 + $0x440] sm:$0xff]
        %v417 = vld [vmem:[#allocation5 + $0x448] sm:$0xff]
        %v418 = vld [vmem:[#allocation5 + $0x450] sm:$0xff]
        %v419 = vld [vmem:[#allocation5 + $0x458] sm:$0xff]
        %v420 = vld [vmem:[#allocation5 + $0x460] sm:$0xff]
        %v421 = vld [vmem:[#allocation5 + $0x468] sm:$0xff]
        %v422 = vld [vmem:[#allocation5 + $0x470] sm:$0xff]
        %v423 = vld [vmem:[#allocation5 + $0x478] sm:$0xff]
        %v424 = vld [vmem:[#allocation5 + $0x480] sm:$0xff]
        %v425 = vld [vmem:[#allocation5 + $0x488] sm:$0xff]
        %v426 = vld [vmem:[#allocation5 + $0x490] sm:$0xff]
        %v427 = vld [vmem:[#allocation5 + $0x498] sm:$0xff]
        %v428 = vld [vmem:[#allocation5 + $0x4a0] sm:$0xff]
        %v429 = vld [vmem:[#allocation5 + $0x4a8] sm:$0xff]
        %v430 = vld [vmem:[#allocation5 + $0x4b0] sm:$0xff]
        %v431 = vld [vmem:[#allocation5 + $0x4b8] sm:$0xff]
        %v432 = vld [vmem:[#allocation5 + $0x4c0] sm:$0xff]
        %v433 = vld [vmem:[#allocation5 + $0x4c8] sm:$0xff]
        %v434 = vld [vmem:[#allocation5 + $0x4d0] sm:$0xff]
        %v435 = vld [vmem:[#allocation5 + $0x4d8] sm:$0xff]
        %v436 = vld [vmem:[#allocation5 + $0x4e0] sm:$0xff]
        %v437 = vld [vmem:[#allocation5 + $0x4e8] sm:$0xff]
        %v438 = vld [vmem:[#allocation5 + $0x4f0] sm:$0xff]
        %v439 = vld [vmem:[#allocation5 + $0x4f8] sm:$0xff]
        %v440 = vld [vmem:[#allocation5 + $0x500] sm:$0xff]
        %v441 = vld [vmem:[#allocation5 + $0x508] sm:$0xff]
        %v442 = vld [vmem:[#allocation5 + $0x510] sm:$0xff]
        %v443 = vld [vmem:[#allocation5 + $0x518] sm:$0xff]
        %v444 = vld [vmem:[#allocation5 + $0x520] sm:$0xff]
        %v445 = vld [vmem:[#allocation5 + $0x528] sm:$0xff]
        %v446 = vld [vmem:[#allocation5 + $0x530] sm:$0xff]
        %v447 = vld [vmem:[#allocation5 + $0x538] sm:$0xff]
        %v448 = vld [vmem:[#allocation5 + $0x540] sm:$0xff]
        %v449 = vld [vmem:[#allocation5 + $0x548] sm:$0xff]
        %v450 = vld [vmem:[#allocation5 + $0x550] sm:$0xff]
        %v451 = vld [vmem:[#allocation5 + $0x558] sm:$0xff]
        %v452 = vld [vmem:[#allocation5 + $0x560] sm:$0xff]
        %v453 = vld [vmem:[#allocation5 + $0x568] sm:$0xff]
        %v454 = vld [vmem:[#allocation5 + $0x570] sm:$0xff]
        %v455 = vld [vmem:[#allocation5 + $0x578] sm:$0xff]
        %v456 = vld [vmem:[#allocation5 + $0x580] sm:$0xff]
        %v457 = vld [vmem:[#allocation5 + $0x588] sm:$0xff]
        %v458 = vld [vmem:[#allocation5 + $0x590] sm:$0xff]
        %v459 = vld [vmem:[#allocation5 + $0x598] sm:$0xff]
        %v460 = vld [vmem:[#allocation5 + $0x5a0] sm:$0xff]
        %v461 = vld [vmem:[#allocation5 + $0x5a8] sm:$0xff]
        %v462 = vld [vmem:[#allocation5 + $0x5b0] sm:$0xff]
        %v463 = vld [vmem:[#allocation5 + $0x5b8] sm:$0xff]
        %v464 = vld [vmem:[#allocation5 + $0x5c0] sm:$0xff]
        %v465 = vld [vmem:[#allocation5 + $0x5c8] sm:$0xff]
        %v466 = vld [vmem:[#allocation5 + $0x5d0] sm:$0xff]
        %v467 = vld [vmem:[#allocation5 + $0x5d8] sm:$0xff]
        %v468 = vld [vmem:[#allocation5 + $0x5e0] sm:$0xff]
        %v469 = vld [vmem:[#allocation5 + $0x5e8] sm:$0xff]
        %v470 = vld [vmem:[#allocation5 + $0x5f0] sm:$0xff]
        %v471 = vld [vmem:[#allocation5 + $0x5f8] sm:$0xff]
        %472 = vmatprep.subr.mxu0 %v281
        %473 = vmatpush1.msra.mxu0 %v280
        %474 = vmatprep.subr.mxu0 %v287
        %475 = vmatpush1.msra.mxu0 %v286
        %476 = vmatprep.subr.mxu0 %v293
        %477 = vmatpush1.msra.mxu0 %v292
        %478 = vmatprep.subr.mxu0 %v299
        %479 = vmatpush1.msra.mxu0 %v298
        %480 = vmatprep.subr.mxu0 %v305
        %481 = vmatpush1.msra.mxu0 %v304
        %482 = vmatprep.subr.mxu0 %v311
        %483 = vmatpush1.msra.mxu0 %v310
        %484 = vmatprep.subr.mxu0 %v317
        %485 = vmatpush1.msra.mxu0 %v316
        %486 = vmatprep.subr.mxu0 %v323
        %487 = vmatpush1.msra.mxu0 %v322
        %488 = vmatprep.subr.mxu0 %v329
        %489 = vmatpush1.msra.mxu0 %v328
        %490 = vmatprep.subr.mxu0 %v335
        %491 = vmatpush1.msra.mxu0 %v334
        %492 = vmatprep.subr.mxu0 %v341
        %493 = vmatpush1.msra.mxu0 %v340
        %494 = vmatprep.subr.mxu0 %v347
        %495 = vmatpush1.msra.mxu0 %v346
        %496 = vmatprep.subr.mxu0 %v353
        %497 = vmatpush1.msra.mxu0 %v352
        %498 = vmatprep.subr.mxu0 %v359
        %499 = vmatpush1.msra.mxu0 %v358
        %500 = vmatprep.subr.mxu0 %v365
        %501 = vmatpush1.msra.mxu0 %v364
        %502 = vmatprep.subr.mxu0 %v371
        %503 = vmatpush1.msra.mxu0 %v370
        %504 = vmatprep.subr.mxu0 %v377
        %505 = vmatpush1.msra.mxu0 %v376
        %506 = vmatprep.subr.mxu0 %v383
        %507 = vmatpush1.msra.mxu0 %v382
        %508 = vmatprep.subr.mxu0 %v389
        %509 = vmatpush1.msra.mxu0 %v388
        %510 = vmatprep.subr.mxu0 %v395
        %511 = vmatpush1.msra.mxu0 %v394
        %512 = vmatprep.subr.mxu0 %v401
        %513 = vmatpush1.msra.mxu0 %v400
        %514 = vmatprep.subr.mxu0 %v407
        %515 = vmatpush1.msra.mxu0 %v406
        %516 = vmatprep.subr.mxu0 %v413
        %517 = vmatpush1.msra.mxu0 %v412
        %518 = vmatprep.subr.mxu0 %v419
        %519 = vmatpush1.msra.mxu0 %v418
        %520 = vmatprep.subr.mxu0 %v425
        %521 = vmatpush1.msra.mxu0 %v424
        %522 = vmatprep.subr.mxu0 %v431
        %523 = vmatpush1.msra.mxu0 %v430
        %524 = vmatprep.subr.mxu0 %v437
        %525 = vmatpush1.msra.mxu0 %v436
        %526 = vmatprep.subr.mxu0 %v443
        %527 = vmatpush1.msra.mxu0 %v442
        %528 = vmatprep.subr.mxu0 %v449
        %529 = vmatpush1.msra.mxu0 %v448
        %530 = vmatprep.subr.mxu0 %v455
        %531 = vmatpush1.msra.mxu0 %v454
        %532 = vmatprep.subr.mxu0 %v461
        %533 = vmatpush1.msra.mxu0 %v460
        %534 = vmatprep.subr.mxu0 %v467
        %535 = vmatpush1.msra.mxu0 %v466
        %536 = vmatprep.mubr.f32.mxu0 %v249
        %537 = vmatmul.mubr.f32.gmra.mrb[0].mxu0 %v248
        %v538 = vpop.f32.mrb[0].mxu0
        %v539 = vadd.f32 0.0, %v538
        %v540 = vpop.f32.mrb[0].mxu0
        %v541 = vadd.f32 0.0, %v540
        %542 = vmatprep.mubr.f32.mxu0 %v251
        %543 = vmatmul.mubr.f32.gmra.mrb[0].mxu0 %v250
        %v544 = vpop.f32.mrb[0].mxu0
        %v545 = vadd.f32 0.0, %v544
        %v546 = vpop.f32.mrb[0].mxu0
        %v547 = vadd.f32 0.0, %v546
        %548 = vmatprep.mubr.f32.mxu0 %v253
        %549 = vmatmul.mubr.f32.gmra.mrb[0].mxu0 %v252
        %v550 = vpop.f32.mrb[0].mxu0
        %v551 = vadd.f32 0.0, %v550
        %v552 = vpop.f32.mrb[0].mxu0
        %v553 = vadd.f32 0.0, %v552
        %554 = vmatprep.mubr.f32.mxu0 %v255
        %555 = vmatmul.mubr.f32.gmra.mrb[0].mxu0 %v254
        %v556 = vpop.f32.mrb[0].mxu0
        %v557 = vadd.f32 0.0, %v556
        %v558 = vpop.f32.mrb[0].mxu0
        %v559 = vadd.f32 0.0, %v558
        %560 = vmatprep.mubr.f32.mxu0 %v257
        %561 = vmatmul.mubr.f32.gmra.mrb[0].mxu0 %v256
        %v562 = vpop.f32.mrb[0].mxu0
        %v563 = vadd.f32 0.0, %v562
        %v564 = vpop.f32.mrb[0].mxu0
        %v565 = vadd.f32 0.0, %v564
        %566 = vmatprep.mubr.f32.mxu0 %v259
        %567 = vmatmul.mubr.f32.gmra.mrb[0].mxu0 %v258
        %v568 = vpop.f32.mrb[0].mxu0
        %v569 = vadd.f32 0.0, %v568
        %v570 = vpop.f32.mrb[0].mxu0
        %v571 = vadd.f32 0.0, %v570
        %572 = vmatprep.mubr.f32.mxu0 %v261
        %573 = vmatmul.mubr.f32.gmra.mrb[0].mxu0 %v260
        %v574 = vpop.f32.mrb[0].mxu0
        %v575 = vadd.f32 0.0, %v574
        %v576 = vpop.f32.mrb[0].mxu0
        %v577 = vadd.f32 0.0, %v576
        %578 = vmatprep.mubr.f32.mxu0 %v263
        %579 = vmatmul.mubr.f32.gmra.mrb[0].mxu0 %v262
        %v580 = vpop.f32.mrb[0].mxu0
        %v581 = vadd.f32 0.0, %v580
        %v582 = vpop.f32.mrb[0].mxu0
        %v583 = vadd.f32 0.0, %v582
        %584 = vmatprep.mubr.f32.mxu0 %v265
        %585 = vmatmul.mubr.f32.gmra.mrb[0].mxu0 %v264
        %v586 = vpop.f32.mrb[0].mxu0
        %v587 = vadd.f32 0.0, %v586
        %v588 = vpop.f32.mrb[0].mxu0
        %v589 = vadd.f32 0.0, %v588
        %590 = vmatprep.mubr.f32.mxu0 %v267
        %591 = vmatmul.mubr.f32.gmra.mrb[0].mxu0 %v266
        %v592 = vpop.f32.mrb[0].mxu0
        %v593 = vadd.f32 0.0, %v592
        %v594 = vpop.f32.mrb[0].mxu0
        %v595 = vadd.f32 0.0, %v594
        %596 = vmatprep.mubr.f32.mxu0 %v269
        %597 = vmatmul.mubr.f32.gmra.mrb[0].mxu0 %v268
        %v598 = vpop.f32.mrb[0].mxu0
        %v599 = vadd.f32 0.0, %v598
        %v600 = vpop.f32.mrb[0].mxu0
        %v601 = vadd.f32 0.0, %v600
        %602 = vmatprep.mubr.f32.mxu0 %v271
        %603 = vmatmul.mubr.f32.gmra.mrb[0].mxu0 %v270
        %v604 = vpop.f32.mrb[0].mxu0
        %v605 = vadd.f32 0.0, %v604
        %v606 = vpop.f32.mrb[0].mxu0
        %v607 = vadd.f32 0.0, %v606
        %608 = vmatprep.mubr.f32.mxu0 %v273
        %609 = vmatmul.mubr.f32.gmra.mrb[0].mxu0 %v272
        %v610 = vpop.f32.mrb[0].mxu0
        %v611 = vadd.f32 0.0, %v610
        %v612 = vpop.f32.mrb[0].mxu0
        %v613 = vadd.f32 0.0, %v612
        %614 = vmatprep.mubr.f32.mxu0 %v275
        %615 = vmatmul.mubr.f32.gmra.mrb[0].mxu0 %v274
        %v616 = vpop.f32.mrb[0].mxu0
        %v617 = vadd.f32 0.0, %v616
        %v618 = vpop.f32.mrb[0].mxu0
        %v619 = vadd.f32 0.0, %v618
        %620 = vmatprep.mubr.f32.mxu0 %v277
        %621 = vmatmul.mubr.f32.gmra.mrb[0].mxu0 %v276
        %v622 = vpop.f32.mrb[0].mxu0
        %v623 = vadd.f32 0.0, %v622
        %v624 = vpop.f32.mrb[0].mxu0
        %v625 = vadd.f32 0.0, %v624
        %626 = vmatprep.mubr.f32.mxu0 %v279
        %627 = vmatmul.mubr.f32.gmra.mrb[0].mxu0 %v278
        %v628 = vpop.f32.mrb[0].mxu0
        %v629 = vadd.f32 0.0, %v628
        %v630 = vpop.f32.mrb[0].mxu0
        %v631 = vadd.f32 0.0, %v630
        %632 = vdwg.mxu0
        %633 = vmatprep.subr.mxu0 %v283
        %634 = vmatpush1.msra.mxu0 %v282
        %635 = vmatprep.subr.mxu0 %v289
        %636 = vmatpush1.msra.mxu0 %v288
        %637 = vmatprep.subr.mxu0 %v295
        %638 = vmatpush1.msra.mxu0 %v294
        %639 = vmatprep.subr.mxu0 %v301
        %640 = vmatpush1.msra.mxu0 %v300
        %641 = vmatprep.subr.mxu0 %v307
        %642 = vmatpush1.msra.mxu0 %v306
        %643 = vmatprep.subr.mxu0 %v313
        %644 = vmatpush1.msra.mxu0 %v312
        %645 = vmatprep.subr.mxu0 %v319
        %646 = vmatpush1.msra.mxu0 %v318
        %647 = vmatprep.subr.mxu0 %v325
        %648 = vmatpush1.msra.mxu0 %v324
        %649 = vmatprep.subr.mxu0 %v331
        %650 = vmatpush1.msra.mxu0 %v330
        %651 = vmatprep.subr.mxu0 %v337
        %652 = vmatpush1.msra.mxu0 %v336
        %653 = vmatprep.subr.mxu0 %v343
        %654 = vmatpush1.msra.mxu0 %v342
        %655 = vmatprep.subr.mxu0 %v349
        %656 = vmatpush1.msra.mxu0 %v348
        %657 = vmatprep.subr.mxu0 %v355
        %658 = vmatpush1.msra.mxu0 %v354
        %659 = vmatprep.subr.mxu0 %v361
        %660 = vmatpush1.msra.mxu0 %v360
        %661 = vmatprep.subr.mxu0 %v367
        %662 = vmatpush1.msra.mxu0 %v366
        %663 = vmatprep.subr.mxu0 %v373
        %664 = vmatpush1.msra.mxu0 %v372
        %665 = vmatprep.subr.mxu0 %v379
        %666 = vmatpush1.msra.mxu0 %v378
        %667 = vmatprep.subr.mxu0 %v385
        %668 = vmatpush1.msra.mxu0 %v384
        %669 = vmatprep.subr.mxu0 %v391
        %670 = vmatpush1.msra.mxu0 %v390
        %671 = vmatprep.subr.mxu0 %v397
        %672 = vmatpush1.msra.mxu0 %v396
        %673 = vmatprep.subr.mxu0 %v403
        %674 = vmatpush1.msra.mxu0 %v402
        %675 = vmatprep.subr.mxu0 %v409
        %676 = vmatpush1.msra.mxu0 %v408
        %677 = vmatprep.subr.mxu0 %v415
        %678 = vmatpush1.msra.mxu0 %v414
        %679 = vmatprep.subr.mxu0 %v421
        %680 = vmatpush1.msra.mxu0 %v420
        %681 = vmatprep.subr.mxu0 %v427
        %682 = vmatpush1.msra.mxu0 %v426
        %683 = vmatprep.subr.mxu0 %v433
        %684 = vmatpush1.msra.mxu0 %v432
        %685 = vmatprep.subr.mxu0 %v439
        %686 = vmatpush1.msra.mxu0 %v438
        %687 = vmatprep.subr.mxu0 %v445
        %688 = vmatpush1.msra.mxu0 %v444
        %689 = vmatprep.subr.mxu0 %v451
        %690 = vmatpush1.msra.mxu0 %v450
        %691 = vmatprep.subr.mxu0 %v457
        %692 = vmatpush1.msra.mxu0 %v456
        %693 = vmatprep.subr.mxu0 %v463
        %694 = vmatpush1.msra.mxu0 %v462
        %695 = vmatprep.subr.mxu0 %v469
        %696 = vmatpush1.msra.mxu0 %v468
        %697 = vmatprep.mubr.f32.mxu0 %v249
        %698 = vmatmul.mubr.f32.gmra.mrb[0].mxu0 %v248
        %v699 = vpop.f32.mrb[0].mxu0
        %v700 = vadd.f32 0.0, %v699
        %v701 = vpop.f32.mrb[0].mxu0
        %v702 = vadd.f32 0.0, %v701
        %703 = vmatprep.mubr.f32.mxu0 %v251
        %704 = vmatmul.mubr.f32.gmra.mrb[0].mxu0 %v250
        %v705 = vpop.f32.mrb[0].mxu0
        %v706 = vadd.f32 0.0, %v705
        %v707 = vpop.f32.mrb[0].mxu0
        %v708 = vadd.f32 0.0, %v707
        %709 = vmatprep.mubr.f32.mxu0 %v253
        %710 = vmatmul.mubr.f32.gmra.mrb[0].mxu0 %v252
        %v711 = vpop.f32.mrb[0].mxu0
        %v712 = vadd.f32 0.0, %v711
        %v713 = vpop.f32.mrb[0].mxu0
        %v714 = vadd.f32 0.0, %v713
        %715 = vmatprep.mubr.f32.mxu0 %v255
        %716 = vmatmul.mubr.f32.gmra.mrb[0].mxu0 %v254
        %v717 = vpop.f32.mrb[0].mxu0
        %v718 = vadd.f32 0.0, %v717
        %v719 = vpop.f32.mrb[0].mxu0
        %v720 = vadd.f32 0.0, %v719
        %721 = vmatprep.mubr.f32.mxu0 %v257
        %722 = vmatmul.mubr.f32.gmra.mrb[0].mxu0 %v256
        %v723 = vpop.f32.mrb[0].mxu0
        %v724 = vadd.f32 0.0, %v723
        %v725 = vpop.f32.mrb[0].mxu0
        %v726 = vadd.f32 0.0, %v725
        %727 = vmatprep.mubr.f32.mxu0 %v259
        %728 = vmatmul.mubr.f32.gmra.mrb[0].mxu0 %v258
        %v729 = vpop.f32.mrb[0].mxu0
        %v730 = vadd.f32 0.0, %v729
        %v731 = vpop.f32.mrb[0].mxu0
        %v732 = vadd.f32 0.0, %v731
        %733 = vmatprep.mubr.f32.mxu0 %v261
        %734 = vmatmul.mubr.f32.gmra.mrb[0].mxu0 %v260
        %v735 = vpop.f32.mrb[0].mxu0
        %v736 = vadd.f32 0.0, %v735
        %v737 = vpop.f32.mrb[0].mxu0
        %v738 = vadd.f32 0.0, %v737
        %739 = vmatprep.mubr.f32.mxu0 %v263
        %740 = vmatmul.mubr.f32.gmra.mrb[0].mxu0 %v262
        %v741 = vpop.f32.mrb[0].mxu0
        %v742 = vadd.f32 0.0, %v741
        %v743 = vpop.f32.mrb[0].mxu0
        %v744 = vadd.f32 0.0, %v743
        %745 = vmatprep.mubr.f32.mxu0 %v265
        %746 = vmatmul.mubr.f32.gmra.mrb[0].mxu0 %v264
        %v747 = vpop.f32.mrb[0].mxu0
        %v748 = vadd.f32 0.0, %v747
        %v749 = vpop.f32.mrb[0].mxu0
        %v750 = vadd.f32 0.0, %v749
        %751 = vmatprep.mubr.f32.mxu0 %v267
        %752 = vmatmul.mubr.f32.gmra.mrb[0].mxu0 %v266
        %v753 = vpop.f32.mrb[0].mxu0
        %v754 = vadd.f32 0.0, %v753
        %v755 = vpop.f32.mrb[0].mxu0
        %v756 = vadd.f32 0.0, %v755
        %757 = vmatprep.mubr.f32.mxu0 %v269
        %758 = vmatmul.mubr.f32.gmra.mrb[0].mxu0 %v268
        %v759 = vpop.f32.mrb[0].mxu0
        %v760 = vadd.f32 0.0, %v759
        %v761 = vpop.f32.mrb[0].mxu0
        %v762 = vadd.f32 0.0, %v761
        %763 = vmatprep.mubr.f32.mxu0 %v271
        %764 = vmatmul.mubr.f32.gmra.mrb[0].mxu0 %v270
        %v765 = vpop.f32.mrb[0].mxu0
        %v766 = vadd.f32 0.0, %v765
        %v767 = vpop.f32.mrb[0].mxu0
        %v768 = vadd.f32 0.0, %v767
        %769 = vmatprep.mubr.f32.mxu0 %v273
        %770 = vmatmul.mubr.f32.gmra.mrb[0].mxu0 %v272
        %v771 = vpop.f32.mrb[0].mxu0
        %v772 = vadd.f32 0.0, %v771
        %v773 = vpop.f32.mrb[0].mxu0
        %v774 = vadd.f32 0.0, %v773
        %775 = vmatprep.mubr.f32.mxu0 %v275
        %776 = vmatmul.mubr.f32.gmra.mrb[0].mxu0 %v274
        %v777 = vpop.f32.mrb[0].mxu0
        %v778 = vadd.f32 0.0, %v777
        %v779 = vpop.f32.mrb[0].mxu0
        %v780 = vadd.f32 0.0, %v779
        %781 = vmatprep.mubr.f32.mxu0 %v277
        %782 = vmatmul.mubr.f32.gmra.mrb[0].mxu0 %v276
        %v783 = vpop.f32.mrb[0].mxu0
        %v784 = vadd.f32 0.0, %v783
        %v785 = vpop.f32.mrb[0].mxu0
        %v786 = vadd.f32 0.0, %v785
        %787 = vmatprep.mubr.f32.mxu0 %v279
        %788 = vmatmul.mubr.f32.gmra.mrb[0].mxu0 %v278
        %v789 = vpop.f32.mrb[0].mxu0
        %v790 = vadd.f32 0.0, %v789
        %v791 = vpop.f32.mrb[0].mxu0
        %v792 = vadd.f32 0.0, %v791
        %793 = vdwg.mxu0
        %794 = vmatprep.subr.mxu0 %v285
        %795 = vmatpush1.msra.mxu0 %v284
        %796 = vmatprep.subr.mxu0 %v291
        %797 = vmatpush1.msra.mxu0 %v290
        %798 = vmatprep.subr.mxu0 %v297
        %799 = vmatpush1.msra.mxu0 %v296
        %800 = vmatprep.subr.mxu0 %v303
        %801 = vmatpush1.msra.mxu0 %v302
        %802 = vmatprep.subr.mxu0 %v309
        %803 = vmatpush1.msra.mxu0 %v308
        %804 = vmatprep.subr.mxu0 %v315
        %805 = vmatpush1.msra.mxu0 %v314
        %806 = vmatprep.subr.mxu0 %v321
        %807 = vmatpush1.msra.mxu0 %v320
        %808 = vmatprep.subr.mxu0 %v327
        %809 = vmatpush1.msra.mxu0 %v326
        %810 = vmatprep.subr.mxu0 %v333
        %811 = vmatpush1.msra.mxu0 %v332
        %812 = vmatprep.subr.mxu0 %v339
        %813 = vmatpush1.msra.mxu0 %v338
        %814 = vmatprep.subr.mxu0 %v345
        %815 = vmatpush1.msra.mxu0 %v344
        %816 = vmatprep.subr.mxu0 %v351
        %817 = vmatpush1.msra.mxu0 %v350
        %818 = vmatprep.subr.mxu0 %v357
        %819 = vmatpush1.msra.mxu0 %v356
        %820 = vmatprep.subr.mxu0 %v363
        %821 = vmatpush1.msra.mxu0 %v362
        %822 = vmatprep.subr.mxu0 %v369
        %823 = vmatpush1.msra.mxu0 %v368
        %824 = vmatprep.subr.mxu0 %v375
        %825 = vmatpush1.msra.mxu0 %v374
        %826 = vmatprep.subr.mxu0 %v381
        %827 = vmatpush1.msra.mxu0 %v380
        %828 = vmatprep.subr.mxu0 %v387
        %829 = vmatpush1.msra.mxu0 %v386
        %830 = vmatprep.subr.mxu0 %v393
        %831 = vmatpush1.msra.mxu0 %v392
        %832 = vmatprep.subr.mxu0 %v399
        %833 = vmatpush1.msra.mxu0 %v398
        %834 = vmatprep.subr.mxu0 %v405
        %835 = vmatpush1.msra.mxu0 %v404
        %836 = vmatprep.subr.mxu0 %v411
        %837 = vmatpush1.msra.mxu0 %v410
        %838 = vmatprep.subr.mxu0 %v417
        %839 = vmatpush1.msra.mxu0 %v416
        %840 = vmatprep.subr.mxu0 %v423
        %841 = vmatpush1.msra.mxu0 %v422
        %842 = vmatprep.subr.mxu0 %v429
        %843 = vmatpush1.msra.mxu0 %v428
        %844 = vmatprep.subr.mxu0 %v435
        %845 = vmatpush1.msra.mxu0 %v434
        %846 = vmatprep.subr.mxu0 %v441
        %847 = vmatpush1.msra.mxu0 %v440
        %848 = vmatprep.subr.mxu0 %v447
        %849 = vmatpush1.msra.mxu0 %v446
        %850 = vmatprep.subr.mxu0 %v453
        %851 = vmatpush1.msra.mxu0 %v452
        %852 = vmatprep.subr.mxu0 %v459
        %853 = vmatpush1.msra.mxu0 %v458
        %854 = vmatprep.subr.mxu0 %v465
        %855 = vmatpush1.msra.mxu0 %v464
        %856 = vmatprep.subr.mxu0 %v471
        %857 = vmatpush1.msra.mxu0 %v470
        %858 = vmatprep.mubr.f32.mxu0 %v249
        %859 = vmatmul.mubr.f32.gmra.mrb[0].mxu0 %v248
        %v860 = vpop.f32.mrb[0].mxu0
        %v861 = vadd.f32 0.0, %v860
        %v862 = vpop.f32.mrb[0].mxu0
        %v863 = vadd.f32 0.0, %v862
        %864 = vmatprep.mubr.f32.mxu0 %v251
        %865 = vmatmul.mubr.f32.gmra.mrb[0].mxu0 %v250
        %v866 = vpop.f32.mrb[0].mxu0
        %v867 = vadd.f32 0.0, %v866
        %v868 = vpop.f32.mrb[0].mxu0
        %v869 = vadd.f32 0.0, %v868
        %870 = vmatprep.mubr.f32.mxu0 %v253
        %871 = vmatmul.mubr.f32.gmra.mrb[0].mxu0 %v252
        %v872 = vpop.f32.mrb[0].mxu0
        %v873 = vadd.f32 0.0, %v872
        %v874 = vpop.f32.mrb[0].mxu0
        %v875 = vadd.f32 0.0, %v874
        %876 = vmatprep.mubr.f32.mxu0 %v255
        %877 = vmatmul.mubr.f32.gmra.mrb[0].mxu0 %v254
        %v878 = vpop.f32.mrb[0].mxu0
        %v879 = vadd.f32 0.0, %v878
        %v880 = vpop.f32.mrb[0].mxu0
        %v881 = vadd.f32 0.0, %v880
        %882 = vmatprep.mubr.f32.mxu0 %v257
        %883 = vmatmul.mubr.f32.gmra.mrb[0].mxu0 %v256
        %v884 = vpop.f32.mrb[0].mxu0
        %v885 = vadd.f32 0.0, %v884
        %v886 = vpop.f32.mrb[0].mxu0
        %v887 = vadd.f32 0.0, %v886
        %888 = vmatprep.mubr.f32.mxu0 %v259
        %889 = vmatmul.mubr.f32.gmra.mrb[0].mxu0 %v258
        %v890 = vpop.f32.mrb[0].mxu0
        %v891 = vadd.f32 0.0, %v890
        %v892 = vpop.f32.mrb[0].mxu0
        %v893 = vadd.f32 0.0, %v892
        %894 = vmatprep.mubr.f32.mxu0 %v261
        %895 = vmatmul.mubr.f32.gmra.mrb[0].mxu0 %v260
        %v896 = vpop.f32.mrb[0].mxu0
        %v897 = vadd.f32 0.0, %v896
        %v898 = vpop.f32.mrb[0].mxu0
        %v899 = vadd.f32 0.0, %v898
        %900 = vmatprep.mubr.f32.mxu0 %v263
        %901 = vmatmul.mubr.f32.gmra.mrb[0].mxu0 %v262
        %v902 = vpop.f32.mrb[0].mxu0
        %v903 = vadd.f32 0.0, %v902
        %v904 = vpop.f32.mrb[0].mxu0
        %v905 = vadd.f32 0.0, %v904
        %906 = vmatprep.mubr.f32.mxu0 %v265
        %907 = vmatmul.mubr.f32.gmra.mrb[0].mxu0 %v264
        %v908 = vpop.f32.mrb[0].mxu0
        %v909 = vadd.f32 0.0, %v908
        %v910 = vpop.f32.mrb[0].mxu0
        %v911 = vadd.f32 0.0, %v910
        %912 = vmatprep.mubr.f32.mxu0 %v267
        %913 = vmatmul.mubr.f32.gmra.mrb[0].mxu0 %v266
        %v914 = vpop.f32.mrb[0].mxu0
        %v915 = vadd.f32 0.0, %v914
        %v916 = vpop.f32.mrb[0].mxu0
        %v917 = vadd.f32 0.0, %v916
        %918 = vmatprep.mubr.f32.mxu0 %v269
        %919 = vmatmul.mubr.f32.gmra.mrb[0].mxu0 %v268
        %v920 = vpop.f32.mrb[0].mxu0
        %v921 = vadd.f32 0.0, %v920
        %v922 = vpop.f32.mrb[0].mxu0
        %v923 = vadd.f32 0.0, %v922
        %924 = vmatprep.mubr.f32.mxu0 %v271
        %925 = vmatmul.mubr.f32.gmra.mrb[0].mxu0 %v270
        %v926 = vpop.f32.mrb[0].mxu0
        %v927 = vadd.f32 0.0, %v926
        %v928 = vpop.f32.mrb[0].mxu0
        %v929 = vadd.f32 0.0, %v928
        %930 = vmatprep.mubr.f32.mxu0 %v273
        %931 = vmatmul.mubr.f32.gmra.mrb[0].mxu0 %v272
        %v932 = vpop.f32.mrb[0].mxu0
        %v933 = vadd.f32 0.0, %v932
        %v934 = vpop.f32.mrb[0].mxu0
        %v935 = vadd.f32 0.0, %v934
        %936 = vmatprep.mubr.f32.mxu0 %v275
        %937 = vmatmul.mubr.f32.gmra.mrb[0].mxu0 %v274
        %v938 = vpop.f32.mrb[0].mxu0
        %v939 = vadd.f32 0.0, %v938
        %v940 = vpop.f32.mrb[0].mxu0
        %v941 = vadd.f32 0.0, %v940
        %942 = vmatprep.mubr.f32.mxu0 %v277
        %943 = vmatmul.mubr.f32.gmra.mrb[0].mxu0 %v276
        %v944 = vpop.f32.mrb[0].mxu0
        %v945 = vadd.f32 0.0, %v944
        %v946 = vpop.f32.mrb[0].mxu0
        %v947 = vadd.f32 0.0, %v946
        %948 = vmatprep.mubr.f32.mxu0 %v279
        %949 = vmatmul.mubr.f32.gmra.mrb[0].mxu0 %v278
        %v950 = vpop.f32.mrb[0].mxu0
        %v951 = vadd.f32 0.0, %v950
        %v952 = vpop.f32.mrb[0].mxu0
        %v953 = vadd.f32 0.0, %v952
        %954 = vdwg.mxu0
        %v955 = vlaneseq
        %v956 = vshrl.u32 %v955, 7
        %v957 = vadd.s32 %v956, 8
        %v958 = vadd.s32 %v956, 16
        %v959 = vadd.s32 %v956, 24
        %v960 = vlaneseq
        %v961 = vand.u32 %v960, 127
        %vm962 = vcmp.le.s32.totalorder %v961, %v956
        %vm963 = vcmp.le.s32.totalorder %v961, %v957
        %vm964 = vcmp.le.s32.totalorder %v961, %v958
        %vm965 = vcmp.le.s32.totalorder %v961, %v959
        %vm966 = vcmask 523264
        %v968 = vsel %vm966, %v539, 0
        %v971 = vsel %vm966, %v545, 0
        %v974 = vsel %vm966, %v551, 0
        %v977 = vsel %vm966, %v557, 0
        %v980 = vsel %vm966, %v700, 0
        %v983 = vsel %vm966, %v706, 0
        %v986 = vsel %vm966, %v712, 0
        %v989 = vsel %vm966, %v718, 0
        %991 = vmatprep.subr.mxu0 0.0
        %992 = vmatpush1.xpose.msra.mxu0 %v980
        %993 = vmatprep.subr.mxu0 0.0
        %994 = vmatpush1.xpose.msra.mxu0 %v983
        %995 = vmatprep.subr.mxu0 0.0
        %996 = vmatpush1.xpose.msra.mxu0 %v986
        %997 = vmatprep.subr.mxu0 0.0
        %998 = vmatpush1.xpose.msra.mxu0 %v989
        %999 = vmatprep.subr.mxu0 0.0
        %1000 = vmatpush1.xpose.msra.mxu0 0.0
        %1001 = vmatprep.subr.mxu0 0.0
        %1002 = vmatpush1.xpose.msra.mxu0 0.0
        %1003 = vmatprep.subr.mxu0 0.0
        %1004 = vmatpush1.xpose.msra.mxu0 0.0
        %1005 = vmatprep.subr.mxu0 0.0
        %1006 = vmatpush1.xpose.msra.mxu0 0.0
        %1007 = vmatprep.subr.mxu0 0.0
        %1008 = vmatpush1.xpose.msra.mxu0 0.0
        %1009 = vmatprep.subr.mxu0 0.0
        %1010 = vmatpush1.xpose.msra.mxu0 0.0
        %1011 = vmatprep.subr.mxu0 0.0
        %1012 = vmatpush1.xpose.msra.mxu0 0.0
        %1013 = vmatprep.subr.mxu0 0.0
        %1014 = vmatpush1.xpose.msra.mxu0 0.0
        %1015 = vmatprep.subr.mxu0 0.0
        %1016 = vmatpush1.xpose.msra.mxu0 0.0
        %1017 = vmatprep.subr.mxu0 0.0
        %1018 = vmatpush1.xpose.msra.mxu0 0.0
        %1019 = vmatprep.subr.mxu0 0.0
        %1020 = vmatpush1.xpose.msra.mxu0 0.0
        %1021 = vmatprep.subr.mxu0 0.0
        %1022 = vmatpush1.xpose.msra.mxu0 0.0
        %1023 = vmatprep.subr.mxu0 0.0
        %1024 = vmatpush1.xpose.msra.mxu0 0.0
        %1025 = vmatprep.subr.mxu0 0.0
        %1026 = vmatpush1.xpose.msra.mxu0 0.0
        %1027 = vmatprep.subr.mxu0 0.0
        %1028 = vmatpush1.xpose.msra.mxu0 0.0
        %1029 = vmatprep.subr.mxu0 0.0
        %1030 = vmatpush1.xpose.msra.mxu0 0.0
        %1031 = vmatprep.subr.mxu0 0.0
        %1032 = vmatpush1.xpose.msra.mxu0 0.0
        %1033 = vmatprep.subr.mxu0 0.0
        %1034 = vmatpush1.xpose.msra.mxu0 0.0
        %1035 = vmatprep.subr.mxu0 0.0
        %1036 = vmatpush1.xpose.msra.mxu0 0.0
        %1037 = vmatprep.subr.mxu0 0.0
        %1038 = vmatpush1.xpose.msra.mxu0 0.0
        %1039 = vmatprep.subr.mxu0 0.0
        %1040 = vmatpush1.xpose.msra.mxu0 0.0
        %1041 = vmatprep.subr.mxu0 0.0
        %1042 = vmatpush1.xpose.msra.mxu0 0.0
        %1043 = vmatprep.subr.mxu0 0.0
        %1044 = vmatpush1.xpose.msra.mxu0 0.0
        %1045 = vmatprep.subr.mxu0 0.0
        %1046 = vmatpush1.xpose.msra.mxu0 0.0
        %1047 = vmatprep.subr.mxu0 0.0
        %1048 = vmatpush1.xpose.msra.mxu0 0.0
        %1049 = vmatprep.subr.mxu0 0.0
        %1050 = vmatpush1.xpose.msra.mxu0 0.0
        %1051 = vmatprep.subr.mxu0 0.0
        %1052 = vmatpush1.xpose.msra.mxu0 0.0
        %1053 = vmatprep.subr.mxu0 0.0
        %1054 = vmatpush1.xpose.msra.mxu0 0.0
        %1055 = vmatprep.mubr.f32.mxu0 0.0
        %1056 = vmatmul.mubr.f32.gmra.mrb[0].mxu0 %v968
        %v1057 = vpop.f32.mrb[0].mxu0
        %v1058 = vadd.f32 0.0, %v1057
        %v1059 = vpop.f32.mrb[0].mxu0
        %1060 = vmatprep.mubr.f32.mxu0 0.0
        %1061 = vmatmul.mubr.f32.gmra.mrb[0].mxu0 %v971
        %v1062 = vpop.f32.mrb[0].mxu0
        %v1063 = vadd.f32 0.0, %v1062
        %v1064 = vpop.f32.mrb[0].mxu0
        %1065 = vmatprep.mubr.f32.mxu0 0.0
        %1066 = vmatmul.mubr.f32.gmra.mrb[0].mxu0 %v974
        %v1067 = vpop.f32.mrb[0].mxu0
        %v1068 = vadd.f32 0.0, %v1067
        %v1069 = vpop.f32.mrb[0].mxu0
        %1070 = vmatprep.mubr.f32.mxu0 0.0
        %1071 = vmatmul.mubr.f32.gmra.mrb[0].mxu0 %v977
        %v1072 = vpop.f32.mrb[0].mxu0
        %v1073 = vadd.f32 0.0, %v1072
        %v1074 = vpop.f32.mrb[0].mxu0
        %1075 = vdwg.mxu0
        %v1077 = vsel %vm966, %v563, 0
        %v1080 = vsel %vm966, %v569, 0
        %v1083 = vsel %vm966, %v575, 0
        %v1086 = vsel %vm966, %v581, 0
        %v1089 = vsel %vm966, %v724, 0
        %v1092 = vsel %vm966, %v730, 0
        %v1095 = vsel %vm966, %v736, 0
        %v1098 = vsel %vm966, %v742, 0
        %1100 = vmatprep.subr.mxu0 0.0
        %1101 = vmatpush1.xpose.msra.mxu0 %v1089
        %1102 = vmatprep.subr.mxu0 0.0
        %1103 = vmatpush1.xpose.msra.mxu0 %v1092
        %1104 = vmatprep.subr.mxu0 0.0
        %1105 = vmatpush1.xpose.msra.mxu0 %v1095
        %1106 = vmatprep.subr.mxu0 0.0
        %1107 = vmatpush1.xpose.msra.mxu0 %v1098
        %1108 = vmatprep.subr.mxu0 0.0
        %1109 = vmatpush1.xpose.msra.mxu0 0.0
        %1110 = vmatprep.subr.mxu0 0.0
        %1111 = vmatpush1.xpose.msra.mxu0 0.0
        %1112 = vmatprep.subr.mxu0 0.0
        %1113 = vmatpush1.xpose.msra.mxu0 0.0
        %1114 = vmatprep.subr.mxu0 0.0
        %1115 = vmatpush1.xpose.msra.mxu0 0.0
        %1116 = vmatprep.subr.mxu0 0.0
        %1117 = vmatpush1.xpose.msra.mxu0 0.0
        %1118 = vmatprep.subr.mxu0 0.0
        %1119 = vmatpush1.xpose.msra.mxu0 0.0
        %1120 = vmatprep.subr.mxu0 0.0
        %1121 = vmatpush1.xpose.msra.mxu0 0.0
        %1122 = vmatprep.subr.mxu0 0.0
        %1123 = vmatpush1.xpose.msra.mxu0 0.0
        %1124 = vmatprep.subr.mxu0 0.0
        %1125 = vmatpush1.xpose.msra.mxu0 0.0
        %1126 = vmatprep.subr.mxu0 0.0
        %1127 = vmatpush1.xpose.msra.mxu0 0.0
        %1128 = vmatprep.subr.mxu0 0.0
        %1129 = vmatpush1.xpose.msra.mxu0 0.0
        %1130 = vmatprep.subr.mxu0 0.0
        %1131 = vmatpush1.xpose.msra.mxu0 0.0
        %1132 = vmatprep.subr.mxu0 0.0
        %1133 = vmatpush1.xpose.msra.mxu0 0.0
        %1134 = vmatprep.subr.mxu0 0.0
        %1135 = vmatpush1.xpose.msra.mxu0 0.0
        %1136 = vmatprep.subr.mxu0 0.0
        %1137 = vmatpush1.xpose.msra.mxu0 0.0
        %1138 = vmatprep.subr.mxu0 0.0
        %1139 = vmatpush1.xpose.msra.mxu0 0.0
        %1140 = vmatprep.subr.mxu0 0.0
        %1141 = vmatpush1.xpose.msra.mxu0 0.0
        %1142 = vmatprep.subr.mxu0 0.0
        %1143 = vmatpush1.xpose.msra.mxu0 0.0
        %1144 = vmatprep.subr.mxu0 0.0
        %1145 = vmatpush1.xpose.msra.mxu0 0.0
        %1146 = vmatprep.subr.mxu0 0.0
        %1147 = vmatpush1.xpose.msra.mxu0 0.0
        %1148 = vmatprep.subr.mxu0 0.0
        %1149 = vmatpush1.xpose.msra.mxu0 0.0
        %1150 = vmatprep.subr.mxu0 0.0
        %1151 = vmatpush1.xpose.msra.mxu0 0.0
        %1152 = vmatprep.subr.mxu0 0.0
        %1153 = vmatpush1.xpose.msra.mxu0 0.0
        %1154 = vmatprep.subr.mxu0 0.0
        %1155 = vmatpush1.xpose.msra.mxu0 0.0
        %1156 = vmatprep.subr.mxu0 0.0
        %1157 = vmatpush1.xpose.msra.mxu0 0.0
        %1158 = vmatprep.subr.mxu0 0.0
        %1159 = vmatpush1.xpose.msra.mxu0 0.0
        %1160 = vmatprep.subr.mxu0 0.0
        %1161 = vmatpush1.xpose.msra.mxu0 0.0
        %1162 = vmatprep.subr.mxu0 0.0
        %1163 = vmatpush1.xpose.msra.mxu0 0.0
        %1164 = vmatprep.mubr.f32.mxu0 0.0
        %1165 = vmatmul.mubr.f32.gmra.mrb[0].mxu0 %v1077
        %v1166 = vpop.f32.mrb[0].mxu0
        %v1167 = vadd.f32 0.0, %v1166
        %v1168 = vpop.f32.mrb[0].mxu0
        %1169 = vmatprep.mubr.f32.mxu0 0.0
        %1170 = vmatmul.mubr.f32.gmra.mrb[0].mxu0 %v1080
        %v1171 = vpop.f32.mrb[0].mxu0
        %v1172 = vadd.f32 0.0, %v1171
        %v1173 = vpop.f32.mrb[0].mxu0
        %1174 = vmatprep.mubr.f32.mxu0 0.0
        %1175 = vmatmul.mubr.f32.gmra.mrb[0].mxu0 %v1083
        %v1176 = vpop.f32.mrb[0].mxu0
        %v1177 = vadd.f32 0.0, %v1176
        %v1178 = vpop.f32.mrb[0].mxu0
        %1179 = vmatprep.mubr.f32.mxu0 0.0
        %1180 = vmatmul.mubr.f32.gmra.mrb[0].mxu0 %v1086
        %v1181 = vpop.f32.mrb[0].mxu0
        %v1182 = vadd.f32 0.0, %v1181
        %v1183 = vpop.f32.mrb[0].mxu0
        %1184 = vdwg.mxu0
        %v1186 = vsel %vm966, %v587, 0
        %v1189 = vsel %vm966, %v593, 0
        %v1192 = vsel %vm966, %v599, 0
        %v1195 = vsel %vm966, %v605, 0
        %v1198 = vsel %vm966, %v748, 0
        %v1201 = vsel %vm966, %v754, 0
        %v1204 = vsel %vm966, %v760, 0
        %v1207 = vsel %vm966, %v766, 0
        %1209 = vmatprep.subr.mxu0 0.0
        %1210 = vmatpush1.xpose.msra.mxu0 %v1198
        %1211 = vmatprep.subr.mxu0 0.0
        %1212 = vmatpush1.xpose.msra.mxu0 %v1201
        %1213 = vmatprep.subr.mxu0 0.0
        %1214 = vmatpush1.xpose.msra.mxu0 %v1204
        %1215 = vmatprep.subr.mxu0 0.0
        %1216 = vmatpush1.xpose.msra.mxu0 %v1207
        %1217 = vmatprep.subr.mxu0 0.0
        %1218 = vmatpush1.xpose.msra.mxu0 0.0
        %1219 = vmatprep.subr.mxu0 0.0
        %1220 = vmatpush1.xpose.msra.mxu0 0.0
        %1221 = vmatprep.subr.mxu0 0.0
        %1222 = vmatpush1.xpose.msra.mxu0 0.0
        %1223 = vmatprep.subr.mxu0 0.0
        %1224 = vmatpush1.xpose.msra.mxu0 0.0
        %1225 = vmatprep.subr.mxu0 0.0
        %1226 = vmatpush1.xpose.msra.mxu0 0.0
        %1227 = vmatprep.subr.mxu0 0.0
        %1228 = vmatpush1.xpose.msra.mxu0 0.0
        %1229 = vmatprep.subr.mxu0 0.0
        %1230 = vmatpush1.xpose.msra.mxu0 0.0
        %1231 = vmatprep.subr.mxu0 0.0
        %1232 = vmatpush1.xpose.msra.mxu0 0.0
        %1233 = vmatprep.subr.mxu0 0.0
        %1234 = vmatpush1.xpose.msra.mxu0 0.0
        %1235 = vmatprep.subr.mxu0 0.0
        %1236 = vmatpush1.xpose.msra.mxu0 0.0
        %1237 = vmatprep.subr.mxu0 0.0
        %1238 = vmatpush1.xpose.msra.mxu0 0.0
        %1239 = vmatprep.subr.mxu0 0.0
        %1240 = vmatpush1.xpose.msra.mxu0 0.0
        %1241 = vmatprep.subr.mxu0 0.0
        %1242 = vmatpush1.xpose.msra.mxu0 0.0
        %1243 = vmatprep.subr.mxu0 0.0
        %1244 = vmatpush1.xpose.msra.mxu0 0.0
        %1245 = vmatprep.subr.mxu0 0.0
        %1246 = vmatpush1.xpose.msra.mxu0 0.0
        %1247 = vmatprep.subr.mxu0 0.0
        %1248 = vmatpush1.xpose.msra.mxu0 0.0
        %1249 = vmatprep.subr.mxu0 0.0
        %1250 = vmatpush1.xpose.msra.mxu0 0.0
        %1251 = vmatprep.subr.mxu0 0.0
        %1252 = vmatpush1.xpose.msra.mxu0 0.0
        %1253 = vmatprep.subr.mxu0 0.0
        %1254 = vmatpush1.xpose.msra.mxu0 0.0
        %1255 = vmatprep.subr.mxu0 0.0
        %1256 = vmatpush1.xpose.msra.mxu0 0.0
        %1257 = vmatprep.subr.mxu0 0.0
        %1258 = vmatpush1.xpose.msra.mxu0 0.0
        %1259 = vmatprep.subr.mxu0 0.0
        %1260 = vmatpush1.xpose.msra.mxu0 0.0
        %1261 = vmatprep.subr.mxu0 0.0
        %1262 = vmatpush1.xpose.msra.mxu0 0.0
        %1263 = vmatprep.subr.mxu0 0.0
        %1264 = vmatpush1.xpose.msra.mxu0 0.0
        %1265 = vmatprep.subr.mxu0 0.0
        %1266 = vmatpush1.xpose.msra.mxu0 0.0
        %1267 = vmatprep.subr.mxu0 0.0
        %1268 = vmatpush1.xpose.msra.mxu0 0.0
        %1269 = vmatprep.subr.mxu0 0.0
        %1270 = vmatpush1.xpose.msra.mxu0 0.0
        %1271 = vmatprep.subr.mxu0 0.0
        %1272 = vmatpush1.xpose.msra.mxu0 0.0
        %1273 = vmatprep.mubr.f32.mxu0 0.0
        %1274 = vmatmul.mubr.f32.gmra.mrb[0].mxu0 %v1186
        %v1275 = vpop.f32.mrb[0].mxu0
        %v1276 = vadd.f32 0.0, %v1275
        %v1277 = vpop.f32.mrb[0].mxu0
        %1278 = vmatprep.mubr.f32.mxu0 0.0
        %1279 = vmatmul.mubr.f32.gmra.mrb[0].mxu0 %v1189
        %v1280 = vpop.f32.mrb[0].mxu0
        %v1281 = vadd.f32 0.0, %v1280
        %v1282 = vpop.f32.mrb[0].mxu0
        %1283 = vmatprep.mubr.f32.mxu0 0.0
        %1284 = vmatmul.mubr.f32.gmra.mrb[0].mxu0 %v1192
        %v1285 = vpop.f32.mrb[0].mxu0
        %v1286 = vadd.f32 0.0, %v1285
        %v1287 = vpop.f32.mrb[0].mxu0
        %1288 = vmatprep.mubr.f32.mxu0 0.0
        %1289 = vmatmul.mubr.f32.gmra.mrb[0].mxu0 %v1195
        %v1290 = vpop.f32.mrb[0].mxu0
        %v1291 = vadd.f32 0.0, %v1290
        %v1292 = vpop.f32.mrb[0].mxu0
        %1293 = vdwg.mxu0
        %v1295 = vsel %vm966, %v611, 0
        %v1298 = vsel %vm966, %v617, 0
        %v1301 = vsel %vm966, %v623, 0
        %v1304 = vsel %vm966, %v629, 0
        %v1307 = vsel %vm966, %v772, 0
        %v1310 = vsel %vm966, %v778, 0
        %v1313 = vsel %vm966, %v784, 0
        %v1316 = vsel %vm966, %v790, 0
        %1318 = vmatprep.subr.mxu0 0.0
        %1319 = vmatpush1.xpose.msra.mxu0 %v1307
        %1320 = vmatprep.subr.mxu0 0.0
        %1321 = vmatpush1.xpose.msra.mxu0 %v1310
        %1322 = vmatprep.subr.mxu0 0.0
        %1323 = vmatpush1.xpose.msra.mxu0 %v1313
        %1324 = vmatprep.subr.mxu0 0.0
        %1325 = vmatpush1.xpose.msra.mxu0 %v1316
        %1326 = vmatprep.subr.mxu0 0.0
        %1327 = vmatpush1.xpose.msra.mxu0 0.0
        %1328 = vmatprep.subr.mxu0 0.0
        %1329 = vmatpush1.xpose.msra.mxu0 0.0
        %1330 = vmatprep.subr.mxu0 0.0
        %1331 = vmatpush1.xpose.msra.mxu0 0.0
        %1332 = vmatprep.subr.mxu0 0.0
        %1333 = vmatpush1.xpose.msra.mxu0 0.0
        %1334 = vmatprep.subr.mxu0 0.0
        %1335 = vmatpush1.xpose.msra.mxu0 0.0
        %1336 = vmatprep.subr.mxu0 0.0
        %1337 = vmatpush1.xpose.msra.mxu0 0.0
        %1338 = vmatprep.subr.mxu0 0.0
        %1339 = vmatpush1.xpose.msra.mxu0 0.0
        %1340 = vmatprep.subr.mxu0 0.0
        %1341 = vmatpush1.xpose.msra.mxu0 0.0
        %1342 = vmatprep.subr.mxu0 0.0
        %1343 = vmatpush1.xpose.msra.mxu0 0.0
        %1344 = vmatprep.subr.mxu0 0.0
        %1345 = vmatpush1.xpose.msra.mxu0 0.0
        %1346 = vmatprep.subr.mxu0 0.0
        %1347 = vmatpush1.xpose.msra.mxu0 0.0
        %1348 = vmatprep.subr.mxu0 0.0
        %1349 = vmatpush1.xpose.msra.mxu0 0.0
        %1350 = vmatprep.subr.mxu0 0.0
        %1351 = vmatpush1.xpose.msra.mxu0 0.0
        %1352 = vmatprep.subr.mxu0 0.0
        %1353 = vmatpush1.xpose.msra.mxu0 0.0
        %1354 = vmatprep.subr.mxu0 0.0
        %1355 = vmatpush1.xpose.msra.mxu0 0.0
        %1356 = vmatprep.subr.mxu0 0.0
        %1357 = vmatpush1.xpose.msra.mxu0 0.0
        %1358 = vmatprep.subr.mxu0 0.0
        %1359 = vmatpush1.xpose.msra.mxu0 0.0
        %1360 = vmatprep.subr.mxu0 0.0
        %1361 = vmatpush1.xpose.msra.mxu0 0.0
        %1362 = vmatprep.subr.mxu0 0.0
        %1363 = vmatpush1.xpose.msra.mxu0 0.0
        %1364 = vmatprep.subr.mxu0 0.0
        %1365 = vmatpush1.xpose.msra.mxu0 0.0
        %1366 = vmatprep.subr.mxu0 0.0
        %1367 = vmatpush1.xpose.msra.mxu0 0.0
        %1368 = vmatprep.subr.mxu0 0.0
        %1369 = vmatpush1.xpose.msra.mxu0 0.0
        %1370 = vmatprep.subr.mxu0 0.0
        %1371 = vmatpush1.xpose.msra.mxu0 0.0
        %1372 = vmatprep.subr.mxu0 0.0
        %1373 = vmatpush1.xpose.msra.mxu0 0.0
        %1374 = vmatprep.subr.mxu0 0.0
        %1375 = vmatpush1.xpose.msra.mxu0 0.0
        %1376 = vmatprep.subr.mxu0 0.0
        %1377 = vmatpush1.xpose.msra.mxu0 0.0
        %1378 = vmatprep.subr.mxu0 0.0
        %1379 = vmatpush1.xpose.msra.mxu0 0.0
        %1380 = vmatprep.subr.mxu0 0.0
        %1381 = vmatpush1.xpose.msra.mxu0 0.0
        %1382 = vmatprep.mubr.f32.mxu0 0.0
        %1383 = vmatmul.mubr.f32.gmra.mrb[0].mxu0 %v1295
        %v1384 = vpop.f32.mrb[0].mxu0
        %v1385 = vadd.f32 0.0, %v1384
        %v1386 = vpop.f32.mrb[0].mxu0
        %1387 = vmatprep.mubr.f32.mxu0 0.0
        %1388 = vmatmul.mubr.f32.gmra.mrb[0].mxu0 %v1298
        %v1389 = vpop.f32.mrb[0].mxu0
        %v1390 = vadd.f32 0.0, %v1389
        %v1391 = vpop.f32.mrb[0].mxu0
        %1392 = vmatprep.mubr.f32.mxu0 0.0
        %1393 = vmatmul.mubr.f32.gmra.mrb[0].mxu0 %v1301
        %v1394 = vpop.f32.mrb[0].mxu0
        %v1395 = vadd.f32 0.0, %v1394
        %v1396 = vpop.f32.mrb[0].mxu0
        %1397 = vmatprep.mubr.f32.mxu0 0.0
        %1398 = vmatmul.mubr.f32.gmra.mrb[0].mxu0 %v1304
        %v1399 = vpop.f32.mrb[0].mxu0
        %v1400 = vadd.f32 0.0, %v1399
        %v1401 = vpop.f32.mrb[0].mxu0
        %1402 = vdwg.mxu0
        %v1403 = vsel %vm962, 1, 0
        %v1404 = vsel %vm963, 1, 0
        %v1405 = vsel %vm964, 1, 0
        %v1406 = vsel %vm965, 1, 0
        %vm1407 = vcmp.eq.s32.totalorder %v1403, 1
        %vm1408 = vcmp.eq.s32.totalorder %v1404, 1
        %vm1409 = vcmp.eq.s32.totalorder %v1405, 1
        %vm1410 = vcmp.eq.s32.totalorder %v1406, 1
        %v1411 = vsel %vm1407, %v1058, -inf
        %v1412 = vsel %vm1408, %v1063, -inf
        %v1413 = vsel %vm1409, %v1068, -inf
        %v1414 = vsel %vm1410, %v1073, -inf
        %v1415 = vsel %vm1407, %v1167, -inf
        %v1416 = vsel %vm1408, %v1172, -inf
        %v1417 = vsel %vm1409, %v1177, -inf
        %v1418 = vsel %vm1410, %v1182, -inf
        %v1419 = vsel %vm1407, %v1276, -inf
        %v1420 = vsel %vm1408, %v1281, -inf
        %v1421 = vsel %vm1409, %v1286, -inf
        %v1422 = vsel %vm1410, %v1291, -inf
        %v1423 = vsel %vm1407, %v1385, -inf
        %v1424 = vsel %vm1408, %v1390, -inf
        %v1425 = vsel %vm1409, %v1395, -inf
        %v1426 = vsel %vm1410, %v1400, -inf
        %vm1427 = vcmask 261120
        %v1428 = vsel %vm1427, %v1411, -inf
        %1429 = vmax.xlane.f32.xlu0 %v1428
        %v1430 = vpop.xlane.xlu0 %1429
        %v1431 = vsel %vm1427, %v1412, -inf
        %1432 = vmax.xlane.f32.xlu0 %v1431
        %v1433 = vpop.xlane.xlu0 %1432
        %v1434 = vsel %vm1427, %v1413, -inf
        %1435 = vmax.xlane.f32.xlu0 %v1434
        %v1436 = vpop.xlane.xlu0 %1435
        %v1437 = vsel %vm1427, %v1414, -inf
        %1438 = vmax.xlane.f32.xlu0 %v1437
        %v1439 = vpop.xlane.xlu0 %1438
        %v1440 = vsel %vm1427, %v1415, -inf
        %1441 = vmax.xlane.f32.xlu0 %v1440
        %v1442 = vpop.xlane.xlu0 %1441
        %v1443 = vsel %vm1427, %v1416, -inf
        %1444 = vmax.xlane.f32.xlu0 %v1443
        %v1445 = vpop.xlane.xlu0 %1444
        %v1446 = vsel %vm1427, %v1417, -inf
        %1447 = vmax.xlane.f32.xlu0 %v1446
        %v1448 = vpop.xlane.xlu0 %1447
        %v1449 = vsel %vm1427, %v1418, -inf
        %1450 = vmax.xlane.f32.xlu0 %v1449
        %v1451 = vpop.xlane.xlu0 %1450
        %v1452 = vsel %vm1427, %v1419, -inf
        %1453 = vmax.xlane.f32.xlu0 %v1452
        %v1454 = vpop.xlane.xlu0 %1453
        %v1455 = vsel %vm1427, %v1420, -inf
        %1456 = vmax.xlane.f32.xlu0 %v1455
        %v1457 = vpop.xlane.xlu0 %1456
        %v1458 = vsel %vm1427, %v1421, -inf
        %1459 = vmax.xlane.f32.xlu0 %v1458
        %v1460 = vpop.xlane.xlu0 %1459
        %v1461 = vsel %vm1427, %v1422, -inf
        %1462 = vmax.xlane.f32.xlu0 %v1461
        %v1463 = vpop.xlane.xlu0 %1462
        %v1464 = vsel %vm1427, %v1423, -inf
        %1465 = vmax.xlane.f32.xlu0 %v1464
        %v1466 = vpop.xlane.xlu0 %1465
        %v1467 = vsel %vm1427, %v1424, -inf
        %1468 = vmax.xlane.f32.xlu0 %v1467
        %v1469 = vpop.xlane.xlu0 %1468
        %v1470 = vsel %vm1427, %v1425, -inf
        %1471 = vmax.xlane.f32.xlu0 %v1470
        %v1472 = vpop.xlane.xlu0 %1471
        %v1473 = vsel %vm1427, %v1426, -inf
        %1474 = vmax.xlane.f32.xlu0 %v1473
        %v1475 = vpop.xlane.xlu0 %1474
        %v1476 = vsub.f32 %v1411, %v1430
        %v1477 = vsub.f32 %v1412, %v1433
        %v1478 = vsub.f32 %v1413, %v1436
        %v1479 = vsub.f32 %v1414, %v1439
        %v1480 = vsub.f32 %v1415, %v1442
        %v1481 = vsub.f32 %v1416, %v1445
        %v1482 = vsub.f32 %v1417, %v1448
        %v1483 = vsub.f32 %v1418, %v1451
        %v1484 = vsub.f32 %v1419, %v1454
        %v1485 = vsub.f32 %v1420, %v1457
        %v1486 = vsub.f32 %v1421, %v1460
        %v1487 = vsub.f32 %v1422, %v1463
        %v1488 = vsub.f32 %v1423, %v1466
        %v1489 = vsub.f32 %v1424, %v1469
        %v1490 = vsub.f32 %v1425, %v1472
        %v1491 = vsub.f32 %v1426, %v1475
        %v1492 = vmul.f32 %v1476, 1.442695
        %v1493 = vpow.pop %v1492
        %v1494 = vmul.f32 %v1477, 1.442695
        %v1495 = vpow.pop %v1494
        %v1496 = vmul.f32 %v1478, 1.442695
        %v1497 = vpow.pop %v1496
        %v1498 = vmul.f32 %v1479, 1.442695
        %v1499 = vpow.pop %v1498
        %v1500 = vmul.f32 %v1480, 1.442695
        %v1501 = vpow.pop %v1500
        %v1502 = vmul.f32 %v1481, 1.442695
        %v1503 = vpow.pop %v1502
        %v1504 = vmul.f32 %v1482, 1.442695
        %v1505 = vpow.pop %v1504
        %v1506 = vmul.f32 %v1483, 1.442695
        %v1507 = vpow.pop %v1506
        %v1508 = vmul.f32 %v1484, 1.442695
        %v1509 = vpow.pop %v1508
        %v1510 = vmul.f32 %v1485, 1.442695
        %v1511 = vpow.pop %v1510
        %v1512 = vmul.f32 %v1486, 1.442695
        %v1513 = vpow.pop %v1512
        %v1514 = vmul.f32 %v1487, 1.442695
        %v1515 = vpow.pop %v1514
        %v1516 = vmul.f32 %v1488, 1.442695
        %v1517 = vpow.pop %v1516
        %v1518 = vmul.f32 %v1489, 1.442695
        %v1519 = vpow.pop %v1518
        %v1520 = vmul.f32 %v1490, 1.442695
        %v1521 = vpow.pop %v1520
        %v1522 = vmul.f32 %v1491, 1.442695
        %v1523 = vpow.pop %v1522
        %v1524 = vsel %vm1427, %v1493, 0.0
        %1525 = vadd.xlane.f32.xlu0 %v1524
        %v1526 = vpop.xlane.xlu0 %1525
        %v1527 = vsel %vm1427, %v1495, 0.0
        %1528 = vadd.xlane.f32.xlu0 %v1527
        %v1529 = vpop.xlane.xlu0 %1528
        %v1530 = vsel %vm1427, %v1497, 0.0
        %1531 = vadd.xlane.f32.xlu0 %v1530
        %v1532 = vpop.xlane.xlu0 %1531
        %v1533 = vsel %vm1427, %v1499, 0.0
        %1534 = vadd.xlane.f32.xlu0 %v1533
        %v1535 = vpop.xlane.xlu0 %1534
        %v1536 = vsel %vm1427, %v1501, 0.0
        %1537 = vadd.xlane.f32.xlu0 %v1536
        %v1538 = vpop.xlane.xlu0 %1537
        %v1539 = vsel %vm1427, %v1503, 0.0
        %1540 = vadd.xlane.f32.xlu0 %v1539
        %v1541 = vpop.xlane.xlu0 %1540
        %v1542 = vsel %vm1427, %v1505, 0.0
        %1543 = vadd.xlane.f32.xlu0 %v1542
        %v1544 = vpop.xlane.xlu0 %1543
        %v1545 = vsel %vm1427, %v1507, 0.0
        %1546 = vadd.xlane.f32.xlu0 %v1545
        %v1547 = vpop.xlane.xlu0 %1546
        %v1548 = vsel %vm1427, %v1509, 0.0
        %1549 = vadd.xlane.f32.xlu0 %v1548
        %v1550 = vpop.xlane.xlu0 %1549
        %v1551 = vsel %vm1427, %v1511, 0.0
        %1552 = vadd.xlane.f32.xlu0 %v1551
        %v1553 = vpop.xlane.xlu0 %1552
        %v1554 = vsel %vm1427, %v1513, 0.0
        %1555 = vadd.xlane.f32.xlu0 %v1554
        %v1556 = vpop.xlane.xlu0 %1555
        %v1557 = vsel %vm1427, %v1515, 0.0
        %1558 = vadd.xlane.f32.xlu0 %v1557
        %v1559 = vpop.xlane.xlu0 %1558
        %v1560 = vsel %vm1427, %v1517, 0.0
        %1561 = vadd.xlane.f32.xlu0 %v1560
        %v1562 = vpop.xlane.xlu0 %1561
        %v1563 = vsel %vm1427, %v1519, 0.0
        %1564 = vadd.xlane.f32.xlu0 %v1563
        %v1565 = vpop.xlane.xlu0 %1564
        %v1566 = vsel %vm1427, %v1521, 0.0
        %1567 = vadd.xlane.f32.xlu0 %v1566
        %v1568 = vpop.xlane.xlu0 %1567
        %v1569 = vsel %vm1427, %v1523, 0.0
        %1570 = vadd.xlane.f32.xlu0 %v1569
        %v1571 = vpop.xlane.xlu0 %1570
        %v1572 = vrcp.pop %v1526
        %v1573 = vrcp.pop %v1529
        %v1574 = vrcp.pop %v1532
        %v1575 = vrcp.pop %v1535
        %v1576 = vrcp.pop %v1538
        %v1577 = vrcp.pop %v1541
        %v1578 = vrcp.pop %v1544
        %v1579 = vrcp.pop %v1547
        %v1580 = vrcp.pop %v1550
        %v1581 = vrcp.pop %v1553
        %v1582 = vrcp.pop %v1556
        %v1583 = vrcp.pop %v1559
        %v1584 = vrcp.pop %v1562
        %v1585 = vrcp.pop %v1565
        %v1586 = vrcp.pop %v1568
        %v1587 = vrcp.pop %v1571
        %v1588 = vmul.f32 %v1493, %v1572
        %v1589 = vmul.f32 %v1495, %v1573
        %v1590 = vmul.f32 %v1497, %v1574
        %v1591 = vmul.f32 %v1499, %v1575
        %v1592 = vmul.f32 %v1501, %v1576
        %v1593 = vmul.f32 %v1503, %v1577
        %v1594 = vmul.f32 %v1505, %v1578
        %v1595 = vmul.f32 %v1507, %v1579
        %v1596 = vmul.f32 %v1509, %v1580
        %v1597 = vmul.f32 %v1511, %v1581
        %v1598 = vmul.f32 %v1513, %v1582
        %v1599 = vmul.f32 %v1515, %v1583
        %v1600 = vmul.f32 %v1517, %v1584
        %v1601 = vmul.f32 %v1519, %v1585
        %v1602 = vmul.f32 %v1521, %v1586
        %v1603 = vmul.f32 %v1523, %v1587
        %v1605 = vsel %vm1427, %v1588, 0
        %v1608 = vsel %vm1427, %v1589, 0
        %v1611 = vsel %vm1427, %v1590, 0
        %v1614 = vsel %vm1427, %v1591, 0
        %1616 = vmatprep.subr.mxu0 0.0
        %1617 = vmatpush1.msra.mxu0 %v861
        %1618 = vmatprep.subr.mxu0 0.0
        %1619 = vmatpush1.msra.mxu0 %v867
        %1620 = vmatprep.subr.mxu0 0.0
        %1621 = vmatpush1.msra.mxu0 %v873
        %1622 = vmatprep.subr.mxu0 0.0
        %1623 = vmatpush1.msra.mxu0 %v879
        %1624 = vmatprep.subr.mxu0 0.0
        %1625 = vmatpush1.msra.mxu0 0.0
        %1626 = vmatprep.subr.mxu0 0.0
        %1627 = vmatpush1.msra.mxu0 0.0
        %1628 = vmatprep.subr.mxu0 0.0
        %1629 = vmatpush1.msra.mxu0 0.0
        %1630 = vmatprep.subr.mxu0 0.0
        %1631 = vmatpush1.msra.mxu0 0.0
        %1632 = vmatprep.subr.mxu0 0.0
        %1633 = vmatpush1.msra.mxu0 0.0
        %1634 = vmatprep.subr.mxu0 0.0
        %1635 = vmatpush1.msra.mxu0 0.0
        %1636 = vmatprep.subr.mxu0 0.0
        %1637 = vmatpush1.msra.mxu0 0.0
        %1638 = vmatprep.subr.mxu0 0.0
        %1639 = vmatpush1.msra.mxu0 0.0
        %1640 = vmatprep.subr.mxu0 0.0
        %1641 = vmatpush1.msra.mxu0 0.0
        %1642 = vmatprep.subr.mxu0 0.0
        %1643 = vmatpush1.msra.mxu0 0.0
        %1644 = vmatprep.subr.mxu0 0.0
        %1645 = vmatpush1.msra.mxu0 0.0
        %1646 = vmatprep.subr.mxu0 0.0
        %1647 = vmatpush1.msra.mxu0 0.0
        %1648 = vmatprep.subr.mxu0 0.0
        %1649 = vmatpush1.msra.mxu0 0.0
        %1650 = vmatprep.subr.mxu0 0.0
        %1651 = vmatpush1.msra.mxu0 0.0
        %1652 = vmatprep.subr.mxu0 0.0
        %1653 = vmatpush1.msra.mxu0 0.0
        %1654 = vmatprep.subr.mxu0 0.0
        %1655 = vmatpush1.msra.mxu0 0.0
        %1656 = vmatprep.subr.mxu0 0.0
        %1657 = vmatpush1.msra.mxu0 0.0
        %1658 = vmatprep.subr.mxu0 0.0
        %1659 = vmatpush1.msra.mxu0 0.0
        %1660 = vmatprep.subr.mxu0 0.0
        %1661 = vmatpush1.msra.mxu0 0.0
        %1662 = vmatprep.subr.mxu0 0.0
        %1663 = vmatpush1.msra.mxu0 0.0
        %1664 = vmatprep.subr.mxu0 0.0
        %1665 = vmatpush1.msra.mxu0 0.0
        %1666 = vmatprep.subr.mxu0 0.0
        %1667 = vmatpush1.msra.mxu0 0.0
        %1668 = vmatprep.subr.mxu0 0.0
        %1669 = vmatpush1.msra.mxu0 0.0
        %1670 = vmatprep.subr.mxu0 0.0
        %1671 = vmatpush1.msra.mxu0 0.0
        %1672 = vmatprep.subr.mxu0 0.0
        %1673 = vmatpush1.msra.mxu0 0.0
        %1674 = vmatprep.subr.mxu0 0.0
        %1675 = vmatpush1.msra.mxu0 0.0
        %1676 = vmatprep.subr.mxu0 0.0
        %1677 = vmatpush1.msra.mxu0 0.0
        %1678 = vmatprep.subr.mxu0 0.0
        %1679 = vmatpush1.msra.mxu0 0.0
        %1680 = vmatprep.mubr.f32.mxu0 0.0
        %1681 = vmatmul.mubr.f32.gmra.mrb[0].mxu0 %v1605
        %v1682 = vpop.f32.mrb[0].mxu0
        %v1683 = vadd.f32 0.0, %v1682
        %v1684 = vpop.f32.mrb[0].mxu0
        %1685 = vmatprep.mubr.f32.mxu0 0.0
        %1686 = vmatmul.mubr.f32.gmra.mrb[0].mxu0 %v1608
        %v1687 = vpop.f32.mrb[0].mxu0
        %v1688 = vadd.f32 0.0, %v1687
        %v1689 = vpop.f32.mrb[0].mxu0
        %1690 = vmatprep.mubr.f32.mxu0 0.0
        %1691 = vmatmul.mubr.f32.gmra.mrb[0].mxu0 %v1611
        %v1692 = vpop.f32.mrb[0].mxu0
        %v1693 = vadd.f32 0.0, %v1692
        %v1694 = vpop.f32.mrb[0].mxu0
        %1695 = vmatprep.mubr.f32.mxu0 0.0
        %1696 = vmatmul.mubr.f32.gmra.mrb[0].mxu0 %v1614
        %v1697 = vpop.f32.mrb[0].mxu0
        %v1698 = vadd.f32 0.0, %v1697
        %v1699 = vpop.f32.mrb[0].mxu0
        %1700 = vdwg.mxu0
        %v1702 = vsel %vm1427, %v1592, 0
        %v1705 = vsel %vm1427, %v1593, 0
        %v1708 = vsel %vm1427, %v1594, 0
        %v1711 = vsel %vm1427, %v1595, 0
        %1713 = vmatprep.subr.mxu0 0.0
        %1714 = vmatpush1.msra.mxu0 %v885
        %1715 = vmatprep.subr.mxu0 0.0
        %1716 = vmatpush1.msra.mxu0 %v891
        %1717 = vmatprep.subr.mxu0 0.0
        %1718 = vmatpush1.msra.mxu0 %v897
        %1719 = vmatprep.subr.mxu0 0.0
        %1720 = vmatpush1.msra.mxu0 %v903
        %1721 = vmatprep.subr.mxu0 0.0
        %1722 = vmatpush1.msra.mxu0 0.0
        %1723 = vmatprep.subr.mxu0 0.0
        %1724 = vmatpush1.msra.mxu0 0.0
        %1725 = vmatprep.subr.mxu0 0.0
        %1726 = vmatpush1.msra.mxu0 0.0
        %1727 = vmatprep.subr.mxu0 0.0
        %1728 = vmatpush1.msra.mxu0 0.0
        %1729 = vmatprep.subr.mxu0 0.0
        %1730 = vmatpush1.msra.mxu0 0.0
        %1731 = vmatprep.subr.mxu0 0.0
        %1732 = vmatpush1.msra.mxu0 0.0
        %1733 = vmatprep.subr.mxu0 0.0
        %1734 = vmatpush1.msra.mxu0 0.0
        %1735 = vmatprep.subr.mxu0 0.0
        %1736 = vmatpush1.msra.mxu0 0.0
        %1737 = vmatprep.subr.mxu0 0.0
        %1738 = vmatpush1.msra.mxu0 0.0
        %1739 = vmatprep.subr.mxu0 0.0
        %1740 = vmatpush1.msra.mxu0 0.0
        %1741 = vmatprep.subr.mxu0 0.0
        %1742 = vmatpush1.msra.mxu0 0.0
        %1743 = vmatprep.subr.mxu0 0.0
        %1744 = vmatpush1.msra.mxu0 0.0
        %1745 = vmatprep.subr.mxu0 0.0
        %1746 = vmatpush1.msra.mxu0 0.0
        %1747 = vmatprep.subr.mxu0 0.0
        %1748 = vmatpush1.msra.mxu0 0.0
        %1749 = vmatprep.subr.mxu0 0.0
        %1750 = vmatpush1.msra.mxu0 0.0
        %1751 = vmatprep.subr.mxu0 0.0
        %1752 = vmatpush1.msra.mxu0 0.0
        %1753 = vmatprep.subr.mxu0 0.0
        %1754 = vmatpush1.msra.mxu0 0.0
        %1755 = vmatprep.subr.mxu0 0.0
        %1756 = vmatpush1.msra.mxu0 0.0
        %1757 = vmatprep.subr.mxu0 0.0
        %1758 = vmatpush1.msra.mxu0 0.0
        %1759 = vmatprep.subr.mxu0 0.0
        %1760 = vmatpush1.msra.mxu0 0.0
        %1761 = vmatprep.subr.mxu0 0.0
        %1762 = vmatpush1.msra.mxu0 0.0
        %1763 = vmatprep.subr.mxu0 0.0
        %1764 = vmatpush1.msra.mxu0 0.0
        %1765 = vmatprep.subr.mxu0 0.0
        %1766 = vmatpush1.msra.mxu0 0.0
        %1767 = vmatprep.subr.mxu0 0.0
        %1768 = vmatpush1.msra.mxu0 0.0
        %1769 = vmatprep.subr.mxu0 0.0
        %1770 = vmatpush1.msra.mxu0 0.0
        %1771 = vmatprep.subr.mxu0 0.0
        %1772 = vmatpush1.msra.mxu0 0.0
        %1773 = vmatprep.subr.mxu0 0.0
        %1774 = vmatpush1.msra.mxu0 0.0
        %1775 = vmatprep.subr.mxu0 0.0
        %1776 = vmatpush1.msra.mxu0 0.0
        %1777 = vmatprep.mubr.f32.mxu0 0.0
        %1778 = vmatmul.mubr.f32.gmra.mrb[0].mxu0 %v1702
        %v1779 = vpop.f32.mrb[0].mxu0
        %v1780 = vadd.f32 0.0, %v1779
        %v1781 = vpop.f32.mrb[0].mxu0
        %1782 = vmatprep.mubr.f32.mxu0 0.0
        %1783 = vmatmul.mubr.f32.gmra.mrb[0].mxu0 %v1705
        %v1784 = vpop.f32.mrb[0].mxu0
        %v1785 = vadd.f32 0.0, %v1784
        %v1786 = vpop.f32.mrb[0].mxu0
        %1787 = vmatprep.mubr.f32.mxu0 0.0
        %1788 = vmatmul.mubr.f32.gmra.mrb[0].mxu0 %v1708
        %v1789 = vpop.f32.mrb[0].mxu0
        %v1790 = vadd.f32 0.0, %v1789
        %v1791 = vpop.f32.mrb[0].mxu0
        %1792 = vmatprep.mubr.f32.mxu0 0.0
        %1793 = vmatmul.mubr.f32.gmra.mrb[0].mxu0 %v1711
        %v1794 = vpop.f32.mrb[0].mxu0
        %v1795 = vadd.f32 0.0, %v1794
        %v1796 = vpop.f32.mrb[0].mxu0
        %1797 = vdwg.mxu0
        %v1799 = vsel %vm1427, %v1596, 0
        %v1802 = vsel %vm1427, %v1597, 0
        %v1805 = vsel %vm1427, %v1598, 0
        %v1808 = vsel %vm1427, %v1599, 0
        %1810 = vmatprep.subr.mxu0 0.0
        %1811 = vmatpush1.msra.mxu0 %v909
        %1812 = vmatprep.subr.mxu0 0.0
        %1813 = vmatpush1.msra.mxu0 %v915
        %1814 = vmatprep.subr.mxu0 0.0
        %1815 = vmatpush1.msra.mxu0 %v921
        %1816 = vmatprep.subr.mxu0 0.0
        %1817 = vmatpush1.msra.mxu0 %v927
        %1818 = vmatprep.subr.mxu0 0.0
        %1819 = vmatpush1.msra.mxu0 0.0
        %1820 = vmatprep.subr.mxu0 0.0
        %1821 = vmatpush1.msra.mxu0 0.0
        %1822 = vmatprep.subr.mxu0 0.0
        %1823 = vmatpush1.msra.mxu0 0.0
        %1824 = vmatprep.subr.mxu0 0.0
        %1825 = vmatpush1.msra.mxu0 0.0
        %1826 = vmatprep.subr.mxu0 0.0
        %1827 = vmatpush1.msra.mxu0 0.0
        %1828 = vmatprep.subr.mxu0 0.0
        %1829 = vmatpush1.msra.mxu0 0.0
        %1830 = vmatprep.subr.mxu0 0.0
        %1831 = vmatpush1.msra.mxu0 0.0
        %1832 = vmatprep.subr.mxu0 0.0
        %1833 = vmatpush1.msra.mxu0 0.0
        %1834 = vmatprep.subr.mxu0 0.0
        %1835 = vmatpush1.msra.mxu0 0.0
        %1836 = vmatprep.subr.mxu0 0.0
        %1837 = vmatpush1.msra.mxu0 0.0
        %1838 = vmatprep.subr.mxu0 0.0
        %1839 = vmatpush1.msra.mxu0 0.0
        %1840 = vmatprep.subr.mxu0 0.0
        %1841 = vmatpush1.msra.mxu0 0.0
        %1842 = vmatprep.subr.mxu0 0.0
        %1843 = vmatpush1.msra.mxu0 0.0
        %1844 = vmatprep.subr.mxu0 0.0
        %1845 = vmatpush1.msra.mxu0 0.0
        %1846 = vmatprep.subr.mxu0 0.0
        %1847 = vmatpush1.msra.mxu0 0.0
        %1848 = vmatprep.subr.mxu0 0.0
        %1849 = vmatpush1.msra.mxu0 0.0
        %1850 = vmatprep.subr.mxu0 0.0
        %1851 = vmatpush1.msra.mxu0 0.0
        %1852 = vmatprep.subr.mxu0 0.0
        %1853 = vmatpush1.msra.mxu0 0.0
        %1854 = vmatprep.subr.mxu0 0.0
        %1855 = vmatpush1.msra.mxu0 0.0
        %1856 = vmatprep.subr.mxu0 0.0
        %1857 = vmatpush1.msra.mxu0 0.0
        %1858 = vmatprep.subr.mxu0 0.0
        %1859 = vmatpush1.msra.mxu0 0.0
        %1860 = vmatprep.subr.mxu0 0.0
        %1861 = vmatpush1.msra.mxu0 0.0
        %1862 = vmatprep.subr.mxu0 0.0
        %1863 = vmatpush1.msra.mxu0 0.0
        %1864 = vmatprep.subr.mxu0 0.0
        %1865 = vmatpush1.msra.mxu0 0.0
        %1866 = vmatprep.subr.mxu0 0.0
        %1867 = vmatpush1.msra.mxu0 0.0
        %1868 = vmatprep.subr.mxu0 0.0
        %1869 = vmatpush1.msra.mxu0 0.0
        %1870 = vmatprep.subr.mxu0 0.0
        %1871 = vmatpush1.msra.mxu0 0.0
        %1872 = vmatprep.subr.mxu0 0.0
        %1873 = vmatpush1.msra.mxu0 0.0
        %1874 = vmatprep.mubr.f32.mxu0 0.0
        %1875 = vmatmul.mubr.f32.gmra.mrb[0].mxu0 %v1799
        %v1876 = vpop.f32.mrb[0].mxu0
        %v1877 = vadd.f32 0.0, %v1876
        %v1878 = vpop.f32.mrb[0].mxu0
        %1879 = vmatprep.mubr.f32.mxu0 0.0
        %1880 = vmatmul.mubr.f32.gmra.mrb[0].mxu0 %v1802
        %v1881 = vpop.f32.mrb[0].mxu0
        %v1882 = vadd.f32 0.0, %v1881
        %v1883 = vpop.f32.mrb[0].mxu0
        %1884 = vmatprep.mubr.f32.mxu0 0.0
        %1885 = vmatmul.mubr.f32.gmra.mrb[0].mxu0 %v1805
        %v1886 = vpop.f32.mrb[0].mxu0
        %v1887 = vadd.f32 0.0, %v1886
        %v1888 = vpop.f32.mrb[0].mxu0
        %1889 = vmatprep.mubr.f32.mxu0 0.0
        %1890 = vmatmul.mubr.f32.gmra.mrb[0].mxu0 %v1808
        %v1891 = vpop.f32.mrb[0].mxu0
        %v1892 = vadd.f32 0.0, %v1891
        %v1893 = vpop.f32.mrb[0].mxu0
        %1894 = vdwg.mxu0
        %v1896 = vsel %vm1427, %v1600, 0
        %v1899 = vsel %vm1427, %v1601, 0
        %v1902 = vsel %vm1427, %v1602, 0
        %v1905 = vsel %vm1427, %v1603, 0
        %1907 = vmatprep.subr.mxu0 0.0
        %1908 = vmatpush1.msra.mxu0 %v933
        %1909 = vmatprep.subr.mxu0 0.0
        %1910 = vmatpush1.msra.mxu0 %v939
        %1911 = vmatprep.subr.mxu0 0.0
        %1912 = vmatpush1.msra.mxu0 %v945
        %1913 = vmatprep.subr.mxu0 0.0
        %1914 = vmatpush1.msra.mxu0 %v951
        %1915 = vmatprep.subr.mxu0 0.0
        %1916 = vmatpush1.msra.mxu0 0.0
        %1917 = vmatprep.subr.mxu0 0.0
        %1918 = vmatpush1.msra.mxu0 0.0
        %1919 = vmatprep.subr.mxu0 0.0
        %1920 = vmatpush1.msra.mxu0 0.0
        %1921 = vmatprep.subr.mxu0 0.0
        %1922 = vmatpush1.msra.mxu0 0.0
        %1923 = vmatprep.subr.mxu0 0.0
        %1924 = vmatpush1.msra.mxu0 0.0
        %1925 = vmatprep.subr.mxu0 0.0
        %1926 = vmatpush1.msra.mxu0 0.0
        %1927 = vmatprep.subr.mxu0 0.0
        %1928 = vmatpush1.msra.mxu0 0.0
        %1929 = vmatprep.subr.mxu0 0.0
        %1930 = vmatpush1.msra.mxu0 0.0
        %1931 = vmatprep.subr.mxu0 0.0
        %1932 = vmatpush1.msra.mxu0 0.0
        %1933 = vmatprep.subr.mxu0 0.0
        %1934 = vmatpush1.msra.mxu0 0.0
        %1935 = vmatprep.subr.mxu0 0.0
        %1936 = vmatpush1.msra.mxu0 0.0
        %1937 = vmatprep.subr.mxu0 0.0
        %1938 = vmatpush1.msra.mxu0 0.0
        %1939 = vmatprep.subr.mxu0 0.0
        %1940 = vmatpush1.msra.mxu0 0.0
        %1941 = vmatprep.subr.mxu0 0.0
        %1942 = vmatpush1.msra.mxu0 0.0
        %1943 = vmatprep.subr.mxu0 0.0
        %1944 = vmatpush1.msra.mxu0 0.0
        %1945 = vmatprep.subr.mxu0 0.0
        %1946 = vmatpush1.msra.mxu0 0.0
        %1947 = vmatprep.subr.mxu0 0.0
        %1948 = vmatpush1.msra.mxu0 0.0
        %1949 = vmatprep.subr.mxu0 0.0
        %1950 = vmatpush1.msra.mxu0 0.0
        %1951 = vmatprep.subr.mxu0 0.0
        %1952 = vmatpush1.msra.mxu0 0.0
        %1953 = vmatprep.subr.mxu0 0.0
        %1954 = vmatpush1.msra.mxu0 0.0
        %1955 = vmatprep.subr.mxu0 0.0
        %1956 = vmatpush1.msra.mxu0 0.0
        %1957 = vmatprep.subr.mxu0 0.0
        %1958 = vmatpush1.msra.mxu0 0.0
        %1959 = vmatprep.subr.mxu0 0.0
        %1960 = vmatpush1.msra.mxu0 0.0
        %1961 = vmatprep.subr.mxu0 0.0
        %1962 = vmatpush1.msra.mxu0 0.0
        %1963 = vmatprep.subr.mxu0 0.0
        %1964 = vmatpush1.msra.mxu0 0.0
        %1965 = vmatprep.subr.mxu0 0.0
        %1966 = vmatpush1.msra.mxu0 0.0
        %1967 = vmatprep.subr.mxu0 0.0
        %1968 = vmatpush1.msra.mxu0 0.0
        %1969 = vmatprep.subr.mxu0 0.0
        %1970 = vmatpush1.msra.mxu0 0.0
        %1971 = vmatprep.mubr.f32.mxu0 0.0
        %1972 = vmatmul.mubr.f32.gmra.mrb[0].mxu0 %v1896
        %v1973 = vpop.f32.mrb[0].mxu0
        %v1974 = vadd.f32 0.0, %v1973
        %v1975 = vpop.f32.mrb[0].mxu0
        %1976 = vmatprep.mubr.f32.mxu0 0.0
        %1977 = vmatmul.mubr.f32.gmra.mrb[0].mxu0 %v1899
        %v1978 = vpop.f32.mrb[0].mxu0
        %v1979 = vadd.f32 0.0, %v1978
        %v1980 = vpop.f32.mrb[0].mxu0
        %1981 = vmatprep.mubr.f32.mxu0 0.0
        %1982 = vmatmul.mubr.f32.gmra.mrb[0].mxu0 %v1902
        %v1983 = vpop.f32.mrb[0].mxu0
        %v1984 = vadd.f32 0.0, %v1983
        %v1985 = vpop.f32.mrb[0].mxu0
        %1986 = vmatprep.mubr.f32.mxu0 0.0
        %1987 = vmatmul.mubr.f32.gmra.mrb[0].mxu0 %v1905
        %v1988 = vpop.f32.mrb[0].mxu0
        %v1989 = vadd.f32 0.0, %v1988
        %v1990 = vpop.f32.mrb[0].mxu0
        %1991 = vdwg.mxu0
        %1992 = vrot.lane.b32.xlu0 %v539, 64
        %v1993 = vpop.permute.xlu0 %1992
        %1994 = vrot.lane.b32.xlu0 %v545, 64
        %v1995 = vpop.permute.xlu0 %1994
        %1996 = vrot.lane.b32.xlu0 %v551, 64
        %v1997 = vpop.permute.xlu0 %1996
        %1998 = vrot.lane.b32.xlu0 %v557, 64
        %v1999 = vpop.permute.xlu0 %1998
        %2000 = vrot.lane.b32.xlu0 %v700, 64
        %v2001 = vpop.permute.xlu0 %2000
        %2002 = vrot.lane.b32.xlu0 %v706, 64
        %v2003 = vpop.permute.xlu0 %2002
        %2004 = vrot.lane.b32.xlu0 %v712, 64
        %v2005 = vpop.permute.xlu0 %2004
        %2006 = vrot.lane.b32.xlu0 %v718, 64
        %v2007 = vpop.permute.xlu0 %2006
        %v2008 = vsel %vm966, %v1993, 0
        %v2010 = vsel %vm966, %v1995, 0
        %v2012 = vsel %vm966, %v1997, 0
        %v2014 = vsel %vm966, %v1999, 0
        %v2016 = vsel %vm966, %v2001, 0
        %v2018 = vsel %vm966, %v2003, 0
        %v2020 = vsel %vm966, %v2005, 0
        %v2022 = vsel %vm966, %v2007, 0
        %2024 = vmatprep.subr.mxu0 0.0
        %2025 = vmatpush1.xpose.msra.mxu0 %v2016
        %2026 = vmatprep.subr.mxu0 0.0
        %2027 = vmatpush1.xpose.msra.mxu0 %v2018
        %2028 = vmatprep.subr.mxu0 0.0
        %2029 = vmatpush1.xpose.msra.mxu0 %v2020
        %2030 = vmatprep.subr.mxu0 0.0
        %2031 = vmatpush1.xpose.msra.mxu0 %v2022
        %2032 = vmatprep.subr.mxu0 0.0
        %2033 = vmatpush1.xpose.msra.mxu0 0.0
        %2034 = vmatprep.subr.mxu0 0.0
        %2035 = vmatpush1.xpose.msra.mxu0 0.0
        %2036 = vmatprep.subr.mxu0 0.0
        %2037 = vmatpush1.xpose.msra.mxu0 0.0
        %2038 = vmatprep.subr.mxu0 0.0
        %2039 = vmatpush1.xpose.msra.mxu0 0.0
        %2040 = vmatprep.subr.mxu0 0.0
        %2041 = vmatpush1.xpose.msra.mxu0 0.0
        %2042 = vmatprep.subr.mxu0 0.0
        %2043 = vmatpush1.xpose.msra.mxu0 0.0
        %2044 = vmatprep.subr.mxu0 0.0
        %2045 = vmatpush1.xpose.msra.mxu0 0.0
        %2046 = vmatprep.subr.mxu0 0.0
        %2047 = vmatpush1.xpose.msra.mxu0 0.0
        %2048 = vmatprep.subr.mxu0 0.0
        %2049 = vmatpush1.xpose.msra.mxu0 0.0
        %2050 = vmatprep.subr.mxu0 0.0
        %2051 = vmatpush1.xpose.msra.mxu0 0.0
        %2052 = vmatprep.subr.mxu0 0.0
        %2053 = vmatpush1.xpose.msra.mxu0 0.0
        %2054 = vmatprep.subr.mxu0 0.0
        %2055 = vmatpush1.xpose.msra.mxu0 0.0
        %2056 = vmatprep.subr.mxu0 0.0
        %2057 = vmatpush1.xpose.msra.mxu0 0.0
        %2058 = vmatprep.subr.mxu0 0.0
        %2059 = vmatpush1.xpose.msra.mxu0 0.0
        %2060 = vmatprep.subr.mxu0 0.0
        %2061 = vmatpush1.xpose.msra.mxu0 0.0
        %2062 = vmatprep.subr.mxu0 0.0
        %2063 = vmatpush1.xpose.msra.mxu0 0.0
        %2064 = vmatprep.subr.mxu0 0.0
        %2065 = vmatpush1.xpose.msra.mxu0 0.0
        %2066 = vmatprep.subr.mxu0 0.0
        %2067 = vmatpush1.xpose.msra.mxu0 0.0
        %2068 = vmatprep.subr.mxu0 0.0
        %2069 = vmatpush1.xpose.msra.mxu0 0.0
        %2070 = vmatprep.subr.mxu0 0.0
        %2071 = vmatpush1.xpose.msra.mxu0 0.0
        %2072 = vmatprep.subr.mxu0 0.0
        %2073 = vmatpush1.xpose.msra.mxu0 0.0
        %2074 = vmatprep.subr.mxu0 0.0
        %2075 = vmatpush1.xpose.msra.mxu0 0.0
        %2076 = vmatprep.subr.mxu0 0.0
        %2077 = vmatpush1.xpose.msra.mxu0 0.0
        %2078 = vmatprep.subr.mxu0 0.0
        %2079 = vmatpush1.xpose.msra.mxu0 0.0
        %2080 = vmatprep.subr.mxu0 0.0
        %2081 = vmatpush1.xpose.msra.mxu0 0.0
        %2082 = vmatprep.subr.mxu0 0.0
        %2083 = vmatpush1.xpose.msra.mxu0 0.0
        %2084 = vmatprep.subr.mxu0 0.0
        %2085 = vmatpush1.xpose.msra.mxu0 0.0
        %2086 = vmatprep.subr.mxu0 0.0
        %2087 = vmatpush1.xpose.msra.mxu0 0.0
        %2088 = vmatprep.mubr.f32.mxu0 0.0
        %2089 = vmatmul.mubr.f32.gmra.mrb[0].mxu0 %v2008
        %v2090 = vpop.f32.mrb[0].mxu0
        %v2091 = vadd.f32 0.0, %v2090
        %v2092 = vpop.f32.mrb[0].mxu0
        %2093 = vmatprep.mubr.f32.mxu0 0.0
        %2094 = vmatmul.mubr.f32.gmra.mrb[0].mxu0 %v2010
        %v2095 = vpop.f32.mrb[0].mxu0
        %v2096 = vadd.f32 0.0, %v2095
        %v2097 = vpop.f32.mrb[0].mxu0
        %2098 = vmatprep.mubr.f32.mxu0 0.0
        %2099 = vmatmul.mubr.f32.gmra.mrb[0].mxu0 %v2012
        %v2100 = vpop.f32.mrb[0].mxu0
        %v2101 = vadd.f32 0.0, %v2100
        %v2102 = vpop.f32.mrb[0].mxu0
        %2103 = vmatprep.mubr.f32.mxu0 0.0
        %2104 = vmatmul.mubr.f32.gmra.mrb[0].mxu0 %v2014
        %v2105 = vpop.f32.mrb[0].mxu0
        %v2106 = vadd.f32 0.0, %v2105
        %v2107 = vpop.f32.mrb[0].mxu0
        %2108 = vdwg.mxu0
        %2109 = vrot.lane.b32.xlu0 %v563, 64
        %v2110 = vpop.permute.xlu0 %2109
        %2111 = vrot.lane.b32.xlu0 %v569, 64
        %v2112 = vpop.permute.xlu0 %2111
        %2113 = vrot.lane.b32.xlu0 %v575, 64
        %v2114 = vpop.permute.xlu0 %2113
        %2115 = vrot.lane.b32.xlu0 %v581, 64
        %v2116 = vpop.permute.xlu0 %2115
        %2117 = vrot.lane.b32.xlu0 %v724, 64
        %v2118 = vpop.permute.xlu0 %2117
        %2119 = vrot.lane.b32.xlu0 %v730, 64
        %v2120 = vpop.permute.xlu0 %2119
        %2121 = vrot.lane.b32.xlu0 %v736, 64
        %v2122 = vpop.permute.xlu0 %2121
        %2123 = vrot.lane.b32.xlu0 %v742, 64
        %v2124 = vpop.permute.xlu0 %2123
        %v2125 = vsel %vm966, %v2110, 0
        %v2127 = vsel %vm966, %v2112, 0
        %v2129 = vsel %vm966, %v2114, 0
        %v2131 = vsel %vm966, %v2116, 0
        %v2133 = vsel %vm966, %v2118, 0
        %v2135 = vsel %vm966, %v2120, 0
        %v2137 = vsel %vm966, %v2122, 0
        %v2139 = vsel %vm966, %v2124, 0
        %2141 = vmatprep.subr.mxu0 0.0
        %2142 = vmatpush1.xpose.msra.mxu0 %v2133
        %2143 = vmatprep.subr.mxu0 0.0
        %2144 = vmatpush1.xpose.msra.mxu0 %v2135
        %2145 = vmatprep.subr.mxu0 0.0
        %2146 = vmatpush1.xpose.msra.mxu0 %v2137
        %2147 = vmatprep.subr.mxu0 0.0
        %2148 = vmatpush1.xpose.msra.mxu0 %v2139
        %2149 = vmatprep.subr.mxu0 0.0
        %2150 = vmatpush1.xpose.msra.mxu0 0.0
        %2151 = vmatprep.subr.mxu0 0.0
        %2152 = vmatpush1.xpose.msra.mxu0 0.0
        %2153 = vmatprep.subr.mxu0 0.0
        %2154 = vmatpush1.xpose.msra.mxu0 0.0
        %2155 = vmatprep.subr.mxu0 0.0
        %2156 = vmatpush1.xpose.msra.mxu0 0.0
        %2157 = vmatprep.subr.mxu0 0.0
        %2158 = vmatpush1.xpose.msra.mxu0 0.0
        %2159 = vmatprep.subr.mxu0 0.0
        %2160 = vmatpush1.xpose.msra.mxu0 0.0
        %2161 = vmatprep.subr.mxu0 0.0
        %2162 = vmatpush1.xpose.msra.mxu0 0.0
        %2163 = vmatprep.subr.mxu0 0.0
        %2164 = vmatpush1.xpose.msra.mxu0 0.0
        %2165 = vmatprep.subr.mxu0 0.0
        %2166 = vmatpush1.xpose.msra.mxu0 0.0
        %2167 = vmatprep.subr.mxu0 0.0
        %2168 = vmatpush1.xpose.msra.mxu0 0.0
        %2169 = vmatprep.subr.mxu0 0.0
        %2170 = vmatpush1.xpose.msra.mxu0 0.0
        %2171 = vmatprep.subr.mxu0 0.0
        %2172 = vmatpush1.xpose.msra.mxu0 0.0
        %2173 = vmatprep.subr.mxu0 0.0
        %2174 = vmatpush1.xpose.msra.mxu0 0.0
        %2175 = vmatprep.subr.mxu0 0.0
        %2176 = vmatpush1.xpose.msra.mxu0 0.0
        %2177 = vmatprep.subr.mxu0 0.0
        %2178 = vmatpush1.xpose.msra.mxu0 0.0
        %2179 = vmatprep.subr.mxu0 0.0
        %2180 = vmatpush1.xpose.msra.mxu0 0.0
        %2181 = vmatprep.subr.mxu0 0.0
        %2182 = vmatpush1.xpose.msra.mxu0 0.0
        %2183 = vmatprep.subr.mxu0 0.0
        %2184 = vmatpush1.xpose.msra.mxu0 0.0
        %2185 = vmatprep.subr.mxu0 0.0
        %2186 = vmatpush1.xpose.msra.mxu0 0.0
        %2187 = vmatprep.subr.mxu0 0.0
        %2188 = vmatpush1.xpose.msra.mxu0 0.0
        %2189 = vmatprep.subr.mxu0 0.0
        %2190 = vmatpush1.xpose.msra.mxu0 0.0
        %2191 = vmatprep.subr.mxu0 0.0
        %2192 = vmatpush1.xpose.msra.mxu0 0.0
        %2193 = vmatprep.subr.mxu0 0.0
        %2194 = vmatpush1.xpose.msra.mxu0 0.0
        %2195 = vmatprep.subr.mxu0 0.0
        %2196 = vmatpush1.xpose.msra.mxu0 0.0
        %2197 = vmatprep.subr.mxu0 0.0
        %2198 = vmatpush1.xpose.msra.mxu0 0.0
        %2199 = vmatprep.subr.mxu0 0.0
        %2200 = vmatpush1.xpose.msra.mxu0 0.0
        %2201 = vmatprep.subr.mxu0 0.0
        %2202 = vmatpush1.xpose.msra.mxu0 0.0
        %2203 = vmatprep.subr.mxu0 0.0
        %2204 = vmatpush1.xpose.msra.mxu0 0.0
        %2205 = vmatprep.mubr.f32.mxu0 0.0
        %2206 = vmatmul.mubr.f32.gmra.mrb[0].mxu0 %v2125
        %v2207 = vpop.f32.mrb[0].mxu0
        %v2208 = vadd.f32 0.0, %v2207
        %v2209 = vpop.f32.mrb[0].mxu0
        %2210 = vmatprep.mubr.f32.mxu0 0.0
        %2211 = vmatmul.mubr.f32.gmra.mrb[0].mxu0 %v2127
        %v2212 = vpop.f32.mrb[0].mxu0
        %v2213 = vadd.f32 0.0, %v2212
        %v2214 = vpop.f32.mrb[0].mxu0
        %2215 = vmatprep.mubr.f32.mxu0 0.0
        %2216 = vmatmul.mubr.f32.gmra.mrb[0].mxu0 %v2129
        %v2217 = vpop.f32.mrb[0].mxu0
        %v2218 = vadd.f32 0.0, %v2217
        %v2219 = vpop.f32.mrb[0].mxu0
        %2220 = vmatprep.mubr.f32.mxu0 0.0
        %2221 = vmatmul.mubr.f32.gmra.mrb[0].mxu0 %v2131
        %v2222 = vpop.f32.mrb[0].mxu0
        %v2223 = vadd.f32 0.0, %v2222
        %v2224 = vpop.f32.mrb[0].mxu0
        %2225 = vdwg.mxu0
        %2226 = vrot.lane.b32.xlu0 %v587, 64
        %v2227 = vpop.permute.xlu0 %2226
        %2228 = vrot.lane.b32.xlu0 %v593, 64
        %v2229 = vpop.permute.xlu0 %2228
        %2230 = vrot.lane.b32.xlu0 %v599, 64
        %v2231 = vpop.permute.xlu0 %2230
        %2232 = vrot.lane.b32.xlu0 %v605, 64
        %v2233 = vpop.permute.xlu0 %2232
        %2234 = vrot.lane.b32.xlu0 %v748, 64
        %v2235 = vpop.permute.xlu0 %2234
        %2236 = vrot.lane.b32.xlu0 %v754, 64
        %v2237 = vpop.permute.xlu0 %2236
        %2238 = vrot.lane.b32.xlu0 %v760, 64
        %v2239 = vpop.permute.xlu0 %2238
        %2240 = vrot.lane.b32.xlu0 %v766, 64
        %v2241 = vpop.permute.xlu0 %2240
        %v2242 = vsel %vm966, %v2227, 0
        %v2244 = vsel %vm966, %v2229, 0
        %v2246 = vsel %vm966, %v2231, 0
        %v2248 = vsel %vm966, %v2233, 0
        %v2250 = vsel %vm966, %v2235, 0
        %v2252 = vsel %vm966, %v2237, 0
        %v2254 = vsel %vm966, %v2239, 0
        %v2256 = vsel %vm966, %v2241, 0
        %2258 = vmatprep.subr.mxu0 0.0
        %2259 = vmatpush1.xpose.msra.mxu0 %v2250
        %2260 = vmatprep.subr.mxu0 0.0
        %2261 = vmatpush1.xpose.msra.mxu0 %v2252
        %2262 = vmatprep.subr.mxu0 0.0
        %2263 = vmatpush1.xpose.msra.mxu0 %v2254
        %2264 = vmatprep.subr.mxu0 0.0
        %2265 = vmatpush1.xpose.msra.mxu0 %v2256
        %2266 = vmatprep.subr.mxu0 0.0
        %2267 = vmatpush1.xpose.msra.mxu0 0.0
        %2268 = vmatprep.subr.mxu0 0.0
        %2269 = vmatpush1.xpose.msra.mxu0 0.0
        %2270 = vmatprep.subr.mxu0 0.0
        %2271 = vmatpush1.xpose.msra.mxu0 0.0
        %2272 = vmatprep.subr.mxu0 0.0
        %2273 = vmatpush1.xpose.msra.mxu0 0.0
        %2274 = vmatprep.subr.mxu0 0.0
        %2275 = vmatpush1.xpose.msra.mxu0 0.0
        %2276 = vmatprep.subr.mxu0 0.0
        %2277 = vmatpush1.xpose.msra.mxu0 0.0
        %2278 = vmatprep.subr.mxu0 0.0
        %2279 = vmatpush1.xpose.msra.mxu0 0.0
        %2280 = vmatprep.subr.mxu0 0.0
        %2281 = vmatpush1.xpose.msra.mxu0 0.0
        %2282 = vmatprep.subr.mxu0 0.0
        %2283 = vmatpush1.xpose.msra.mxu0 0.0
        %2284 = vmatprep.subr.mxu0 0.0
        %2285 = vmatpush1.xpose.msra.mxu0 0.0
        %2286 = vmatprep.subr.mxu0 0.0
        %2287 = vmatpush1.xpose.msra.mxu0 0.0
        %2288 = vmatprep.subr.mxu0 0.0
        %2289 = vmatpush1.xpose.msra.mxu0 0.0
        %2290 = vmatprep.subr.mxu0 0.0
        %2291 = vmatpush1.xpose.msra.mxu0 0.0
        %2292 = vmatprep.subr.mxu0 0.0
        %2293 = vmatpush1.xpose.msra.mxu0 0.0
        %2294 = vmatprep.subr.mxu0 0.0
        %2295 = vmatpush1.xpose.msra.mxu0 0.0
        %2296 = vmatprep.subr.mxu0 0.0
        %2297 = vmatpush1.xpose.msra.mxu0 0.0
        %2298 = vmatprep.subr.mxu0 0.0
        %2299 = vmatpush1.xpose.msra.mxu0 0.0
        %2300 = vmatprep.subr.mxu0 0.0
        %2301 = vmatpush1.xpose.msra.mxu0 0.0
        %2302 = vmatprep.subr.mxu0 0.0
        %2303 = vmatpush1.xpose.msra.mxu0 0.0
        %2304 = vmatprep.subr.mxu0 0.0
        %2305 = vmatpush1.xpose.msra.mxu0 0.0
        %2306 = vmatprep.subr.mxu0 0.0
        %2307 = vmatpush1.xpose.msra.mxu0 0.0
        %2308 = vmatprep.subr.mxu0 0.0
        %2309 = vmatpush1.xpose.msra.mxu0 0.0
        %2310 = vmatprep.subr.mxu0 0.0
        %2311 = vmatpush1.xpose.msra.mxu0 0.0
        %2312 = vmatprep.subr.mxu0 0.0
        %2313 = vmatpush1.xpose.msra.mxu0 0.0
        %2314 = vmatprep.subr.mxu0 0.0
        %2315 = vmatpush1.xpose.msra.mxu0 0.0
        %2316 = vmatprep.subr.mxu0 0.0
        %2317 = vmatpush1.xpose.msra.mxu0 0.0
        %2318 = vmatprep.subr.mxu0 0.0
        %2319 = vmatpush1.xpose.msra.mxu0 0.0
        %2320 = vmatprep.subr.mxu0 0.0
        %2321 = vmatpush1.xpose.msra.mxu0 0.0
        %2322 = vmatprep.mubr.f32.mxu0 0.0
        %2323 = vmatmul.mubr.f32.gmra.mrb[0].mxu0 %v2242
        %v2324 = vpop.f32.mrb[0].mxu0
        %v2325 = vadd.f32 0.0, %v2324
        %v2326 = vpop.f32.mrb[0].mxu0
        %2327 = vmatprep.mubr.f32.mxu0 0.0
        %2328 = vmatmul.mubr.f32.gmra.mrb[0].mxu0 %v2244
        %v2329 = vpop.f32.mrb[0].mxu0
        %v2330 = vadd.f32 0.0, %v2329
        %v2331 = vpop.f32.mrb[0].mxu0
        %2332 = vmatprep.mubr.f32.mxu0 0.0
        %2333 = vmatmul.mubr.f32.gmra.mrb[0].mxu0 %v2246
        %v2334 = vpop.f32.mrb[0].mxu0
        %v2335 = vadd.f32 0.0, %v2334
        %v2336 = vpop.f32.mrb[0].mxu0
        %2337 = vmatprep.mubr.f32.mxu0 0.0
        %2338 = vmatmul.mubr.f32.gmra.mrb[0].mxu0 %v2248
        %v2339 = vpop.f32.mrb[0].mxu0
        %v2340 = vadd.f32 0.0, %v2339
        %v2341 = vpop.f32.mrb[0].mxu0
        %2342 = vdwg.mxu0
        %2343 = vrot.lane.b32.xlu0 %v611, 64
        %v2344 = vpop.permute.xlu0 %2343
        %2345 = vrot.lane.b32.xlu0 %v617, 64
        %v2346 = vpop.permute.xlu0 %2345
        %2347 = vrot.lane.b32.xlu0 %v623, 64
        %v2348 = vpop.permute.xlu0 %2347
        %2349 = vrot.lane.b32.xlu0 %v629, 64
        %v2350 = vpop.permute.xlu0 %2349
        %2351 = vrot.lane.b32.xlu0 %v772, 64
        %v2352 = vpop.permute.xlu0 %2351
        %2353 = vrot.lane.b32.xlu0 %v778, 64
        %v2354 = vpop.permute.xlu0 %2353
        %2355 = vrot.lane.b32.xlu0 %v784, 64
        %v2356 = vpop.permute.xlu0 %2355
        %2357 = vrot.lane.b32.xlu0 %v790, 64
        %v2358 = vpop.permute.xlu0 %2357
        %v2359 = vsel %vm966, %v2344, 0
        %v2361 = vsel %vm966, %v2346, 0
        %v2363 = vsel %vm966, %v2348, 0
        %v2365 = vsel %vm966, %v2350, 0
        %v2367 = vsel %vm966, %v2352, 0
        %v2369 = vsel %vm966, %v2354, 0
        %v2371 = vsel %vm966, %v2356, 0
        %v2373 = vsel %vm966, %v2358, 0
        %2375 = vmatprep.subr.mxu0 0.0
        %2376 = vmatpush1.xpose.msra.mxu0 %v2367
        %2377 = vmatprep.subr.mxu0 0.0
        %2378 = vmatpush1.xpose.msra.mxu0 %v2369
        %2379 = vmatprep.subr.mxu0 0.0
        %2380 = vmatpush1.xpose.msra.mxu0 %v2371
        %2381 = vmatprep.subr.mxu0 0.0
        %2382 = vmatpush1.xpose.msra.mxu0 %v2373
        %2383 = vmatprep.subr.mxu0 0.0
        %2384 = vmatpush1.xpose.msra.mxu0 0.0
        %2385 = vmatprep.subr.mxu0 0.0
        %2386 = vmatpush1.xpose.msra.mxu0 0.0
        %2387 = vmatprep.subr.mxu0 0.0
        %2388 = vmatpush1.xpose.msra.mxu0 0.0
        %2389 = vmatprep.subr.mxu0 0.0
        %2390 = vmatpush1.xpose.msra.mxu0 0.0
        %2391 = vmatprep.subr.mxu0 0.0
        %2392 = vmatpush1.xpose.msra.mxu0 0.0
        %2393 = vmatprep.subr.mxu0 0.0
        %2394 = vmatpush1.xpose.msra.mxu0 0.0
        %2395 = vmatprep.subr.mxu0 0.0
        %2396 = vmatpush1.xpose.msra.mxu0 0.0
        %2397 = vmatprep.subr.mxu0 0.0
        %2398 = vmatpush1.xpose.msra.mxu0 0.0
        %2399 = vmatprep.subr.mxu0 0.0
        %2400 = vmatpush1.xpose.msra.mxu0 0.0
        %2401 = vmatprep.subr.mxu0 0.0
        %2402 = vmatpush1.xpose.msra.mxu0 0.0
        %2403 = vmatprep.subr.mxu0 0.0
        %2404 = vmatpush1.xpose.msra.mxu0 0.0
        %2405 = vmatprep.subr.mxu0 0.0
        %2406 = vmatpush1.xpose.msra.mxu0 0.0
        %2407 = vmatprep.subr.mxu0 0.0
        %2408 = vmatpush1.xpose.msra.mxu0 0.0
        %2409 = vmatprep.subr.mxu0 0.0
        %2410 = vmatpush1.xpose.msra.mxu0 0.0
        %2411 = vmatprep.subr.mxu0 0.0
        %2412 = vmatpush1.xpose.msra.mxu0 0.0
        %2413 = vmatprep.subr.mxu0 0.0
        %2414 = vmatpush1.xpose.msra.mxu0 0.0
        %2415 = vmatprep.subr.mxu0 0.0
        %2416 = vmatpush1.xpose.msra.mxu0 0.0
        %2417 = vmatprep.subr.mxu0 0.0
        %2418 = vmatpush1.xpose.msra.mxu0 0.0
        %2419 = vmatprep.subr.mxu0 0.0
        %2420 = vmatpush1.xpose.msra.mxu0 0.0
        %2421 = vmatprep.subr.mxu0 0.0
        %2422 = vmatpush1.xpose.msra.mxu0 0.0
        %2423 = vmatprep.subr.mxu0 0.0
        %2424 = vmatpush1.xpose.msra.mxu0 0.0
        %2425 = vmatprep.subr.mxu0 0.0
        %2426 = vmatpush1.xpose.msra.mxu0 0.0
        %2427 = vmatprep.subr.mxu0 0.0
        %2428 = vmatpush1.xpose.msra.mxu0 0.0
        %2429 = vmatprep.subr.mxu0 0.0
        %2430 = vmatpush1.xpose.msra.mxu0 0.0
        %2431 = vmatprep.subr.mxu0 0.0
        %2432 = vmatpush1.xpose.msra.mxu0 0.0
        %2433 = vmatprep.subr.mxu0 0.0
        %2434 = vmatpush1.xpose.msra.mxu0 0.0
        %2435 = vmatprep.subr.mxu0 0.0
        %2436 = vmatpush1.xpose.msra.mxu0 0.0
        %2437 = vmatprep.subr.mxu0 0.0
        %2438 = vmatpush1.xpose.msra.mxu0 0.0
        %2439 = vmatprep.mubr.f32.mxu0 0.0
        %2440 = vmatmul.mubr.f32.gmra.mrb[0].mxu0 %v2359
        %v2441 = vpop.f32.mrb[0].mxu0
        %v2442 = vadd.f32 0.0, %v2441
        %v2443 = vpop.f32.mrb[0].mxu0
        %2444 = vmatprep.mubr.f32.mxu0 0.0
        %2445 = vmatmul.mubr.f32.gmra.mrb[0].mxu0 %v2361
        %v2446 = vpop.f32.mrb[0].mxu0
        %v2447 = vadd.f32 0.0, %v2446
        %v2448 = vpop.f32.mrb[0].mxu0
        %2449 = vmatprep.mubr.f32.mxu0 0.0
        %2450 = vmatmul.mubr.f32.gmra.mrb[0].mxu0 %v2363
        %v2451 = vpop.f32.mrb[0].mxu0
        %v2452 = vadd.f32 0.0, %v2451
        %v2453 = vpop.f32.mrb[0].mxu0
        %2454 = vmatprep.mubr.f32.mxu0 0.0
        %2455 = vmatmul.mubr.f32.gmra.mrb[0].mxu0 %v2365
        %v2456 = vpop.f32.mrb[0].mxu0
        %v2457 = vadd.f32 0.0, %v2456
        %v2458 = vpop.f32.mrb[0].mxu0
        %2459 = vdwg.mxu0
        %v2460 = vsel %vm1407, %v2091, -inf
        %v2461 = vsel %vm1408, %v2096, -inf
        %v2462 = vsel %vm1409, %v2101, -inf
        %v2463 = vsel %vm1410, %v2106, -inf
        %v2464 = vsel %vm1407, %v2208, -inf
        %v2465 = vsel %vm1408, %v2213, -inf
        %v2466 = vsel %vm1409, %v2218, -inf
        %v2467 = vsel %vm1410, %v2223, -inf
        %v2468 = vsel %vm1407, %v2325, -inf
        %v2469 = vsel %vm1408, %v2330, -inf
        %v2470 = vsel %vm1409, %v2335, -inf
        %v2471 = vsel %vm1410, %v2340, -inf
        %v2472 = vsel %vm1407, %v2442, -inf
        %v2473 = vsel %vm1408, %v2447, -inf
        %v2474 = vsel %vm1409, %v2452, -inf
        %v2475 = vsel %vm1410, %v2457, -inf
        %v2476 = vsel %vm1427, %v2460, -inf
        %2477 = vmax.xlane.f32.xlu0 %v2476
        %v2478 = vpop.xlane.xlu0 %2477
        %v2479 = vsel %vm1427, %v2461, -inf
        %2480 = vmax.xlane.f32.xlu0 %v2479
        %v2481 = vpop.xlane.xlu0 %2480
        %v2482 = vsel %vm1427, %v2462, -inf
        %2483 = vmax.xlane.f32.xlu0 %v2482
        %v2484 = vpop.xlane.xlu0 %2483
        %v2485 = vsel %vm1427, %v2463, -inf
        %2486 = vmax.xlane.f32.xlu0 %v2485
        %v2487 = vpop.xlane.xlu0 %2486
        %v2488 = vsel %vm1427, %v2464, -inf
        %2489 = vmax.xlane.f32.xlu0 %v2488
        %v2490 = vpop.xlane.xlu0 %2489
        %v2491 = vsel %vm1427, %v2465, -inf
        %2492 = vmax.xlane.f32.xlu0 %v2491
        %v2493 = vpop.xlane.xlu0 %2492
        %v2494 = vsel %vm1427, %v2466, -inf
        %2495 = vmax.xlane.f32.xlu0 %v2494
        %v2496 = vpop.xlane.xlu0 %2495
        %v2497 = vsel %vm1427, %v2467, -inf
        %2498 = vmax.xlane.f32.xlu0 %v2497
        %v2499 = vpop.xlane.xlu0 %2498
        %v2500 = vsel %vm1427, %v2468, -inf
        %2501 = vmax.xlane.f32.xlu0 %v2500
        %v2502 = vpop.xlane.xlu0 %2501
        %v2503 = vsel %vm1427, %v2469, -inf
        %2504 = vmax.xlane.f32.xlu0 %v2503
        %v2505 = vpop.xlane.xlu0 %2504
        %v2506 = vsel %vm1427, %v2470, -inf
        %2507 = vmax.xlane.f32.xlu0 %v2506
        %v2508 = vpop.xlane.xlu0 %2507
        %v2509 = vsel %vm1427, %v2471, -inf
        %2510 = vmax.xlane.f32.xlu0 %v2509
        %v2511 = vpop.xlane.xlu0 %2510
        %v2512 = vsel %vm1427, %v2472, -inf
        %2513 = vmax.xlane.f32.xlu0 %v2512
        %v2514 = vpop.xlane.xlu0 %2513
        %v2515 = vsel %vm1427, %v2473, -inf
        %2516 = vmax.xlane.f32.xlu0 %v2515
        %v2517 = vpop.xlane.xlu0 %2516
        %v2518 = vsel %vm1427, %v2474, -inf
        %2519 = vmax.xlane.f32.xlu0 %v2518
        %v2520 = vpop.xlane.xlu0 %2519
        %v2521 = vsel %vm1427, %v2475, -inf
        %2522 = vmax.xlane.f32.xlu0 %v2521
        %v2523 = vpop.xlane.xlu0 %2522
        %v2524 = vsub.f32 %v2460, %v2478
        %v2525 = vsub.f32 %v2461, %v2481
        %v2526 = vsub.f32 %v2462, %v2484
        %v2527 = vsub.f32 %v2463, %v2487
        %v2528 = vsub.f32 %v2464, %v2490
        %v2529 = vsub.f32 %v2465, %v2493
        %v2530 = vsub.f32 %v2466, %v2496
        %v2531 = vsub.f32 %v2467, %v2499
        %v2532 = vsub.f32 %v2468, %v2502
        %v2533 = vsub.f32 %v2469, %v2505
        %v2534 = vsub.f32 %v2470, %v2508
        %v2535 = vsub.f32 %v2471, %v2511
        %v2536 = vsub.f32 %v2472, %v2514
        %v2537 = vsub.f32 %v2473, %v2517
        %v2538 = vsub.f32 %v2474, %v2520
        %v2539 = vsub.f32 %v2475, %v2523
        %v2540 = vmul.f32 %v2524, 1.442695
        %v2541 = vpow.pop %v2540
        %v2542 = vmul.f32 %v2525, 1.442695
        %v2543 = vpow.pop %v2542
        %v2544 = vmul.f32 %v2526, 1.442695
        %v2545 = vpow.pop %v2544
        %v2546 = vmul.f32 %v2527, 1.442695
        %v2547 = vpow.pop %v2546
        %v2548 = vmul.f32 %v2528, 1.442695
        %v2549 = vpow.pop %v2548
        %v2550 = vmul.f32 %v2529, 1.442695
        %v2551 = vpow.pop %v2550
        %v2552 = vmul.f32 %v2530, 1.442695
        %v2553 = vpow.pop %v2552
        %v2554 = vmul.f32 %v2531, 1.442695
        %v2555 = vpow.pop %v2554
        %v2556 = vmul.f32 %v2532, 1.442695
        %v2557 = vpow.pop %v2556
        %v2558 = vmul.f32 %v2533, 1.442695
        %v2559 = vpow.pop %v2558
        %v2560 = vmul.f32 %v2534, 1.442695
        %v2561 = vpow.pop %v2560
        %v2562 = vmul.f32 %v2535, 1.442695
        %v2563 = vpow.pop %v2562
        %v2564 = vmul.f32 %v2536, 1.442695
        %v2565 = vpow.pop %v2564
        %v2566 = vmul.f32 %v2537, 1.442695
        %v2567 = vpow.pop %v2566
        %v2568 = vmul.f32 %v2538, 1.442695
        %v2569 = vpow.pop %v2568
        %v2570 = vmul.f32 %v2539, 1.442695
        %v2571 = vpow.pop %v2570
        %v2572 = vsel %vm1427, %v2541, 0.0
        %2573 = vadd.xlane.f32.xlu0 %v2572
        %v2574 = vpop.xlane.xlu0 %2573
        %v2575 = vsel %vm1427, %v2543, 0.0
        %2576 = vadd.xlane.f32.xlu0 %v2575
        %v2577 = vpop.xlane.xlu0 %2576
        %v2578 = vsel %vm1427, %v2545, 0.0
        %2579 = vadd.xlane.f32.xlu0 %v2578
        %v2580 = vpop.xlane.xlu0 %2579
        %v2581 = vsel %vm1427, %v2547, 0.0
        %2582 = vadd.xlane.f32.xlu0 %v2581
        %v2583 = vpop.xlane.xlu0 %2582
        %v2584 = vsel %vm1427, %v2549, 0.0
        %2585 = vadd.xlane.f32.xlu0 %v2584
        %v2586 = vpop.xlane.xlu0 %2585
        %v2587 = vsel %vm1427, %v2551, 0.0
        %2588 = vadd.xlane.f32.xlu0 %v2587
        %v2589 = vpop.xlane.xlu0 %2588
        %v2590 = vsel %vm1427, %v2553, 0.0
        %2591 = vadd.xlane.f32.xlu0 %v2590
        %v2592 = vpop.xlane.xlu0 %2591
        %v2593 = vsel %vm1427, %v2555, 0.0
        %2594 = vadd.xlane.f32.xlu0 %v2593
        %v2595 = vpop.xlane.xlu0 %2594
        %v2596 = vsel %vm1427, %v2557, 0.0
        %2597 = vadd.xlane.f32.xlu0 %v2596
        %v2598 = vpop.xlane.xlu0 %2597
        %v2599 = vsel %vm1427, %v2559, 0.0
        %2600 = vadd.xlane.f32.xlu0 %v2599
        %v2601 = vpop.xlane.xlu0 %2600
        %v2602 = vsel %vm1427, %v2561, 0.0
        %2603 = vadd.xlane.f32.xlu0 %v2602
        %v2604 = vpop.xlane.xlu0 %2603
        %v2605 = vsel %vm1427, %v2563, 0.0
        %2606 = vadd.xlane.f32.xlu0 %v2605
        %v2607 = vpop.xlane.xlu0 %2606
        %v2608 = vsel %vm1427, %v2565, 0.0
        %2609 = vadd.xlane.f32.xlu0 %v2608
        %v2610 = vpop.xlane.xlu0 %2609
        %v2611 = vsel %vm1427, %v2567, 0.0
        %2612 = vadd.xlane.f32.xlu0 %v2611
        %v2613 = vpop.xlane.xlu0 %2612
        %v2614 = vsel %vm1427, %v2569, 0.0
        %2615 = vadd.xlane.f32.xlu0 %v2614
        %v2616 = vpop.xlane.xlu0 %2615
        %v2617 = vsel %vm1427, %v2571, 0.0
        %2618 = vadd.xlane.f32.xlu0 %v2617
        %v2619 = vpop.xlane.xlu0 %2618
        %v2620 = vrcp.pop %v2574
        %v2621 = vrcp.pop %v2577
        %v2622 = vrcp.pop %v2580
        %v2623 = vrcp.pop %v2583
        %v2624 = vrcp.pop %v2586
        %v2625 = vrcp.pop %v2589
        %v2626 = vrcp.pop %v2592
        %v2627 = vrcp.pop %v2595
        %v2628 = vrcp.pop %v2598
        %v2629 = vrcp.pop %v2601
        %v2630 = vrcp.pop %v2604
        %v2631 = vrcp.pop %v2607
        %v2632 = vrcp.pop %v2610
        %v2633 = vrcp.pop %v2613
        %v2634 = vrcp.pop %v2616
        %v2635 = vrcp.pop %v2619
        %v2636 = vmul.f32 %v2541, %v2620
        %v2637 = vmul.f32 %v2543, %v2621
        %v2638 = vmul.f32 %v2545, %v2622
        %v2639 = vmul.f32 %v2547, %v2623
        %v2640 = vmul.f32 %v2549, %v2624
        %v2641 = vmul.f32 %v2551, %v2625
        %v2642 = vmul.f32 %v2553, %v2626
        %v2643 = vmul.f32 %v2555, %v2627
        %v2644 = vmul.f32 %v2557, %v2628
        %v2645 = vmul.f32 %v2559, %v2629
        %v2646 = vmul.f32 %v2561, %v2630
        %v2647 = vmul.f32 %v2563, %v2631
        %v2648 = vmul.f32 %v2565, %v2632
        %v2649 = vmul.f32 %v2567, %v2633
        %v2650 = vmul.f32 %v2569, %v2634
        %v2651 = vmul.f32 %v2571, %v2635
        %2656 = vrot.lane.b32.xlu0 %v861, 64
        %v2657 = vpop.permute.xlu0 %2656
        %2658 = vrot.lane.b32.xlu0 %v867, 64
        %v2659 = vpop.permute.xlu0 %2658
        %2660 = vrot.lane.b32.xlu0 %v873, 64
        %v2661 = vpop.permute.xlu0 %2660
        %2662 = vrot.lane.b32.xlu0 %v879, 64
        %v2663 = vpop.permute.xlu0 %2662
        %v2669 = vsel %vm1427, %v2636, 0
        %v2672 = vsel %vm1427, %v2637, 0
        %v2675 = vsel %vm1427, %v2638, 0
        %v2678 = vsel %vm1427, %v2639, 0
        %2680 = vmatprep.subr.mxu0 0.0
        %2681 = vmatpush1.msra.mxu0 %v2657
        %2682 = vmatprep.subr.mxu0 0.0
        %2683 = vmatpush1.msra.mxu0 %v2659
        %2684 = vmatprep.subr.mxu0 0.0
        %2685 = vmatpush1.msra.mxu0 %v2661
        %2686 = vmatprep.subr.mxu0 0.0
        %2687 = vmatpush1.msra.mxu0 %v2663
        %2688 = vmatprep.subr.mxu0 0.0
        %2689 = vmatpush1.msra.mxu0 0.0
        %2690 = vmatprep.subr.mxu0 0.0
        %2691 = vmatpush1.msra.mxu0 0.0
        %2692 = vmatprep.subr.mxu0 0.0
        %2693 = vmatpush1.msra.mxu0 0.0
        %2694 = vmatprep.subr.mxu0 0.0
        %2695 = vmatpush1.msra.mxu0 0.0
        %2696 = vmatprep.subr.mxu0 0.0
        %2697 = vmatpush1.msra.mxu0 0.0
        %2698 = vmatprep.subr.mxu0 0.0
        %2699 = vmatpush1.msra.mxu0 0.0
        %2700 = vmatprep.subr.mxu0 0.0
        %2701 = vmatpush1.msra.mxu0 0.0
        %2702 = vmatprep.subr.mxu0 0.0
        %2703 = vmatpush1.msra.mxu0 0.0
        %2704 = vmatprep.subr.mxu0 0.0
        %2705 = vmatpush1.msra.mxu0 0.0
        %2706 = vmatprep.subr.mxu0 0.0
        %2707 = vmatpush1.msra.mxu0 0.0
        %2708 = vmatprep.subr.mxu0 0.0
        %2709 = vmatpush1.msra.mxu0 0.0
        %2710 = vmatprep.subr.mxu0 0.0
        %2711 = vmatpush1.msra.mxu0 0.0
        %2712 = vmatprep.subr.mxu0 0.0
        %2713 = vmatpush1.msra.mxu0 0.0
        %2714 = vmatprep.subr.mxu0 0.0
        %2715 = vmatpush1.msra.mxu0 0.0
        %2716 = vmatprep.subr.mxu0 0.0
        %2717 = vmatpush1.msra.mxu0 0.0
        %2718 = vmatprep.subr.mxu0 0.0
        %2719 = vmatpush1.msra.mxu0 0.0
        %2720 = vmatprep.subr.mxu0 0.0
        %2721 = vmatpush1.msra.mxu0 0.0
        %2722 = vmatprep.subr.mxu0 0.0
        %2723 = vmatpush1.msra.mxu0 0.0
        %2724 = vmatprep.subr.mxu0 0.0
        %2725 = vmatpush1.msra.mxu0 0.0
        %2726 = vmatprep.subr.mxu0 0.0
        %2727 = vmatpush1.msra.mxu0 0.0
        %2728 = vmatprep.subr.mxu0 0.0
        %2729 = vmatpush1.msra.mxu0 0.0
        %2730 = vmatprep.subr.mxu0 0.0
        %2731 = vmatpush1.msra.mxu0 0.0
        %2732 = vmatprep.subr.mxu0 0.0
        %2733 = vmatpush1.msra.mxu0 0.0
        %2734 = vmatprep.subr.mxu0 0.0
        %2735 = vmatpush1.msra.mxu0 0.0
        %2736 = vmatprep.subr.mxu0 0.0
        %2737 = vmatpush1.msra.mxu0 0.0
        %2738 = vmatprep.subr.mxu0 0.0
        %2739 = vmatpush1.msra.mxu0 0.0
        %2740 = vmatprep.subr.mxu0 0.0
        %2741 = vmatpush1.msra.mxu0 0.0
        %2742 = vmatprep.subr.mxu0 0.0
        %2743 = vmatpush1.msra.mxu0 0.0
        %2744 = vmatprep.mubr.f32.mxu0 0.0
        %2745 = vmatmul.mubr.f32.gmra.mrb[0].mxu0 %v2669
        %v2746 = vpop.f32.mrb[0].mxu0
        %v2747 = vadd.f32 0.0, %v2746
        %v2748 = vpop.f32.mrb[0].mxu0
        %2749 = vmatprep.mubr.f32.mxu0 0.0
        %2750 = vmatmul.mubr.f32.gmra.mrb[0].mxu0 %v2672
        %v2751 = vpop.f32.mrb[0].mxu0
        %v2752 = vadd.f32 0.0, %v2751
        %v2753 = vpop.f32.mrb[0].mxu0
        %2754 = vmatprep.mubr.f32.mxu0 0.0
        %2755 = vmatmul.mubr.f32.gmra.mrb[0].mxu0 %v2675
        %v2756 = vpop.f32.mrb[0].mxu0
        %v2757 = vadd.f32 0.0, %v2756
        %v2758 = vpop.f32.mrb[0].mxu0
        %2759 = vmatprep.mubr.f32.mxu0 0.0
        %2760 = vmatmul.mubr.f32.gmra.mrb[0].mxu0 %v2678
        %v2761 = vpop.f32.mrb[0].mxu0
        %v2762 = vadd.f32 0.0, %v2761
        %v2763 = vpop.f32.mrb[0].mxu0
        %2764 = vdwg.mxu0
        %2769 = vrot.lane.b32.xlu0 %v885, 64
        %v2770 = vpop.permute.xlu0 %2769
        %2771 = vrot.lane.b32.xlu0 %v891, 64
        %v2772 = vpop.permute.xlu0 %2771
        %2773 = vrot.lane.b32.xlu0 %v897, 64
        %v2774 = vpop.permute.xlu0 %2773
        %2775 = vrot.lane.b32.xlu0 %v903, 64
        %v2776 = vpop.permute.xlu0 %2775
        %v2782 = vsel %vm1427, %v2640, 0
        %v2785 = vsel %vm1427, %v2641, 0
        %v2788 = vsel %vm1427, %v2642, 0
        %v2791 = vsel %vm1427, %v2643, 0
        %2793 = vmatprep.subr.mxu0 0.0
        %2794 = vmatpush1.msra.mxu0 %v2770
        %2795 = vmatprep.subr.mxu0 0.0
        %2796 = vmatpush1.msra.mxu0 %v2772
        %2797 = vmatprep.subr.mxu0 0.0
        %2798 = vmatpush1.msra.mxu0 %v2774
        %2799 = vmatprep.subr.mxu0 0.0
        %2800 = vmatpush1.msra.mxu0 %v2776
        %2801 = vmatprep.subr.mxu0 0.0
        %2802 = vmatpush1.msra.mxu0 0.0
        %2803 = vmatprep.subr.mxu0 0.0
        %2804 = vmatpush1.msra.mxu0 0.0
        %2805 = vmatprep.subr.mxu0 0.0
        %2806 = vmatpush1.msra.mxu0 0.0
        %2807 = vmatprep.subr.mxu0 0.0
        %2808 = vmatpush1.msra.mxu0 0.0
        %2809 = vmatprep.subr.mxu0 0.0
        %2810 = vmatpush1.msra.mxu0 0.0
        %2811 = vmatprep.subr.mxu0 0.0
        %2812 = vmatpush1.msra.mxu0 0.0
        %2813 = vmatprep.subr.mxu0 0.0
        %2814 = vmatpush1.msra.mxu0 0.0
        %2815 = vmatprep.subr.mxu0 0.0
        %2816 = vmatpush1.msra.mxu0 0.0
        %2817 = vmatprep.subr.mxu0 0.0
        %2818 = vmatpush1.msra.mxu0 0.0
        %2819 = vmatprep.subr.mxu0 0.0
        %2820 = vmatpush1.msra.mxu0 0.0
        %2821 = vmatprep.subr.mxu0 0.0
        %2822 = vmatpush1.msra.mxu0 0.0
        %2823 = vmatprep.subr.mxu0 0.0
        %2824 = vmatpush1.msra.mxu0 0.0
        %2825 = vmatprep.subr.mxu0 0.0
        %2826 = vmatpush1.msra.mxu0 0.0
        %2827 = vmatprep.subr.mxu0 0.0
        %2828 = vmatpush1.msra.mxu0 0.0
        %2829 = vmatprep.subr.mxu0 0.0
        %2830 = vmatpush1.msra.mxu0 0.0
        %2831 = vmatprep.subr.mxu0 0.0
        %2832 = vmatpush1.msra.mxu0 0.0
        %2833 = vmatprep.subr.mxu0 0.0
        %2834 = vmatpush1.msra.mxu0 0.0
        %2835 = vmatprep.subr.mxu0 0.0
        %2836 = vmatpush1.msra.mxu0 0.0
        %2837 = vmatprep.subr.mxu0 0.0
        %2838 = vmatpush1.msra.mxu0 0.0
        %2839 = vmatprep.subr.mxu0 0.0
        %2840 = vmatpush1.msra.mxu0 0.0
        %2841 = vmatprep.subr.mxu0 0.0
        %2842 = vmatpush1.msra.mxu0 0.0
        %2843 = vmatprep.subr.mxu0 0.0
        %2844 = vmatpush1.msra.mxu0 0.0
        %2845 = vmatprep.subr.mxu0 0.0
        %2846 = vmatpush1.msra.mxu0 0.0
        %2847 = vmatprep.subr.mxu0 0.0
        %2848 = vmatpush1.msra.mxu0 0.0
        %2849 = vmatprep.subr.mxu0 0.0
        %2850 = vmatpush1.msra.mxu0 0.0
        %2851 = vmatprep.subr.mxu0 0.0
        %2852 = vmatpush1.msra.mxu0 0.0
        %2853 = vmatprep.subr.mxu0 0.0
        %2854 = vmatpush1.msra.mxu0 0.0
        %2855 = vmatprep.subr.mxu0 0.0
        %2856 = vmatpush1.msra.mxu0 0.0
        %2857 = vmatprep.mubr.f32.mxu0 0.0
        %2858 = vmatmul.mubr.f32.gmra.mrb[0].mxu0 %v2782
        %v2859 = vpop.f32.mrb[0].mxu0
        %v2860 = vadd.f32 0.0, %v2859
        %v2861 = vpop.f32.mrb[0].mxu0
        %2862 = vmatprep.mubr.f32.mxu0 0.0
        %2863 = vmatmul.mubr.f32.gmra.mrb[0].mxu0 %v2785
        %v2864 = vpop.f32.mrb[0].mxu0
        %v2865 = vadd.f32 0.0, %v2864
        %v2866 = vpop.f32.mrb[0].mxu0
        %2867 = vmatprep.mubr.f32.mxu0 0.0
        %2868 = vmatmul.mubr.f32.gmra.mrb[0].mxu0 %v2788
        %v2869 = vpop.f32.mrb[0].mxu0
        %v2870 = vadd.f32 0.0, %v2869
        %v2871 = vpop.f32.mrb[0].mxu0
        %2872 = vmatprep.mubr.f32.mxu0 0.0
        %2873 = vmatmul.mubr.f32.gmra.mrb[0].mxu0 %v2791
        %v2874 = vpop.f32.mrb[0].mxu0
        %v2875 = vadd.f32 0.0, %v2874
        %v2876 = vpop.f32.mrb[0].mxu0
        %2877 = vdwg.mxu0
        %2882 = vrot.lane.b32.xlu0 %v909, 64
        %v2883 = vpop.permute.xlu0 %2882
        %2884 = vrot.lane.b32.xlu0 %v915, 64
        %v2885 = vpop.permute.xlu0 %2884
        %2886 = vrot.lane.b32.xlu0 %v921, 64
        %v2887 = vpop.permute.xlu0 %2886
        %2888 = vrot.lane.b32.xlu0 %v927, 64
        %v2889 = vpop.permute.xlu0 %2888
        %v2895 = vsel %vm1427, %v2644, 0
        %v2898 = vsel %vm1427, %v2645, 0
        %v2901 = vsel %vm1427, %v2646, 0
        %v2904 = vsel %vm1427, %v2647, 0
        %2906 = vmatprep.subr.mxu0 0.0
        %2907 = vmatpush1.msra.mxu0 %v2883
        %2908 = vmatprep.subr.mxu0 0.0
        %2909 = vmatpush1.msra.mxu0 %v2885
        %2910 = vmatprep.subr.mxu0 0.0
        %2911 = vmatpush1.msra.mxu0 %v2887
        %2912 = vmatprep.subr.mxu0 0.0
        %2913 = vmatpush1.msra.mxu0 %v2889
        %2914 = vmatprep.subr.mxu0 0.0
        %2915 = vmatpush1.msra.mxu0 0.0
        %2916 = vmatprep.subr.mxu0 0.0
        %2917 = vmatpush1.msra.mxu0 0.0
        %2918 = vmatprep.subr.mxu0 0.0
        %2919 = vmatpush1.msra.mxu0 0.0
        %2920 = vmatprep.subr.mxu0 0.0
        %2921 = vmatpush1.msra.mxu0 0.0
        %2922 = vmatprep.subr.mxu0 0.0
        %2923 = vmatpush1.msra.mxu0 0.0
        %2924 = vmatprep.subr.mxu0 0.0
        %2925 = vmatpush1.msra.mxu0 0.0
        %2926 = vmatprep.subr.mxu0 0.0
        %2927 = vmatpush1.msra.mxu0 0.0
        %2928 = vmatprep.subr.mxu0 0.0
        %2929 = vmatpush1.msra.mxu0 0.0
        %2930 = vmatprep.subr.mxu0 0.0
        %2931 = vmatpush1.msra.mxu0 0.0
        %2932 = vmatprep.subr.mxu0 0.0
        %2933 = vmatpush1.msra.mxu0 0.0
        %2934 = vmatprep.subr.mxu0 0.0
        %2935 = vmatpush1.msra.mxu0 0.0
        %2936 = vmatprep.subr.mxu0 0.0
        %2937 = vmatpush1.msra.mxu0 0.0
        %2938 = vmatprep.subr.mxu0 0.0
        %2939 = vmatpush1.msra.mxu0 0.0
        %2940 = vmatprep.subr.mxu0 0.0
        %2941 = vmatpush1.msra.mxu0 0.0
        %2942 = vmatprep.subr.mxu0 0.0
        %2943 = vmatpush1.msra.mxu0 0.0
        %2944 = vmatprep.subr.mxu0 0.0
        %2945 = vmatpush1.msra.mxu0 0.0
        %2946 = vmatprep.subr.mxu0 0.0
        %2947 = vmatpush1.msra.mxu0 0.0
        %2948 = vmatprep.subr.mxu0 0.0
        %2949 = vmatpush1.msra.mxu0 0.0
        %2950 = vmatprep.subr.mxu0 0.0
        %2951 = vmatpush1.msra.mxu0 0.0
        %2952 = vmatprep.subr.mxu0 0.0
        %2953 = vmatpush1.msra.mxu0 0.0
        %2954 = vmatprep.subr.mxu0 0.0
        %2955 = vmatpush1.msra.mxu0 0.0
        %2956 = vmatprep.subr.mxu0 0.0
        %2957 = vmatpush1.msra.mxu0 0.0
        %2958 = vmatprep.subr.mxu0 0.0
        %2959 = vmatpush1.msra.mxu0 0.0
        %2960 = vmatprep.subr.mxu0 0.0
        %2961 = vmatpush1.msra.mxu0 0.0
        %2962 = vmatprep.subr.mxu0 0.0
        %2963 = vmatpush1.msra.mxu0 0.0
        %2964 = vmatprep.subr.mxu0 0.0
        %2965 = vmatpush1.msra.mxu0 0.0
        %2966 = vmatprep.subr.mxu0 0.0
        %2967 = vmatpush1.msra.mxu0 0.0
        %2968 = vmatprep.subr.mxu0 0.0
        %2969 = vmatpush1.msra.mxu0 0.0
        %2970 = vmatprep.mubr.f32.mxu0 0.0
        %2971 = vmatmul.mubr.f32.gmra.mrb[0].mxu0 %v2895
        %v2972 = vpop.f32.mrb[0].mxu0
        %v2973 = vadd.f32 0.0, %v2972
        %v2974 = vpop.f32.mrb[0].mxu0
        %2975 = vmatprep.mubr.f32.mxu0 0.0
        %2976 = vmatmul.mubr.f32.gmra.mrb[0].mxu0 %v2898
        %v2977 = vpop.f32.mrb[0].mxu0
        %v2978 = vadd.f32 0.0, %v2977
        %v2979 = vpop.f32.mrb[0].mxu0
        %2980 = vmatprep.mubr.f32.mxu0 0.0
        %2981 = vmatmul.mubr.f32.gmra.mrb[0].mxu0 %v2901
        %v2982 = vpop.f32.mrb[0].mxu0
        %v2983 = vadd.f32 0.0, %v2982
        %v2984 = vpop.f32.mrb[0].mxu0
        %2985 = vmatprep.mubr.f32.mxu0 0.0
        %2986 = vmatmul.mubr.f32.gmra.mrb[0].mxu0 %v2904
        %v2987 = vpop.f32.mrb[0].mxu0
        %v2988 = vadd.f32 0.0, %v2987
        %v2989 = vpop.f32.mrb[0].mxu0
        %2990 = vdwg.mxu0
        %2995 = vrot.lane.b32.xlu0 %v933, 64
        %v2996 = vpop.permute.xlu0 %2995
        %2997 = vrot.lane.b32.xlu0 %v939, 64
        %v2998 = vpop.permute.xlu0 %2997
        %2999 = vrot.lane.b32.xlu0 %v945, 64
        %v3000 = vpop.permute.xlu0 %2999
        %3001 = vrot.lane.b32.xlu0 %v951, 64
        %v3002 = vpop.permute.xlu0 %3001
        %v3008 = vsel %vm1427, %v2648, 0
        %v3011 = vsel %vm1427, %v2649, 0
        %v3014 = vsel %vm1427, %v2650, 0
        %v3017 = vsel %vm1427, %v2651, 0
        %3019 = vmatprep.subr.mxu0 0.0
        %3020 = vmatpush1.msra.mxu0 %v2996
        %3021 = vmatprep.subr.mxu0 0.0
        %3022 = vmatpush1.msra.mxu0 %v2998
        %3023 = vmatprep.subr.mxu0 0.0
        %3024 = vmatpush1.msra.mxu0 %v3000
        %3025 = vmatprep.subr.mxu0 0.0
        %3026 = vmatpush1.msra.mxu0 %v3002
        %3027 = vmatprep.subr.mxu0 0.0
        %3028 = vmatpush1.msra.mxu0 0.0
        %3029 = vmatprep.subr.mxu0 0.0
        %3030 = vmatpush1.msra.mxu0 0.0
        %3031 = vmatprep.subr.mxu0 0.0
        %3032 = vmatpush1.msra.mxu0 0.0
        %3033 = vmatprep.subr.mxu0 0.0
        %3034 = vmatpush1.msra.mxu0 0.0
        %3035 = vmatprep.subr.mxu0 0.0
        %3036 = vmatpush1.msra.mxu0 0.0
        %3037 = vmatprep.subr.mxu0 0.0
        %3038 = vmatpush1.msra.mxu0 0.0
        %3039 = vmatprep.subr.mxu0 0.0
        %3040 = vmatpush1.msra.mxu0 0.0
        %3041 = vmatprep.subr.mxu0 0.0
        %3042 = vmatpush1.msra.mxu0 0.0
        %3043 = vmatprep.subr.mxu0 0.0
        %3044 = vmatpush1.msra.mxu0 0.0
        %3045 = vmatprep.subr.mxu0 0.0
        %3046 = vmatpush1.msra.mxu0 0.0
        %3047 = vmatprep.subr.mxu0 0.0
        %3048 = vmatpush1.msra.mxu0 0.0
        %3049 = vmatprep.subr.mxu0 0.0
        %3050 = vmatpush1.msra.mxu0 0.0
        %3051 = vmatprep.subr.mxu0 0.0
        %3052 = vmatpush1.msra.mxu0 0.0
        %3053 = vmatprep.subr.mxu0 0.0
        %3054 = vmatpush1.msra.mxu0 0.0
        %3055 = vmatprep.subr.mxu0 0.0
        %3056 = vmatpush1.msra.mxu0 0.0
        %3057 = vmatprep.subr.mxu0 0.0
        %3058 = vmatpush1.msra.mxu0 0.0
        %3059 = vmatprep.subr.mxu0 0.0
        %3060 = vmatpush1.msra.mxu0 0.0
        %3061 = vmatprep.subr.mxu0 0.0
        %3062 = vmatpush1.msra.mxu0 0.0
        %3063 = vmatprep.subr.mxu0 0.0
        %3064 = vmatpush1.msra.mxu0 0.0
        %3065 = vmatprep.subr.mxu0 0.0
        %3066 = vmatpush1.msra.mxu0 0.0
        %3067 = vmatprep.subr.mxu0 0.0
        %3068 = vmatpush1.msra.mxu0 0.0
        %3069 = vmatprep.subr.mxu0 0.0
        %3070 = vmatpush1.msra.mxu0 0.0
        %3071 = vmatprep.subr.mxu0 0.0
        %3072 = vmatpush1.msra.mxu0 0.0
        %3073 = vmatprep.subr.mxu0 0.0
        %3074 = vmatpush1.msra.mxu0 0.0
        %3075 = vmatprep.subr.mxu0 0.0
        %3076 = vmatpush1.msra.mxu0 0.0
        %3077 = vmatprep.subr.mxu0 0.0
        %3078 = vmatpush1.msra.mxu0 0.0
        %3079 = vmatprep.subr.mxu0 0.0
        %3080 = vmatpush1.msra.mxu0 0.0
        %3081 = vmatprep.subr.mxu0 0.0
        %3082 = vmatpush1.msra.mxu0 0.0
        %3083 = vmatprep.mubr.f32.mxu0 0.0
        %3084 = vmatmul.mubr.f32.gmra.mrb[0].mxu0 %v3008
        %v3085 = vpop.f32.mrb[0].mxu0
        %v3086 = vadd.f32 0.0, %v3085
        %v3087 = vpop.f32.mrb[0].mxu0
        %3088 = vmatprep.mubr.f32.mxu0 0.0
        %3089 = vmatmul.mubr.f32.gmra.mrb[0].mxu0 %v3011
        %v3090 = vpop.f32.mrb[0].mxu0
        %v3091 = vadd.f32 0.0, %v3090
        %v3092 = vpop.f32.mrb[0].mxu0
        %3093 = vmatprep.mubr.f32.mxu0 0.0
        %3094 = vmatmul.mubr.f32.gmra.mrb[0].mxu0 %v3014
        %v3095 = vpop.f32.mrb[0].mxu0
        %v3096 = vadd.f32 0.0, %v3095
        %v3097 = vpop.f32.mrb[0].mxu0
        %3098 = vmatprep.mubr.f32.mxu0 0.0
        %3099 = vmatmul.mubr.f32.gmra.mrb[0].mxu0 %v3017
        %v3100 = vpop.f32.mrb[0].mxu0
        %v3101 = vadd.f32 0.0, %v3100
        %v3102 = vpop.f32.mrb[0].mxu0
        %3103 = vdwg.mxu0
        %v3105 = vsel %vm966, %v541, 0
        %v3108 = vsel %vm966, %v547, 0
        %v3111 = vsel %vm966, %v553, 0
        %v3114 = vsel %vm966, %v559, 0
        %v3117 = vsel %vm966, %v702, 0
        %v3120 = vsel %vm966, %v708, 0
        %v3123 = vsel %vm966, %v714, 0
        %v3126 = vsel %vm966, %v720, 0
        %3128 = vmatprep.subr.mxu0 0.0
        %3129 = vmatpush1.xpose.msra.mxu0 %v3117
        %3130 = vmatprep.subr.mxu0 0.0
        %3131 = vmatpush1.xpose.msra.mxu0 %v3120
        %3132 = vmatprep.subr.mxu0 0.0
        %3133 = vmatpush1.xpose.msra.mxu0 %v3123
        %3134 = vmatprep.subr.mxu0 0.0
        %3135 = vmatpush1.xpose.msra.mxu0 %v3126
        %3136 = vmatprep.subr.mxu0 0.0
        %3137 = vmatpush1.xpose.msra.mxu0 0.0
        %3138 = vmatprep.subr.mxu0 0.0
        %3139 = vmatpush1.xpose.msra.mxu0 0.0
        %3140 = vmatprep.subr.mxu0 0.0
        %3141 = vmatpush1.xpose.msra.mxu0 0.0
        %3142 = vmatprep.subr.mxu0 0.0
        %3143 = vmatpush1.xpose.msra.mxu0 0.0
        %3144 = vmatprep.subr.mxu0 0.0
        %3145 = vmatpush1.xpose.msra.mxu0 0.0
        %3146 = vmatprep.subr.mxu0 0.0
        %3147 = vmatpush1.xpose.msra.mxu0 0.0
        %3148 = vmatprep.subr.mxu0 0.0
        %3149 = vmatpush1.xpose.msra.mxu0 0.0
        %3150 = vmatprep.subr.mxu0 0.0
        %3151 = vmatpush1.xpose.msra.mxu0 0.0
        %3152 = vmatprep.subr.mxu0 0.0
        %3153 = vmatpush1.xpose.msra.mxu0 0.0
        %3154 = vmatprep.subr.mxu0 0.0
        %3155 = vmatpush1.xpose.msra.mxu0 0.0
        %3156 = vmatprep.subr.mxu0 0.0
        %3157 = vmatpush1.xpose.msra.mxu0 0.0
        %3158 = vmatprep.subr.mxu0 0.0
        %3159 = vmatpush1.xpose.msra.mxu0 0.0
        %3160 = vmatprep.subr.mxu0 0.0
        %3161 = vmatpush1.xpose.msra.mxu0 0.0
        %3162 = vmatprep.subr.mxu0 0.0
        %3163 = vmatpush1.xpose.msra.mxu0 0.0
        %3164 = vmatprep.subr.mxu0 0.0
        %3165 = vmatpush1.xpose.msra.mxu0 0.0
        %3166 = vmatprep.subr.mxu0 0.0
        %3167 = vmatpush1.xpose.msra.mxu0 0.0
        %3168 = vmatprep.subr.mxu0 0.0
        %3169 = vmatpush1.xpose.msra.mxu0 0.0
        %3170 = vmatprep.subr.mxu0 0.0
        %3171 = vmatpush1.xpose.msra.mxu0 0.0
        %3172 = vmatprep.subr.mxu0 0.0
        %3173 = vmatpush1.xpose.msra.mxu0 0.0
        %3174 = vmatprep.subr.mxu0 0.0
        %3175 = vmatpush1.xpose.msra.mxu0 0.0
        %3176 = vmatprep.subr.mxu0 0.0
        %3177 = vmatpush1.xpose.msra.mxu0 0.0
        %3178 = vmatprep.subr.mxu0 0.0
        %3179 = vmatpush1.xpose.msra.mxu0 0.0
        %3180 = vmatprep.subr.mxu0 0.0
        %3181 = vmatpush1.xpose.msra.mxu0 0.0
        %3182 = vmatprep.subr.mxu0 0.0
        %3183 = vmatpush1.xpose.msra.mxu0 0.0
        %3184 = vmatprep.subr.mxu0 0.0
        %3185 = vmatpush1.xpose.msra.mxu0 0.0
        %3186 = vmatprep.subr.mxu0 0.0
        %3187 = vmatpush1.xpose.msra.mxu0 0.0
        %3188 = vmatprep.subr.mxu0 0.0
        %3189 = vmatpush1.xpose.msra.mxu0 0.0
        %3190 = vmatprep.subr.mxu0 0.0
        %3191 = vmatpush1.xpose.msra.mxu0 0.0
        %3192 = vmatprep.mubr.f32.mxu0 0.0
        %3193 = vmatmul.mubr.f32.gmra.mrb[0].mxu0 %v3105
        %v3194 = vpop.f32.mrb[0].mxu0
        %v3195 = vadd.f32 0.0, %v3194
        %v3196 = vpop.f32.mrb[0].mxu0
        %3197 = vmatprep.mubr.f32.mxu0 0.0
        %3198 = vmatmul.mubr.f32.gmra.mrb[0].mxu0 %v3108
        %v3199 = vpop.f32.mrb[0].mxu0
        %v3200 = vadd.f32 0.0, %v3199
        %v3201 = vpop.f32.mrb[0].mxu0
        %3202 = vmatprep.mubr.f32.mxu0 0.0
        %3203 = vmatmul.mubr.f32.gmra.mrb[0].mxu0 %v3111
        %v3204 = vpop.f32.mrb[0].mxu0
        %v3205 = vadd.f32 0.0, %v3204
        %v3206 = vpop.f32.mrb[0].mxu0
        %3207 = vmatprep.mubr.f32.mxu0 0.0
        %3208 = vmatmul.mubr.f32.gmra.mrb[0].mxu0 %v3114
        %v3209 = vpop.f32.mrb[0].mxu0
        %v3210 = vadd.f32 0.0, %v3209
        %v3211 = vpop.f32.mrb[0].mxu0
        %3212 = vdwg.mxu0
        %v3214 = vsel %vm966, %v565, 0
        %v3217 = vsel %vm966, %v571, 0
        %v3220 = vsel %vm966, %v577, 0
        %v3223 = vsel %vm966, %v583, 0
        %v3226 = vsel %vm966, %v726, 0
        %v3229 = vsel %vm966, %v732, 0
        %v3232 = vsel %vm966, %v738, 0
        %v3235 = vsel %vm966, %v744, 0
        %3237 = vmatprep.subr.mxu0 0.0
        %3238 = vmatpush1.xpose.msra.mxu0 %v3226
        %3239 = vmatprep.subr.mxu0 0.0
        %3240 = vmatpush1.xpose.msra.mxu0 %v3229
        %3241 = vmatprep.subr.mxu0 0.0
        %3242 = vmatpush1.xpose.msra.mxu0 %v3232
        %3243 = vmatprep.subr.mxu0 0.0
        %3244 = vmatpush1.xpose.msra.mxu0 %v3235
        %3245 = vmatprep.subr.mxu0 0.0
        %3246 = vmatpush1.xpose.msra.mxu0 0.0
        %3247 = vmatprep.subr.mxu0 0.0
        %3248 = vmatpush1.xpose.msra.mxu0 0.0
        %3249 = vmatprep.subr.mxu0 0.0
        %3250 = vmatpush1.xpose.msra.mxu0 0.0
        %3251 = vmatprep.subr.mxu0 0.0
        %3252 = vmatpush1.xpose.msra.mxu0 0.0
        %3253 = vmatprep.subr.mxu0 0.0
        %3254 = vmatpush1.xpose.msra.mxu0 0.0
        %3255 = vmatprep.subr.mxu0 0.0
        %3256 = vmatpush1.xpose.msra.mxu0 0.0
        %3257 = vmatprep.subr.mxu0 0.0
        %3258 = vmatpush1.xpose.msra.mxu0 0.0
        %3259 = vmatprep.subr.mxu0 0.0
        %3260 = vmatpush1.xpose.msra.mxu0 0.0
        %3261 = vmatprep.subr.mxu0 0.0
        %3262 = vmatpush1.xpose.msra.mxu0 0.0
        %3263 = vmatprep.subr.mxu0 0.0
        %3264 = vmatpush1.xpose.msra.mxu0 0.0
        %3265 = vmatprep.subr.mxu0 0.0
        %3266 = vmatpush1.xpose.msra.mxu0 0.0
        %3267 = vmatprep.subr.mxu0 0.0
        %3268 = vmatpush1.xpose.msra.mxu0 0.0
        %3269 = vmatprep.subr.mxu0 0.0
        %3270 = vmatpush1.xpose.msra.mxu0 0.0
        %3271 = vmatprep.subr.mxu0 0.0
        %3272 = vmatpush1.xpose.msra.mxu0 0.0
        %3273 = vmatprep.subr.mxu0 0.0
        %3274 = vmatpush1.xpose.msra.mxu0 0.0
        %3275 = vmatprep.subr.mxu0 0.0
        %3276 = vmatpush1.xpose.msra.mxu0 0.0
        %3277 = vmatprep.subr.mxu0 0.0
        %3278 = vmatpush1.xpose.msra.mxu0 0.0
        %3279 = vmatprep.subr.mxu0 0.0
        %3280 = vmatpush1.xpose.msra.mxu0 0.0
        %3281 = vmatprep.subr.mxu0 0.0
        %3282 = vmatpush1.xpose.msra.mxu0 0.0
        %3283 = vmatprep.subr.mxu0 0.0
        %3284 = vmatpush1.xpose.msra.mxu0 0.0
        %3285 = vmatprep.subr.mxu0 0.0
        %3286 = vmatpush1.xpose.msra.mxu0 0.0
        %3287 = vmatprep.subr.mxu0 0.0
        %3288 = vmatpush1.xpose.msra.mxu0 0.0
        %3289 = vmatprep.subr.mxu0 0.0
        %3290 = vmatpush1.xpose.msra.mxu0 0.0
        %3291 = vmatprep.subr.mxu0 0.0
        %3292 = vmatpush1.xpose.msra.mxu0 0.0
        %3293 = vmatprep.subr.mxu0 0.0
        %3294 = vmatpush1.xpose.msra.mxu0 0.0
        %3295 = vmatprep.subr.mxu0 0.0
        %3296 = vmatpush1.xpose.msra.mxu0 0.0
        %3297 = vmatprep.subr.mxu0 0.0
        %3298 = vmatpush1.xpose.msra.mxu0 0.0
        %3299 = vmatprep.subr.mxu0 0.0
        %3300 = vmatpush1.xpose.msra.mxu0 0.0
        %3301 = vmatprep.mubr.f32.mxu0 0.0
        %3302 = vmatmul.mubr.f32.gmra.mrb[0].mxu0 %v3214
        %v3303 = vpop.f32.mrb[0].mxu0
        %v3304 = vadd.f32 0.0, %v3303
        %v3305 = vpop.f32.mrb[0].mxu0
        %3306 = vmatprep.mubr.f32.mxu0 0.0
        %3307 = vmatmul.mubr.f32.gmra.mrb[0].mxu0 %v3217
        %v3308 = vpop.f32.mrb[0].mxu0
        %v3309 = vadd.f32 0.0, %v3308
        %v3310 = vpop.f32.mrb[0].mxu0
        %3311 = vmatprep.mubr.f32.mxu0 0.0
        %3312 = vmatmul.mubr.f32.gmra.mrb[0].mxu0 %v3220
        %v3313 = vpop.f32.mrb[0].mxu0
        %v3314 = vadd.f32 0.0, %v3313
        %v3315 = vpop.f32.mrb[0].mxu0
        %3316 = vmatprep.mubr.f32.mxu0 0.0
        %3317 = vmatmul.mubr.f32.gmra.mrb[0].mxu0 %v3223
        %v3318 = vpop.f32.mrb[0].mxu0
        %v3319 = vadd.f32 0.0, %v3318
        %v3320 = vpop.f32.mrb[0].mxu0
        %3321 = vdwg.mxu0
        %v3323 = vsel %vm966, %v589, 0
        %v3326 = vsel %vm966, %v595, 0
        %v3329 = vsel %vm966, %v601, 0
        %v3332 = vsel %vm966, %v607, 0
        %v3335 = vsel %vm966, %v750, 0
        %v3338 = vsel %vm966, %v756, 0
        %v3341 = vsel %vm966, %v762, 0
        %v3344 = vsel %vm966, %v768, 0
        %3346 = vmatprep.subr.mxu0 0.0
        %3347 = vmatpush1.xpose.msra.mxu0 %v3335
        %3348 = vmatprep.subr.mxu0 0.0
        %3349 = vmatpush1.xpose.msra.mxu0 %v3338
        %3350 = vmatprep.subr.mxu0 0.0
        %3351 = vmatpush1.xpose.msra.mxu0 %v3341
        %3352 = vmatprep.subr.mxu0 0.0
        %3353 = vmatpush1.xpose.msra.mxu0 %v3344
        %3354 = vmatprep.subr.mxu0 0.0
        %3355 = vmatpush1.xpose.msra.mxu0 0.0
        %3356 = vmatprep.subr.mxu0 0.0
        %3357 = vmatpush1.xpose.msra.mxu0 0.0
        %3358 = vmatprep.subr.mxu0 0.0
        %3359 = vmatpush1.xpose.msra.mxu0 0.0
        %3360 = vmatprep.subr.mxu0 0.0
        %3361 = vmatpush1.xpose.msra.mxu0 0.0
        %3362 = vmatprep.subr.mxu0 0.0
        %3363 = vmatpush1.xpose.msra.mxu0 0.0
        %3364 = vmatprep.subr.mxu0 0.0
        %3365 = vmatpush1.xpose.msra.mxu0 0.0
        %3366 = vmatprep.subr.mxu0 0.0
        %3367 = vmatpush1.xpose.msra.mxu0 0.0
        %3368 = vmatprep.subr.mxu0 0.0
        %3369 = vmatpush1.xpose.msra.mxu0 0.0
        %3370 = vmatprep.subr.mxu0 0.0
        %3371 = vmatpush1.xpose.msra.mxu0 0.0
        %3372 = vmatprep.subr.mxu0 0.0
        %3373 = vmatpush1.xpose.msra.mxu0 0.0
        %3374 = vmatprep.subr.mxu0 0.0
        %3375 = vmatpush1.xpose.msra.mxu0 0.0
        %3376 = vmatprep.subr.mxu0 0.0
        %3377 = vmatpush1.xpose.msra.mxu0 0.0
        %3378 = vmatprep.subr.mxu0 0.0
        %3379 = vmatpush1.xpose.msra.mxu0 0.0
        %3380 = vmatprep.subr.mxu0 0.0
        %3381 = vmatpush1.xpose.msra.mxu0 0.0
        %3382 = vmatprep.subr.mxu0 0.0
        %3383 = vmatpush1.xpose.msra.mxu0 0.0
        %3384 = vmatprep.subr.mxu0 0.0
        %3385 = vmatpush1.xpose.msra.mxu0 0.0
        %3386 = vmatprep.subr.mxu0 0.0
        %3387 = vmatpush1.xpose.msra.mxu0 0.0
        %3388 = vmatprep.subr.mxu0 0.0
        %3389 = vmatpush1.xpose.msra.mxu0 0.0
        %3390 = vmatprep.subr.mxu0 0.0
        %3391 = vmatpush1.xpose.msra.mxu0 0.0
        %3392 = vmatprep.subr.mxu0 0.0
        %3393 = vmatpush1.xpose.msra.mxu0 0.0
        %3394 = vmatprep.subr.mxu0 0.0
        %3395 = vmatpush1.xpose.msra.mxu0 0.0
        %3396 = vmatprep.subr.mxu0 0.0
        %3397 = vmatpush1.xpose.msra.mxu0 0.0
        %3398 = vmatprep.subr.mxu0 0.0
        %3399 = vmatpush1.xpose.msra.mxu0 0.0
        %3400 = vmatprep.subr.mxu0 0.0
        %3401 = vmatpush1.xpose.msra.mxu0 0.0
        %3402 = vmatprep.subr.mxu0 0.0
        %3403 = vmatpush1.xpose.msra.mxu0 0.0
        %3404 = vmatprep.subr.mxu0 0.0
        %3405 = vmatpush1.xpose.msra.mxu0 0.0
        %3406 = vmatprep.subr.mxu0 0.0
        %3407 = vmatpush1.xpose.msra.mxu0 0.0
        %3408 = vmatprep.subr.mxu0 0.0
        %3409 = vmatpush1.xpose.msra.mxu0 0.0
        %3410 = vmatprep.mubr.f32.mxu0 0.0
        %3411 = vmatmul.mubr.f32.gmra.mrb[0].mxu0 %v3323
        %v3412 = vpop.f32.mrb[0].mxu0
        %v3413 = vadd.f32 0.0, %v3412
        %v3414 = vpop.f32.mrb[0].mxu0
        %3415 = vmatprep.mubr.f32.mxu0 0.0
        %3416 = vmatmul.mubr.f32.gmra.mrb[0].mxu0 %v3326
        %v3417 = vpop.f32.mrb[0].mxu0
        %v3418 = vadd.f32 0.0, %v3417
        %v3419 = vpop.f32.mrb[0].mxu0
        %3420 = vmatprep.mubr.f32.mxu0 0.0
        %3421 = vmatmul.mubr.f32.gmra.mrb[0].mxu0 %v3329
        %v3422 = vpop.f32.mrb[0].mxu0
        %v3423 = vadd.f32 0.0, %v3422
        %v3424 = vpop.f32.mrb[0].mxu0
        %3425 = vmatprep.mubr.f32.mxu0 0.0
        %3426 = vmatmul.mubr.f32.gmra.mrb[0].mxu0 %v3332
        %v3427 = vpop.f32.mrb[0].mxu0
        %v3428 = vadd.f32 0.0, %v3427
        %v3429 = vpop.f32.mrb[0].mxu0
        %3430 = vdwg.mxu0
        %v3432 = vsel %vm966, %v613, 0
        %v3435 = vsel %vm966, %v619, 0
        %v3438 = vsel %vm966, %v625, 0
        %v3441 = vsel %vm966, %v631, 0
        %v3444 = vsel %vm966, %v774, 0
        %v3447 = vsel %vm966, %v780, 0
        %v3450 = vsel %vm966, %v786, 0
        %v3453 = vsel %vm966, %v792, 0
        %3455 = vmatprep.subr.mxu0 0.0
        %3456 = vmatpush1.xpose.msra.mxu0 %v3444
        %3457 = vmatprep.subr.mxu0 0.0
        %3458 = vmatpush1.xpose.msra.mxu0 %v3447
        %3459 = vmatprep.subr.mxu0 0.0
        %3460 = vmatpush1.xpose.msra.mxu0 %v3450
        %3461 = vmatprep.subr.mxu0 0.0
        %3462 = vmatpush1.xpose.msra.mxu0 %v3453
        %3463 = vmatprep.subr.mxu0 0.0
        %3464 = vmatpush1.xpose.msra.mxu0 0.0
        %3465 = vmatprep.subr.mxu0 0.0
        %3466 = vmatpush1.xpose.msra.mxu0 0.0
        %3467 = vmatprep.subr.mxu0 0.0
        %3468 = vmatpush1.xpose.msra.mxu0 0.0
        %3469 = vmatprep.subr.mxu0 0.0
        %3470 = vmatpush1.xpose.msra.mxu0 0.0
        %3471 = vmatprep.subr.mxu0 0.0
        %3472 = vmatpush1.xpose.msra.mxu0 0.0
        %3473 = vmatprep.subr.mxu0 0.0
        %3474 = vmatpush1.xpose.msra.mxu0 0.0
        %3475 = vmatprep.subr.mxu0 0.0
        %3476 = vmatpush1.xpose.msra.mxu0 0.0
        %3477 = vmatprep.subr.mxu0 0.0
        %3478 = vmatpush1.xpose.msra.mxu0 0.0
        %3479 = vmatprep.subr.mxu0 0.0
        %3480 = vmatpush1.xpose.msra.mxu0 0.0
        %3481 = vmatprep.subr.mxu0 0.0
        %3482 = vmatpush1.xpose.msra.mxu0 0.0
        %3483 = vmatprep.subr.mxu0 0.0
        %3484 = vmatpush1.xpose.msra.mxu0 0.0
        %3485 = vmatprep.subr.mxu0 0.0
        %3486 = vmatpush1.xpose.msra.mxu0 0.0
        %3487 = vmatprep.subr.mxu0 0.0
        %3488 = vmatpush1.xpose.msra.mxu0 0.0
        %3489 = vmatprep.subr.mxu0 0.0
        %3490 = vmatpush1.xpose.msra.mxu0 0.0
        %3491 = vmatprep.subr.mxu0 0.0
        %3492 = vmatpush1.xpose.msra.mxu0 0.0
        %3493 = vmatprep.subr.mxu0 0.0
        %3494 = vmatpush1.xpose.msra.mxu0 0.0
        %3495 = vmatprep.subr.mxu0 0.0
        %3496 = vmatpush1.xpose.msra.mxu0 0.0
        %3497 = vmatprep.subr.mxu0 0.0
        %3498 = vmatpush1.xpose.msra.mxu0 0.0
        %3499 = vmatprep.subr.mxu0 0.0
        %3500 = vmatpush1.xpose.msra.mxu0 0.0
        %3501 = vmatprep.subr.mxu0 0.0
        %3502 = vmatpush1.xpose.msra.mxu0 0.0
        %3503 = vmatprep.subr.mxu0 0.0
        %3504 = vmatpush1.xpose.msra.mxu0 0.0
        %3505 = vmatprep.subr.mxu0 0.0
        %3506 = vmatpush1.xpose.msra.mxu0 0.0
        %3507 = vmatprep.subr.mxu0 0.0
        %3508 = vmatpush1.xpose.msra.mxu0 0.0
        %3509 = vmatprep.subr.mxu0 0.0
        %3510 = vmatpush1.xpose.msra.mxu0 0.0
        %3511 = vmatprep.subr.mxu0 0.0
        %3512 = vmatpush1.xpose.msra.mxu0 0.0
        %3513 = vmatprep.subr.mxu0 0.0
        %3514 = vmatpush1.xpose.msra.mxu0 0.0
        %3515 = vmatprep.subr.mxu0 0.0
        %3516 = vmatpush1.xpose.msra.mxu0 0.0
        %3517 = vmatprep.subr.mxu0 0.0
        %3518 = vmatpush1.xpose.msra.mxu0 0.0
        %3519 = vmatprep.mubr.f32.mxu0 0.0
        %3520 = vmatmul.mubr.f32.gmra.mrb[0].mxu0 %v3432
        %v3521 = vpop.f32.mrb[0].mxu0
        %v3522 = vadd.f32 0.0, %v3521
        %v3523 = vpop.f32.mrb[0].mxu0
        %3524 = vmatprep.mubr.f32.mxu0 0.0
        %3525 = vmatmul.mubr.f32.gmra.mrb[0].mxu0 %v3435
        %v3526 = vpop.f32.mrb[0].mxu0
        %v3527 = vadd.f32 0.0, %v3526
        %v3528 = vpop.f32.mrb[0].mxu0
        %3529 = vmatprep.mubr.f32.mxu0 0.0
        %3530 = vmatmul.mubr.f32.gmra.mrb[0].mxu0 %v3438
        %v3531 = vpop.f32.mrb[0].mxu0
        %v3532 = vadd.f32 0.0, %v3531
        %v3533 = vpop.f32.mrb[0].mxu0
        %3534 = vmatprep.mubr.f32.mxu0 0.0
        %3535 = vmatmul.mubr.f32.gmra.mrb[0].mxu0 %v3441
        %v3536 = vpop.f32.mrb[0].mxu0
        %v3537 = vadd.f32 0.0, %v3536
        %v3538 = vpop.f32.mrb[0].mxu0
        %3539 = vdwg.mxu0
        %v3540 = vsel %vm1407, %v3195, -inf
        %v3541 = vsel %vm1408, %v3200, -inf
        %v3542 = vsel %vm1409, %v3205, -inf
        %v3543 = vsel %vm1410, %v3210, -inf
        %v3544 = vsel %vm1407, %v3304, -inf
        %v3545 = vsel %vm1408, %v3309, -inf
        %v3546 = vsel %vm1409, %v3314, -inf
        %v3547 = vsel %vm1410, %v3319, -inf
        %v3548 = vsel %vm1407, %v3413, -inf
        %v3549 = vsel %vm1408, %v3418, -inf
        %v3550 = vsel %vm1409, %v3423, -inf
        %v3551 = vsel %vm1410, %v3428, -inf
        %v3552 = vsel %vm1407, %v3522, -inf
        %v3553 = vsel %vm1408, %v3527, -inf
        %v3554 = vsel %vm1409, %v3532, -inf
        %v3555 = vsel %vm1410, %v3537, -inf
        %v3556 = vsel %vm1427, %v3540, -inf
        %3557 = vmax.xlane.f32.xlu0 %v3556
        %v3558 = vpop.xlane.xlu0 %3557
        %v3559 = vsel %vm1427, %v3541, -inf
        %3560 = vmax.xlane.f32.xlu0 %v3559
        %v3561 = vpop.xlane.xlu0 %3560
        %v3562 = vsel %vm1427, %v3542, -inf
        %3563 = vmax.xlane.f32.xlu0 %v3562
        %v3564 = vpop.xlane.xlu0 %3563
        %v3565 = vsel %vm1427, %v3543, -inf
        %3566 = vmax.xlane.f32.xlu0 %v3565
        %v3567 = vpop.xlane.xlu0 %3566
        %v3568 = vsel %vm1427, %v3544, -inf
        %3569 = vmax.xlane.f32.xlu0 %v3568
        %v3570 = vpop.xlane.xlu0 %3569
        %v3571 = vsel %vm1427, %v3545, -inf
        %3572 = vmax.xlane.f32.xlu0 %v3571
        %v3573 = vpop.xlane.xlu0 %3572
        %v3574 = vsel %vm1427, %v3546, -inf
        %3575 = vmax.xlane.f32.xlu0 %v3574
        %v3576 = vpop.xlane.xlu0 %3575
        %v3577 = vsel %vm1427, %v3547, -inf
        %3578 = vmax.xlane.f32.xlu0 %v3577
        %v3579 = vpop.xlane.xlu0 %3578
        %v3580 = vsel %vm1427, %v3548, -inf
        %3581 = vmax.xlane.f32.xlu0 %v3580
        %v3582 = vpop.xlane.xlu0 %3581
        %v3583 = vsel %vm1427, %v3549, -inf
        %3584 = vmax.xlane.f32.xlu0 %v3583
        %v3585 = vpop.xlane.xlu0 %3584
        %v3586 = vsel %vm1427, %v3550, -inf
        %3587 = vmax.xlane.f32.xlu0 %v3586
        %v3588 = vpop.xlane.xlu0 %3587
        %v3589 = vsel %vm1427, %v3551, -inf
        %3590 = vmax.xlane.f32.xlu0 %v3589
        %v3591 = vpop.xlane.xlu0 %3590
        %v3592 = vsel %vm1427, %v3552, -inf
        %3593 = vmax.xlane.f32.xlu0 %v3592
        %v3594 = vpop.xlane.xlu0 %3593
        %v3595 = vsel %vm1427, %v3553, -inf
        %3596 = vmax.xlane.f32.xlu0 %v3595
        %v3597 = vpop.xlane.xlu0 %3596
        %v3598 = vsel %vm1427, %v3554, -inf
        %3599 = vmax.xlane.f32.xlu0 %v3598
        %v3600 = vpop.xlane.xlu0 %3599
        %v3601 = vsel %vm1427, %v3555, -inf
        %3602 = vmax.xlane.f32.xlu0 %v3601
        %v3603 = vpop.xlane.xlu0 %3602
        %v3604 = vsub.f32 %v3540, %v3558
        %v3605 = vsub.f32 %v3541, %v3561
        %v3606 = vsub.f32 %v3542, %v3564
        %v3607 = vsub.f32 %v3543, %v3567
        %v3608 = vsub.f32 %v3544, %v3570
        %v3609 = vsub.f32 %v3545, %v3573
        %v3610 = vsub.f32 %v3546, %v3576
        %v3611 = vsub.f32 %v3547, %v3579
        %v3612 = vsub.f32 %v3548, %v3582
        %v3613 = vsub.f32 %v3549, %v3585
        %v3614 = vsub.f32 %v3550, %v3588
        %v3615 = vsub.f32 %v3551, %v3591
        %v3616 = vsub.f32 %v3552, %v3594
        %v3617 = vsub.f32 %v3553, %v3597
        %v3618 = vsub.f32 %v3554, %v3600
        %v3619 = vsub.f32 %v3555, %v3603
        %v3620 = vmul.f32 %v3604, 1.442695
        %v3621 = vpow.pop %v3620
        %v3622 = vmul.f32 %v3605, 1.442695
        %v3623 = vpow.pop %v3622
        %v3624 = vmul.f32 %v3606, 1.442695
        %v3625 = vpow.pop %v3624
        %v3626 = vmul.f32 %v3607, 1.442695
        %v3627 = vpow.pop %v3626
        %v3628 = vmul.f32 %v3608, 1.442695
        %v3629 = vpow.pop %v3628
        %v3630 = vmul.f32 %v3609, 1.442695
        %v3631 = vpow.pop %v3630
        %v3632 = vmul.f32 %v3610, 1.442695
        %v3633 = vpow.pop %v3632
        %v3634 = vmul.f32 %v3611, 1.442695
        %v3635 = vpow.pop %v3634
        %v3636 = vmul.f32 %v3612, 1.442695
        %v3637 = vpow.pop %v3636
        %v3638 = vmul.f32 %v3613, 1.442695
        %v3639 = vpow.pop %v3638
        %v3640 = vmul.f32 %v3614, 1.442695
        %v3641 = vpow.pop %v3640
        %v3642 = vmul.f32 %v3615, 1.442695
        %v3643 = vpow.pop %v3642
        %v3644 = vmul.f32 %v3616, 1.442695
        %v3645 = vpow.pop %v3644
        %v3646 = vmul.f32 %v3617, 1.442695
        %v3647 = vpow.pop %v3646
        %v3648 = vmul.f32 %v3618, 1.442695
        %v3649 = vpow.pop %v3648
        %v3650 = vmul.f32 %v3619, 1.442695
        %v3651 = vpow.pop %v3650
        %v3652 = vsel %vm1427, %v3621, 0.0
        %3653 = vadd.xlane.f32.xlu0 %v3652
        %v3654 = vpop.xlane.xlu0 %3653
        %v3655 = vsel %vm1427, %v3623, 0.0
        %3656 = vadd.xlane.f32.xlu0 %v3655
        %v3657 = vpop.xlane.xlu0 %3656
        %v3658 = vsel %vm1427, %v3625, 0.0
        %3659 = vadd.xlane.f32.xlu0 %v3658
        %v3660 = vpop.xlane.xlu0 %3659
        %v3661 = vsel %vm1427, %v3627, 0.0
        %3662 = vadd.xlane.f32.xlu0 %v3661
        %v3663 = vpop.xlane.xlu0 %3662
        %v3664 = vsel %vm1427, %v3629, 0.0
        %3665 = vadd.xlane.f32.xlu0 %v3664
        %v3666 = vpop.xlane.xlu0 %3665
        %v3667 = vsel %vm1427, %v3631, 0.0
        %3668 = vadd.xlane.f32.xlu0 %v3667
        %v3669 = vpop.xlane.xlu0 %3668
        %v3670 = vsel %vm1427, %v3633, 0.0
        %3671 = vadd.xlane.f32.xlu0 %v3670
        %v3672 = vpop.xlane.xlu0 %3671
        %v3673 = vsel %vm1427, %v3635, 0.0
        %3674 = vadd.xlane.f32.xlu0 %v3673
        %v3675 = vpop.xlane.xlu0 %3674
        %v3676 = vsel %vm1427, %v3637, 0.0
        %3677 = vadd.xlane.f32.xlu0 %v3676
        %v3678 = vpop.xlane.xlu0 %3677
        %v3679 = vsel %vm1427, %v3639, 0.0
        %3680 = vadd.xlane.f32.xlu0 %v3679
        %v3681 = vpop.xlane.xlu0 %3680
        %v3682 = vsel %vm1427, %v3641, 0.0
        %3683 = vadd.xlane.f32.xlu0 %v3682
        %v3684 = vpop.xlane.xlu0 %3683
        %v3685 = vsel %vm1427, %v3643, 0.0
        %3686 = vadd.xlane.f32.xlu0 %v3685
        %v3687 = vpop.xlane.xlu0 %3686
        %v3688 = vsel %vm1427, %v3645, 0.0
        %3689 = vadd.xlane.f32.xlu0 %v3688
        %v3690 = vpop.xlane.xlu0 %3689
        %v3691 = vsel %vm1427, %v3647, 0.0
        %3692 = vadd.xlane.f32.xlu0 %v3691
        %v3693 = vpop.xlane.xlu0 %3692
        %v3694 = vsel %vm1427, %v3649, 0.0
        %3695 = vadd.xlane.f32.xlu0 %v3694
        %v3696 = vpop.xlane.xlu0 %3695
        %v3697 = vsel %vm1427, %v3651, 0.0
        %3698 = vadd.xlane.f32.xlu0 %v3697
        %v3699 = vpop.xlane.xlu0 %3698
        %v3700 = vrcp.pop %v3654
        %v3701 = vrcp.pop %v3657
        %v3702 = vrcp.pop %v3660
        %v3703 = vrcp.pop %v3663
        %v3704 = vrcp.pop %v3666
        %v3705 = vrcp.pop %v3669
        %v3706 = vrcp.pop %v3672
        %v3707 = vrcp.pop %v3675
        %v3708 = vrcp.pop %v3678
        %v3709 = vrcp.pop %v3681
        %v3710 = vrcp.pop %v3684
        %v3711 = vrcp.pop %v3687
        %v3712 = vrcp.pop %v3690
        %v3713 = vrcp.pop %v3693
        %v3714 = vrcp.pop %v3696
        %v3715 = vrcp.pop %v3699
        %v3716 = vmul.f32 %v3621, %v3700
        %v3717 = vmul.f32 %v3623, %v3701
        %v3718 = vmul.f32 %v3625, %v3702
        %v3719 = vmul.f32 %v3627, %v3703
        %v3720 = vmul.f32 %v3629, %v3704
        %v3721 = vmul.f32 %v3631, %v3705
        %v3722 = vmul.f32 %v3633, %v3706
        %v3723 = vmul.f32 %v3635, %v3707
        %v3724 = vmul.f32 %v3637, %v3708
        %v3725 = vmul.f32 %v3639, %v3709
        %v3726 = vmul.f32 %v3641, %v3710
        %v3727 = vmul.f32 %v3643, %v3711
        %v3728 = vmul.f32 %v3645, %v3712
        %v3729 = vmul.f32 %v3647, %v3713
        %v3730 = vmul.f32 %v3649, %v3714
        %v3731 = vmul.f32 %v3651, %v3715
        %v3733 = vsel %vm1427, %v3716, 0
        %v3736 = vsel %vm1427, %v3717, 0
        %v3739 = vsel %vm1427, %v3718, 0
        %v3742 = vsel %vm1427, %v3719, 0
        %3744 = vmatprep.subr.mxu0 0.0
        %3745 = vmatpush1.msra.mxu0 %v863
        %3746 = vmatprep.subr.mxu0 0.0
        %3747 = vmatpush1.msra.mxu0 %v869
        %3748 = vmatprep.subr.mxu0 0.0
        %3749 = vmatpush1.msra.mxu0 %v875
        %3750 = vmatprep.subr.mxu0 0.0
        %3751 = vmatpush1.msra.mxu0 %v881
        %3752 = vmatprep.subr.mxu0 0.0
        %3753 = vmatpush1.msra.mxu0 0.0
        %3754 = vmatprep.subr.mxu0 0.0
        %3755 = vmatpush1.msra.mxu0 0.0
        %3756 = vmatprep.subr.mxu0 0.0
        %3757 = vmatpush1.msra.mxu0 0.0
        %3758 = vmatprep.subr.mxu0 0.0
        %3759 = vmatpush1.msra.mxu0 0.0
        %3760 = vmatprep.subr.mxu0 0.0
        %3761 = vmatpush1.msra.mxu0 0.0
        %3762 = vmatprep.subr.mxu0 0.0
        %3763 = vmatpush1.msra.mxu0 0.0
        %3764 = vmatprep.subr.mxu0 0.0
        %3765 = vmatpush1.msra.mxu0 0.0
        %3766 = vmatprep.subr.mxu0 0.0
        %3767 = vmatpush1.msra.mxu0 0.0
        %3768 = vmatprep.subr.mxu0 0.0
        %3769 = vmatpush1.msra.mxu0 0.0
        %3770 = vmatprep.subr.mxu0 0.0
        %3771 = vmatpush1.msra.mxu0 0.0
        %3772 = vmatprep.subr.mxu0 0.0
        %3773 = vmatpush1.msra.mxu0 0.0
        %3774 = vmatprep.subr.mxu0 0.0
        %3775 = vmatpush1.msra.mxu0 0.0
        %3776 = vmatprep.subr.mxu0 0.0
        %3777 = vmatpush1.msra.mxu0 0.0
        %3778 = vmatprep.subr.mxu0 0.0
        %3779 = vmatpush1.msra.mxu0 0.0
        %3780 = vmatprep.subr.mxu0 0.0
        %3781 = vmatpush1.msra.mxu0 0.0
        %3782 = vmatprep.subr.mxu0 0.0
        %3783 = vmatpush1.msra.mxu0 0.0
        %3784 = vmatprep.subr.mxu0 0.0
        %3785 = vmatpush1.msra.mxu0 0.0
        %3786 = vmatprep.subr.mxu0 0.0
        %3787 = vmatpush1.msra.mxu0 0.0
        %3788 = vmatprep.subr.mxu0 0.0
        %3789 = vmatpush1.msra.mxu0 0.0
        %3790 = vmatprep.subr.mxu0 0.0
        %3791 = vmatpush1.msra.mxu0 0.0
        %3792 = vmatprep.subr.mxu0 0.0
        %3793 = vmatpush1.msra.mxu0 0.0
        %3794 = vmatprep.subr.mxu0 0.0
        %3795 = vmatpush1.msra.mxu0 0.0
        %3796 = vmatprep.subr.mxu0 0.0
        %3797 = vmatpush1.msra.mxu0 0.0
        %3798 = vmatprep.subr.mxu0 0.0
        %3799 = vmatpush1.msra.mxu0 0.0
        %3800 = vmatprep.subr.mxu0 0.0
        %3801 = vmatpush1.msra.mxu0 0.0
        %3802 = vmatprep.subr.mxu0 0.0
        %3803 = vmatpush1.msra.mxu0 0.0
        %3804 = vmatprep.subr.mxu0 0.0
        %3805 = vmatpush1.msra.mxu0 0.0
        %3806 = vmatprep.subr.mxu0 0.0
        %3807 = vmatpush1.msra.mxu0 0.0
        %3808 = vmatprep.mubr.f32.mxu0 0.0
        %3809 = vmatmul.mubr.f32.gmra.mrb[0].mxu0 %v3733
        %v3810 = vpop.f32.mrb[0].mxu0
        %v3811 = vadd.f32 0.0, %v3810
        %v3812 = vpop.f32.mrb[0].mxu0
        %3813 = vmatprep.mubr.f32.mxu0 0.0
        %3814 = vmatmul.mubr.f32.gmra.mrb[0].mxu0 %v3736
        %v3815 = vpop.f32.mrb[0].mxu0
        %v3816 = vadd.f32 0.0, %v3815
        %v3817 = vpop.f32.mrb[0].mxu0
        %3818 = vmatprep.mubr.f32.mxu0 0.0
        %3819 = vmatmul.mubr.f32.gmra.mrb[0].mxu0 %v3739
        %v3820 = vpop.f32.mrb[0].mxu0
        %v3821 = vadd.f32 0.0, %v3820
        %v3822 = vpop.f32.mrb[0].mxu0
        %3823 = vmatprep.mubr.f32.mxu0 0.0
        %3824 = vmatmul.mubr.f32.gmra.mrb[0].mxu0 %v3742
        %v3825 = vpop.f32.mrb[0].mxu0
        %v3826 = vadd.f32 0.0, %v3825
        %v3827 = vpop.f32.mrb[0].mxu0
        %3828 = vdwg.mxu0
        %v3830 = vsel %vm1427, %v3720, 0
        %v3833 = vsel %vm1427, %v3721, 0
        %v3836 = vsel %vm1427, %v3722, 0
        %v3839 = vsel %vm1427, %v3723, 0
        %3841 = vmatprep.subr.mxu0 0.0
        %3842 = vmatpush1.msra.mxu0 %v887
        %3843 = vmatprep.subr.mxu0 0.0
        %3844 = vmatpush1.msra.mxu0 %v893
        %3845 = vmatprep.subr.mxu0 0.0
        %3846 = vmatpush1.msra.mxu0 %v899
        %3847 = vmatprep.subr.mxu0 0.0
        %3848 = vmatpush1.msra.mxu0 %v905
        %3849 = vmatprep.subr.mxu0 0.0
        %3850 = vmatpush1.msra.mxu0 0.0
        %3851 = vmatprep.subr.mxu0 0.0
        %3852 = vmatpush1.msra.mxu0 0.0
        %3853 = vmatprep.subr.mxu0 0.0
        %3854 = vmatpush1.msra.mxu0 0.0
        %3855 = vmatprep.subr.mxu0 0.0
        %3856 = vmatpush1.msra.mxu0 0.0
        %3857 = vmatprep.subr.mxu0 0.0
        %3858 = vmatpush1.msra.mxu0 0.0
        %3859 = vmatprep.subr.mxu0 0.0
        %3860 = vmatpush1.msra.mxu0 0.0
        %3861 = vmatprep.subr.mxu0 0.0
        %3862 = vmatpush1.msra.mxu0 0.0
        %3863 = vmatprep.subr.mxu0 0.0
        %3864 = vmatpush1.msra.mxu0 0.0
        %3865 = vmatprep.subr.mxu0 0.0
        %3866 = vmatpush1.msra.mxu0 0.0
        %3867 = vmatprep.subr.mxu0 0.0
        %3868 = vmatpush1.msra.mxu0 0.0
        %3869 = vmatprep.subr.mxu0 0.0
        %3870 = vmatpush1.msra.mxu0 0.0
        %3871 = vmatprep.subr.mxu0 0.0
        %3872 = vmatpush1.msra.mxu0 0.0
        %3873 = vmatprep.subr.mxu0 0.0
        %3874 = vmatpush1.msra.mxu0 0.0
        %3875 = vmatprep.subr.mxu0 0.0
        %3876 = vmatpush1.msra.mxu0 0.0
        %3877 = vmatprep.subr.mxu0 0.0
        %3878 = vmatpush1.msra.mxu0 0.0
        %3879 = vmatprep.subr.mxu0 0.0
        %3880 = vmatpush1.msra.mxu0 0.0
        %3881 = vmatprep.subr.mxu0 0.0
        %3882 = vmatpush1.msra.mxu0 0.0
        %3883 = vmatprep.subr.mxu0 0.0
        %3884 = vmatpush1.msra.mxu0 0.0
        %3885 = vmatprep.subr.mxu0 0.0
        %3886 = vmatpush1.msra.mxu0 0.0
        %3887 = vmatprep.subr.mxu0 0.0
        %3888 = vmatpush1.msra.mxu0 0.0
        %3889 = vmatprep.subr.mxu0 0.0
        %3890 = vmatpush1.msra.mxu0 0.0
        %3891 = vmatprep.subr.mxu0 0.0
        %3892 = vmatpush1.msra.mxu0 0.0
        %3893 = vmatprep.subr.mxu0 0.0
        %3894 = vmatpush1.msra.mxu0 0.0
        %3895 = vmatprep.subr.mxu0 0.0
        %3896 = vmatpush1.msra.mxu0 0.0
        %3897 = vmatprep.subr.mxu0 0.0
        %3898 = vmatpush1.msra.mxu0 0.0
        %3899 = vmatprep.subr.mxu0 0.0
        %3900 = vmatpush1.msra.mxu0 0.0
        %3901 = vmatprep.subr.mxu0 0.0
        %3902 = vmatpush1.msra.mxu0 0.0
        %3903 = vmatprep.subr.mxu0 0.0
        %3904 = vmatpush1.msra.mxu0 0.0
        %3905 = vmatprep.mubr.f32.mxu0 0.0
        %3906 = vmatmul.mubr.f32.gmra.mrb[0].mxu0 %v3830
        %v3907 = vpop.f32.mrb[0].mxu0
        %v3908 = vadd.f32 0.0, %v3907
        %v3909 = vpop.f32.mrb[0].mxu0
        %3910 = vmatprep.mubr.f32.mxu0 0.0
        %3911 = vmatmul.mubr.f32.gmra.mrb[0].mxu0 %v3833
        %v3912 = vpop.f32.mrb[0].mxu0
        %v3913 = vadd.f32 0.0, %v3912
        %v3914 = vpop.f32.mrb[0].mxu0
        %3915 = vmatprep.mubr.f32.mxu0 0.0
        %3916 = vmatmul.mubr.f32.gmra.mrb[0].mxu0 %v3836
        %v3917 = vpop.f32.mrb[0].mxu0
        %v3918 = vadd.f32 0.0, %v3917
        %v3919 = vpop.f32.mrb[0].mxu0
        %3920 = vmatprep.mubr.f32.mxu0 0.0
        %3921 = vmatmul.mubr.f32.gmra.mrb[0].mxu0 %v3839
        %v3922 = vpop.f32.mrb[0].mxu0
        %v3923 = vadd.f32 0.0, %v3922
        %v3924 = vpop.f32.mrb[0].mxu0
        %3925 = vdwg.mxu0
        %v3927 = vsel %vm1427, %v3724, 0
        %v3930 = vsel %vm1427, %v3725, 0
        %v3933 = vsel %vm1427, %v3726, 0
        %v3936 = vsel %vm1427, %v3727, 0
        %3938 = vmatprep.subr.mxu0 0.0
        %3939 = vmatpush1.msra.mxu0 %v911
        %3940 = vmatprep.subr.mxu0 0.0
        %3941 = vmatpush1.msra.mxu0 %v917
        %3942 = vmatprep.subr.mxu0 0.0
        %3943 = vmatpush1.msra.mxu0 %v923
        %3944 = vmatprep.subr.mxu0 0.0
        %3945 = vmatpush1.msra.mxu0 %v929
        %3946 = vmatprep.subr.mxu0 0.0
        %3947 = vmatpush1.msra.mxu0 0.0
        %3948 = vmatprep.subr.mxu0 0.0
        %3949 = vmatpush1.msra.mxu0 0.0
        %3950 = vmatprep.subr.mxu0 0.0
        %3951 = vmatpush1.msra.mxu0 0.0
        %3952 = vmatprep.subr.mxu0 0.0
        %3953 = vmatpush1.msra.mxu0 0.0
        %3954 = vmatprep.subr.mxu0 0.0
        %3955 = vmatpush1.msra.mxu0 0.0
        %3956 = vmatprep.subr.mxu0 0.0
        %3957 = vmatpush1.msra.mxu0 0.0
        %3958 = vmatprep.subr.mxu0 0.0
        %3959 = vmatpush1.msra.mxu0 0.0
        %3960 = vmatprep.subr.mxu0 0.0
        %3961 = vmatpush1.msra.mxu0 0.0
        %3962 = vmatprep.subr.mxu0 0.0
        %3963 = vmatpush1.msra.mxu0 0.0
        %3964 = vmatprep.subr.mxu0 0.0
        %3965 = vmatpush1.msra.mxu0 0.0
        %3966 = vmatprep.subr.mxu0 0.0
        %3967 = vmatpush1.msra.mxu0 0.0
        %3968 = vmatprep.subr.mxu0 0.0
        %3969 = vmatpush1.msra.mxu0 0.0
        %3970 = vmatprep.subr.mxu0 0.0
        %3971 = vmatpush1.msra.mxu0 0.0
        %3972 = vmatprep.subr.mxu0 0.0
        %3973 = vmatpush1.msra.mxu0 0.0
        %3974 = vmatprep.subr.mxu0 0.0
        %3975 = vmatpush1.msra.mxu0 0.0
        %3976 = vmatprep.subr.mxu0 0.0
        %3977 = vmatpush1.msra.mxu0 0.0
        %3978 = vmatprep.subr.mxu0 0.0
        %3979 = vmatpush1.msra.mxu0 0.0
        %3980 = vmatprep.subr.mxu0 0.0
        %3981 = vmatpush1.msra.mxu0 0.0
        %3982 = vmatprep.subr.mxu0 0.0
        %3983 = vmatpush1.msra.mxu0 0.0
        %3984 = vmatprep.subr.mxu0 0.0
        %3985 = vmatpush1.msra.mxu0 0.0
        %3986 = vmatprep.subr.mxu0 0.0
        %3987 = vmatpush1.msra.mxu0 0.0
        %3988 = vmatprep.subr.mxu0 0.0
        %3989 = vmatpush1.msra.mxu0 0.0
        %3990 = vmatprep.subr.mxu0 0.0
        %3991 = vmatpush1.msra.mxu0 0.0
        %3992 = vmatprep.subr.mxu0 0.0
        %3993 = vmatpush1.msra.mxu0 0.0
        %3994 = vmatprep.subr.mxu0 0.0
        %3995 = vmatpush1.msra.mxu0 0.0
        %3996 = vmatprep.subr.mxu0 0.0
        %3997 = vmatpush1.msra.mxu0 0.0
        %3998 = vmatprep.subr.mxu0 0.0
        %3999 = vmatpush1.msra.mxu0 0.0
        %4000 = vmatprep.subr.mxu0 0.0
        %4001 = vmatpush1.msra.mxu0 0.0
        %4002 = vmatprep.mubr.f32.mxu0 0.0
        %4003 = vmatmul.mubr.f32.gmra.mrb[0].mxu0 %v3927
        %v4004 = vpop.f32.mrb[0].mxu0
        %v4005 = vadd.f32 0.0, %v4004
        %v4006 = vpop.f32.mrb[0].mxu0
        %4007 = vmatprep.mubr.f32.mxu0 0.0
        %4008 = vmatmul.mubr.f32.gmra.mrb[0].mxu0 %v3930
        %v4009 = vpop.f32.mrb[0].mxu0
        %v4010 = vadd.f32 0.0, %v4009
        %v4011 = vpop.f32.mrb[0].mxu0
        %4012 = vmatprep.mubr.f32.mxu0 0.0
        %4013 = vmatmul.mubr.f32.gmra.mrb[0].mxu0 %v3933
        %v4014 = vpop.f32.mrb[0].mxu0
        %v4015 = vadd.f32 0.0, %v4014
        %v4016 = vpop.f32.mrb[0].mxu0
        %4017 = vmatprep.mubr.f32.mxu0 0.0
        %4018 = vmatmul.mubr.f32.gmra.mrb[0].mxu0 %v3936
        %v4019 = vpop.f32.mrb[0].mxu0
        %v4020 = vadd.f32 0.0, %v4019
        %v4021 = vpop.f32.mrb[0].mxu0
        %4022 = vdwg.mxu0
        %v4024 = vsel %vm1427, %v3728, 0
        %v4027 = vsel %vm1427, %v3729, 0
        %v4030 = vsel %vm1427, %v3730, 0
        %v4033 = vsel %vm1427, %v3731, 0
        %4035 = vmatprep.subr.mxu0 0.0
        %4036 = vmatpush1.msra.mxu0 %v935
        %4037 = vmatprep.subr.mxu0 0.0
        %4038 = vmatpush1.msra.mxu0 %v941
        %4039 = vmatprep.subr.mxu0 0.0
        %4040 = vmatpush1.msra.mxu0 %v947
        %4041 = vmatprep.subr.mxu0 0.0
        %4042 = vmatpush1.msra.mxu0 %v953
        %4043 = vmatprep.subr.mxu0 0.0
        %4044 = vmatpush1.msra.mxu0 0.0
        %4045 = vmatprep.subr.mxu0 0.0
        %4046 = vmatpush1.msra.mxu0 0.0
        %4047 = vmatprep.subr.mxu0 0.0
        %4048 = vmatpush1.msra.mxu0 0.0
        %4049 = vmatprep.subr.mxu0 0.0
        %4050 = vmatpush1.msra.mxu0 0.0
        %4051 = vmatprep.subr.mxu0 0.0
        %4052 = vmatpush1.msra.mxu0 0.0
        %4053 = vmatprep.subr.mxu0 0.0
        %4054 = vmatpush1.msra.mxu0 0.0
        %4055 = vmatprep.subr.mxu0 0.0
        %4056 = vmatpush1.msra.mxu0 0.0
        %4057 = vmatprep.subr.mxu0 0.0
        %4058 = vmatpush1.msra.mxu0 0.0
        %4059 = vmatprep.subr.mxu0 0.0
        %4060 = vmatpush1.msra.mxu0 0.0
        %4061 = vmatprep.subr.mxu0 0.0
        %4062 = vmatpush1.msra.mxu0 0.0
        %4063 = vmatprep.subr.mxu0 0.0
        %4064 = vmatpush1.msra.mxu0 0.0
        %4065 = vmatprep.subr.mxu0 0.0
        %4066 = vmatpush1.msra.mxu0 0.0
        %4067 = vmatprep.subr.mxu0 0.0
        %4068 = vmatpush1.msra.mxu0 0.0
        %4069 = vmatprep.subr.mxu0 0.0
        %4070 = vmatpush1.msra.mxu0 0.0
        %4071 = vmatprep.subr.mxu0 0.0
        %4072 = vmatpush1.msra.mxu0 0.0
        %4073 = vmatprep.subr.mxu0 0.0
        %4074 = vmatpush1.msra.mxu0 0.0
        %4075 = vmatprep.subr.mxu0 0.0
        %4076 = vmatpush1.msra.mxu0 0.0
        %4077 = vmatprep.subr.mxu0 0.0
        %4078 = vmatpush1.msra.mxu0 0.0
        %4079 = vmatprep.subr.mxu0 0.0
        %4080 = vmatpush1.msra.mxu0 0.0
        %4081 = vmatprep.subr.mxu0 0.0
        %4082 = vmatpush1.msra.mxu0 0.0
        %4083 = vmatprep.subr.mxu0 0.0
        %4084 = vmatpush1.msra.mxu0 0.0
        %4085 = vmatprep.subr.mxu0 0.0
        %4086 = vmatpush1.msra.mxu0 0.0
        %4087 = vmatprep.subr.mxu0 0.0
        %4088 = vmatpush1.msra.mxu0 0.0
        %4089 = vmatprep.subr.mxu0 0.0
        %4090 = vmatpush1.msra.mxu0 0.0
        %4091 = vmatprep.subr.mxu0 0.0
        %4092 = vmatpush1.msra.mxu0 0.0
        %4093 = vmatprep.subr.mxu0 0.0
        %4094 = vmatpush1.msra.mxu0 0.0
        %4095 = vmatprep.subr.mxu0 0.0
        %4096 = vmatpush1.msra.mxu0 0.0
        %4097 = vmatprep.subr.mxu0 0.0
        %4098 = vmatpush1.msra.mxu0 0.0
        %4099 = vmatprep.mubr.f32.mxu0 0.0
        %4100 = vmatmul.mubr.f32.gmra.mrb[0].mxu0 %v4024
        %v4101 = vpop.f32.mrb[0].mxu0
        %v4102 = vadd.f32 0.0, %v4101
        %v4103 = vpop.f32.mrb[0].mxu0
        %4104 = vmatprep.mubr.f32.mxu0 0.0
        %4105 = vmatmul.mubr.f32.gmra.mrb[0].mxu0 %v4027
        %v4106 = vpop.f32.mrb[0].mxu0
        %v4107 = vadd.f32 0.0, %v4106
        %v4108 = vpop.f32.mrb[0].mxu0
        %4109 = vmatprep.mubr.f32.mxu0 0.0
        %4110 = vmatmul.mubr.f32.gmra.mrb[0].mxu0 %v4030
        %v4111 = vpop.f32.mrb[0].mxu0
        %v4112 = vadd.f32 0.0, %v4111
        %v4113 = vpop.f32.mrb[0].mxu0
        %4114 = vmatprep.mubr.f32.mxu0 0.0
        %4115 = vmatmul.mubr.f32.gmra.mrb[0].mxu0 %v4033
        %v4116 = vpop.f32.mrb[0].mxu0
        %v4117 = vadd.f32 0.0, %v4116
        %v4118 = vpop.f32.mrb[0].mxu0
        %4119 = vdwg.mxu0
        %4120 = vrot.lane.b32.xlu0 %v541, 64
        %v4121 = vpop.permute.xlu0 %4120
        %4122 = vrot.lane.b32.xlu0 %v547, 64
        %v4123 = vpop.permute.xlu0 %4122
        %4124 = vrot.lane.b32.xlu0 %v553, 64
        %v4125 = vpop.permute.xlu0 %4124
        %4126 = vrot.lane.b32.xlu0 %v559, 64
        %v4127 = vpop.permute.xlu0 %4126
        %4128 = vrot.lane.b32.xlu0 %v702, 64
        %v4129 = vpop.permute.xlu0 %4128
        %4130 = vrot.lane.b32.xlu0 %v708, 64
        %v4131 = vpop.permute.xlu0 %4130
        %4132 = vrot.lane.b32.xlu0 %v714, 64
        %v4133 = vpop.permute.xlu0 %4132
        %4134 = vrot.lane.b32.xlu0 %v720, 64
        %v4135 = vpop.permute.xlu0 %4134
        %v4136 = vsel %vm966, %v4121, 0
        %v4138 = vsel %vm966, %v4123, 0
        %v4140 = vsel %vm966, %v4125, 0
        %v4142 = vsel %vm966, %v4127, 0
        %v4144 = vsel %vm966, %v4129, 0
        %v4146 = vsel %vm966, %v4131, 0
        %v4148 = vsel %vm966, %v4133, 0
        %v4150 = vsel %vm966, %v4135, 0
        %4152 = vmatprep.subr.mxu0 0.0
        %4153 = vmatpush1.xpose.msra.mxu0 %v4144
        %4154 = vmatprep.subr.mxu0 0.0
        %4155 = vmatpush1.xpose.msra.mxu0 %v4146
        %4156 = vmatprep.subr.mxu0 0.0
        %4157 = vmatpush1.xpose.msra.mxu0 %v4148
        %4158 = vmatprep.subr.mxu0 0.0
        %4159 = vmatpush1.xpose.msra.mxu0 %v4150
        %4160 = vmatprep.subr.mxu0 0.0
        %4161 = vmatpush1.xpose.msra.mxu0 0.0
        %4162 = vmatprep.subr.mxu0 0.0
        %4163 = vmatpush1.xpose.msra.mxu0 0.0
        %4164 = vmatprep.subr.mxu0 0.0
        %4165 = vmatpush1.xpose.msra.mxu0 0.0
        %4166 = vmatprep.subr.mxu0 0.0
        %4167 = vmatpush1.xpose.msra.mxu0 0.0
        %4168 = vmatprep.subr.mxu0 0.0
        %4169 = vmatpush1.xpose.msra.mxu0 0.0
        %4170 = vmatprep.subr.mxu0 0.0
        %4171 = vmatpush1.xpose.msra.mxu0 0.0
        %4172 = vmatprep.subr.mxu0 0.0
        %4173 = vmatpush1.xpose.msra.mxu0 0.0
        %4174 = vmatprep.subr.mxu0 0.0
        %4175 = vmatpush1.xpose.msra.mxu0 0.0
        %4176 = vmatprep.subr.mxu0 0.0
        %4177 = vmatpush1.xpose.msra.mxu0 0.0
        %4178 = vmatprep.subr.mxu0 0.0
        %4179 = vmatpush1.xpose.msra.mxu0 0.0
        %4180 = vmatprep.subr.mxu0 0.0
        %4181 = vmatpush1.xpose.msra.mxu0 0.0
        %4182 = vmatprep.subr.mxu0 0.0
        %4183 = vmatpush1.xpose.msra.mxu0 0.0
        %4184 = vmatprep.subr.mxu0 0.0
        %4185 = vmatpush1.xpose.msra.mxu0 0.0
        %4186 = vmatprep.subr.mxu0 0.0
        %4187 = vmatpush1.xpose.msra.mxu0 0.0
        %4188 = vmatprep.subr.mxu0 0.0
        %4189 = vmatpush1.xpose.msra.mxu0 0.0
        %4190 = vmatprep.subr.mxu0 0.0
        %4191 = vmatpush1.xpose.msra.mxu0 0.0
        %4192 = vmatprep.subr.mxu0 0.0
        %4193 = vmatpush1.xpose.msra.mxu0 0.0
        %4194 = vmatprep.subr.mxu0 0.0
        %4195 = vmatpush1.xpose.msra.mxu0 0.0
        %4196 = vmatprep.subr.mxu0 0.0
        %4197 = vmatpush1.xpose.msra.mxu0 0.0
        %4198 = vmatprep.subr.mxu0 0.0
        %4199 = vmatpush1.xpose.msra.mxu0 0.0
        %4200 = vmatprep.subr.mxu0 0.0
        %4201 = vmatpush1.xpose.msra.mxu0 0.0
        %4202 = vmatprep.subr.mxu0 0.0
        %4203 = vmatpush1.xpose.msra.mxu0 0.0
        %4204 = vmatprep.subr.mxu0 0.0
        %4205 = vmatpush1.xpose.msra.mxu0 0.0
        %4206 = vmatprep.subr.mxu0 0.0
        %4207 = vmatpush1.xpose.msra.mxu0 0.0
        %4208 = vmatprep.subr.mxu0 0.0
        %4209 = vmatpush1.xpose.msra.mxu0 0.0
        %4210 = vmatprep.subr.mxu0 0.0
        %4211 = vmatpush1.xpose.msra.mxu0 0.0
        %4212 = vmatprep.subr.mxu0 0.0
        %4213 = vmatpush1.xpose.msra.mxu0 0.0
        %4214 = vmatprep.subr.mxu0 0.0
        %4215 = vmatpush1.xpose.msra.mxu0 0.0
        %4216 = vmatprep.mubr.f32.mxu0 0.0
        %4217 = vmatmul.mubr.f32.gmra.mrb[0].mxu0 %v4136
        %v4218 = vpop.f32.mrb[0].mxu0
        %v4219 = vadd.f32 0.0, %v4218
        %v4220 = vpop.f32.mrb[0].mxu0
        %4221 = vmatprep.mubr.f32.mxu0 0.0
        %4222 = vmatmul.mubr.f32.gmra.mrb[0].mxu0 %v4138
        %v4223 = vpop.f32.mrb[0].mxu0
        %v4224 = vadd.f32 0.0, %v4223
        %v4225 = vpop.f32.mrb[0].mxu0
        %4226 = vmatprep.mubr.f32.mxu0 0.0
        %4227 = vmatmul.mubr.f32.gmra.mrb[0].mxu0 %v4140
        %v4228 = vpop.f32.mrb[0].mxu0
        %v4229 = vadd.f32 0.0, %v4228
        %v4230 = vpop.f32.mrb[0].mxu0
        %4231 = vmatprep.mubr.f32.mxu0 0.0
        %4232 = vmatmul.mubr.f32.gmra.mrb[0].mxu0 %v4142
        %v4233 = vpop.f32.mrb[0].mxu0
        %v4234 = vadd.f32 0.0, %v4233
        %v4235 = vpop.f32.mrb[0].mxu0
        %4236 = vdwg.mxu0
        %4237 = vrot.lane.b32.xlu0 %v565, 64
        %v4238 = vpop.permute.xlu0 %4237
        %4239 = vrot.lane.b32.xlu0 %v571, 64
        %v4240 = vpop.permute.xlu0 %4239
        %4241 = vrot.lane.b32.xlu0 %v577, 64
        %v4242 = vpop.permute.xlu0 %4241
        %4243 = vrot.lane.b32.xlu0 %v583, 64
        %v4244 = vpop.permute.xlu0 %4243
        %4245 = vrot.lane.b32.xlu0 %v726, 64
        %v4246 = vpop.permute.xlu0 %4245
        %4247 = vrot.lane.b32.xlu0 %v732, 64
        %v4248 = vpop.permute.xlu0 %4247
        %4249 = vrot.lane.b32.xlu0 %v738, 64
        %v4250 = vpop.permute.xlu0 %4249
        %4251 = vrot.lane.b32.xlu0 %v744, 64
        %v4252 = vpop.permute.xlu0 %4251
        %v4253 = vsel %vm966, %v4238, 0
        %v4255 = vsel %vm966, %v4240, 0
        %v4257 = vsel %vm966, %v4242, 0
        %v4259 = vsel %vm966, %v4244, 0
        %v4261 = vsel %vm966, %v4246, 0
        %v4263 = vsel %vm966, %v4248, 0
        %v4265 = vsel %vm966, %v4250, 0
        %v4267 = vsel %vm966, %v4252, 0
        %4269 = vmatprep.subr.mxu0 0.0
        %4270 = vmatpush1.xpose.msra.mxu0 %v4261
        %4271 = vmatprep.subr.mxu0 0.0
        %4272 = vmatpush1.xpose.msra.mxu0 %v4263
        %4273 = vmatprep.subr.mxu0 0.0
        %4274 = vmatpush1.xpose.msra.mxu0 %v4265
        %4275 = vmatprep.subr.mxu0 0.0
        %4276 = vmatpush1.xpose.msra.mxu0 %v4267
        %4277 = vmatprep.subr.mxu0 0.0
        %4278 = vmatpush1.xpose.msra.mxu0 0.0
        %4279 = vmatprep.subr.mxu0 0.0
        %4280 = vmatpush1.xpose.msra.mxu0 0.0
        %4281 = vmatprep.subr.mxu0 0.0
        %4282 = vmatpush1.xpose.msra.mxu0 0.0
        %4283 = vmatprep.subr.mxu0 0.0
        %4284 = vmatpush1.xpose.msra.mxu0 0.0
        %4285 = vmatprep.subr.mxu0 0.0
        %4286 = vmatpush1.xpose.msra.mxu0 0.0
        %4287 = vmatprep.subr.mxu0 0.0
        %4288 = vmatpush1.xpose.msra.mxu0 0.0
        %4289 = vmatprep.subr.mxu0 0.0
        %4290 = vmatpush1.xpose.msra.mxu0 0.0
        %4291 = vmatprep.subr.mxu0 0.0
        %4292 = vmatpush1.xpose.msra.mxu0 0.0
        %4293 = vmatprep.subr.mxu0 0.0
        %4294 = vmatpush1.xpose.msra.mxu0 0.0
        %4295 = vmatprep.subr.mxu0 0.0
        %4296 = vmatpush1.xpose.msra.mxu0 0.0
        %4297 = vmatprep.subr.mxu0 0.0
        %4298 = vmatpush1.xpose.msra.mxu0 0.0
        %4299 = vmatprep.subr.mxu0 0.0
        %4300 = vmatpush1.xpose.msra.mxu0 0.0
        %4301 = vmatprep.subr.mxu0 0.0
        %4302 = vmatpush1.xpose.msra.mxu0 0.0
        %4303 = vmatprep.subr.mxu0 0.0
        %4304 = vmatpush1.xpose.msra.mxu0 0.0
        %4305 = vmatprep.subr.mxu0 0.0
        %4306 = vmatpush1.xpose.msra.mxu0 0.0
        %4307 = vmatprep.subr.mxu0 0.0
        %4308 = vmatpush1.xpose.msra.mxu0 0.0
        %4309 = vmatprep.subr.mxu0 0.0
        %4310 = vmatpush1.xpose.msra.mxu0 0.0
        %4311 = vmatprep.subr.mxu0 0.0
        %4312 = vmatpush1.xpose.msra.mxu0 0.0
        %4313 = vmatprep.subr.mxu0 0.0
        %4314 = vmatpush1.xpose.msra.mxu0 0.0
        %4315 = vmatprep.subr.mxu0 0.0
        %4316 = vmatpush1.xpose.msra.mxu0 0.0
        %4317 = vmatprep.subr.mxu0 0.0
        %4318 = vmatpush1.xpose.msra.mxu0 0.0
        %4319 = vmatprep.subr.mxu0 0.0
        %4320 = vmatpush1.xpose.msra.mxu0 0.0
        %4321 = vmatprep.subr.mxu0 0.0
        %4322 = vmatpush1.xpose.msra.mxu0 0.0
        %4323 = vmatprep.subr.mxu0 0.0
        %4324 = vmatpush1.xpose.msra.mxu0 0.0
        %4325 = vmatprep.subr.mxu0 0.0
        %4326 = vmatpush1.xpose.msra.mxu0 0.0
        %4327 = vmatprep.subr.mxu0 0.0
        %4328 = vmatpush1.xpose.msra.mxu0 0.0
        %4329 = vmatprep.subr.mxu0 0.0
        %4330 = vmatpush1.xpose.msra.mxu0 0.0
        %4331 = vmatprep.subr.mxu0 0.0
        %4332 = vmatpush1.xpose.msra.mxu0 0.0
        %4333 = vmatprep.mubr.f32.mxu0 0.0
        %4334 = vmatmul.mubr.f32.gmra.mrb[0].mxu0 %v4253
        %v4335 = vpop.f32.mrb[0].mxu0
        %v4336 = vadd.f32 0.0, %v4335
        %v4337 = vpop.f32.mrb[0].mxu0
        %4338 = vmatprep.mubr.f32.mxu0 0.0
        %4339 = vmatmul.mubr.f32.gmra.mrb[0].mxu0 %v4255
        %v4340 = vpop.f32.mrb[0].mxu0
        %v4341 = vadd.f32 0.0, %v4340
        %v4342 = vpop.f32.mrb[0].mxu0
        %4343 = vmatprep.mubr.f32.mxu0 0.0
        %4344 = vmatmul.mubr.f32.gmra.mrb[0].mxu0 %v4257
        %v4345 = vpop.f32.mrb[0].mxu0
        %v4346 = vadd.f32 0.0, %v4345
        %v4347 = vpop.f32.mrb[0].mxu0
        %4348 = vmatprep.mubr.f32.mxu0 0.0
        %4349 = vmatmul.mubr.f32.gmra.mrb[0].mxu0 %v4259
        %v4350 = vpop.f32.mrb[0].mxu0
        %v4351 = vadd.f32 0.0, %v4350
        %v4352 = vpop.f32.mrb[0].mxu0
        %4353 = vdwg.mxu0
        %4354 = vrot.lane.b32.xlu0 %v589, 64
        %v4355 = vpop.permute.xlu0 %4354
        %4356 = vrot.lane.b32.xlu0 %v595, 64
        %v4357 = vpop.permute.xlu0 %4356
        %4358 = vrot.lane.b32.xlu0 %v601, 64
        %v4359 = vpop.permute.xlu0 %4358
        %4360 = vrot.lane.b32.xlu0 %v607, 64
        %v4361 = vpop.permute.xlu0 %4360
        %4362 = vrot.lane.b32.xlu0 %v750, 64
        %v4363 = vpop.permute.xlu0 %4362
        %4364 = vrot.lane.b32.xlu0 %v756, 64
        %v4365 = vpop.permute.xlu0 %4364
        %4366 = vrot.lane.b32.xlu0 %v762, 64
        %v4367 = vpop.permute.xlu0 %4366
        %4368 = vrot.lane.b32.xlu0 %v768, 64
        %v4369 = vpop.permute.xlu0 %4368
        %v4370 = vsel %vm966, %v4355, 0
        %v4372 = vsel %vm966, %v4357, 0
        %v4374 = vsel %vm966, %v4359, 0
        %v4376 = vsel %vm966, %v4361, 0
        %v4378 = vsel %vm966, %v4363, 0
        %v4380 = vsel %vm966, %v4365, 0
        %v4382 = vsel %vm966, %v4367, 0
        %v4384 = vsel %vm966, %v4369, 0
        %4386 = vmatprep.subr.mxu0 0.0
        %4387 = vmatpush1.xpose.msra.mxu0 %v4378
        %4388 = vmatprep.subr.mxu0 0.0
        %4389 = vmatpush1.xpose.msra.mxu0 %v4380
        %4390 = vmatprep.subr.mxu0 0.0
        %4391 = vmatpush1.xpose.msra.mxu0 %v4382
        %4392 = vmatprep.subr.mxu0 0.0
        %4393 = vmatpush1.xpose.msra.mxu0 %v4384
        %4394 = vmatprep.subr.mxu0 0.0
        %4395 = vmatpush1.xpose.msra.mxu0 0.0
        %4396 = vmatprep.subr.mxu0 0.0
        %4397 = vmatpush1.xpose.msra.mxu0 0.0
        %4398 = vmatprep.subr.mxu0 0.0
        %4399 = vmatpush1.xpose.msra.mxu0 0.0
        %4400 = vmatprep.subr.mxu0 0.0
        %4401 = vmatpush1.xpose.msra.mxu0 0.0
        %4402 = vmatprep.subr.mxu0 0.0
        %4403 = vmatpush1.xpose.msra.mxu0 0.0
        %4404 = vmatprep.subr.mxu0 0.0
        %4405 = vmatpush1.xpose.msra.mxu0 0.0
        %4406 = vmatprep.subr.mxu0 0.0
        %4407 = vmatpush1.xpose.msra.mxu0 0.0
        %4408 = vmatprep.subr.mxu0 0.0
        %4409 = vmatpush1.xpose.msra.mxu0 0.0
        %4410 = vmatprep.subr.mxu0 0.0
        %4411 = vmatpush1.xpose.msra.mxu0 0.0
        %4412 = vmatprep.subr.mxu0 0.0
        %4413 = vmatpush1.xpose.msra.mxu0 0.0
        %4414 = vmatprep.subr.mxu0 0.0
        %4415 = vmatpush1.xpose.msra.mxu0 0.0
        %4416 = vmatprep.subr.mxu0 0.0
        %4417 = vmatpush1.xpose.msra.mxu0 0.0
        %4418 = vmatprep.subr.mxu0 0.0
        %4419 = vmatpush1.xpose.msra.mxu0 0.0
        %4420 = vmatprep.subr.mxu0 0.0
        %4421 = vmatpush1.xpose.msra.mxu0 0.0
        %4422 = vmatprep.subr.mxu0 0.0
        %4423 = vmatpush1.xpose.msra.mxu0 0.0
        %4424 = vmatprep.subr.mxu0 0.0
        %4425 = vmatpush1.xpose.msra.mxu0 0.0
        %4426 = vmatprep.subr.mxu0 0.0
        %4427 = vmatpush1.xpose.msra.mxu0 0.0
        %4428 = vmatprep.subr.mxu0 0.0
        %4429 = vmatpush1.xpose.msra.mxu0 0.0
        %4430 = vmatprep.subr.mxu0 0.0
        %4431 = vmatpush1.xpose.msra.mxu0 0.0
        %4432 = vmatprep.subr.mxu0 0.0
        %4433 = vmatpush1.xpose.msra.mxu0 0.0
        %4434 = vmatprep.subr.mxu0 0.0
        %4435 = vmatpush1.xpose.msra.mxu0 0.0
        %4436 = vmatprep.subr.mxu0 0.0
        %4437 = vmatpush1.xpose.msra.mxu0 0.0
        %4438 = vmatprep.subr.mxu0 0.0
        %4439 = vmatpush1.xpose.msra.mxu0 0.0
        %4440 = vmatprep.subr.mxu0 0.0
        %4441 = vmatpush1.xpose.msra.mxu0 0.0
        %4442 = vmatprep.subr.mxu0 0.0
        %4443 = vmatpush1.xpose.msra.mxu0 0.0
        %4444 = vmatprep.subr.mxu0 0.0
        %4445 = vmatpush1.xpose.msra.mxu0 0.0
        %4446 = vmatprep.subr.mxu0 0.0
        %4447 = vmatpush1.xpose.msra.mxu0 0.0
        %4448 = vmatprep.subr.mxu0 0.0
        %4449 = vmatpush1.xpose.msra.mxu0 0.0
        %4450 = vmatprep.mubr.f32.mxu0 0.0
        %4451 = vmatmul.mubr.f32.gmra.mrb[0].mxu0 %v4370
        %v4452 = vpop.f32.mrb[0].mxu0
        %v4453 = vadd.f32 0.0, %v4452
        %v4454 = vpop.f32.mrb[0].mxu0
        %4455 = vmatprep.mubr.f32.mxu0 0.0
        %4456 = vmatmul.mubr.f32.gmra.mrb[0].mxu0 %v4372
        %v4457 = vpop.f32.mrb[0].mxu0
        %v4458 = vadd.f32 0.0, %v4457
        %v4459 = vpop.f32.mrb[0].mxu0
        %4460 = vmatprep.mubr.f32.mxu0 0.0
        %4461 = vmatmul.mubr.f32.gmra.mrb[0].mxu0 %v4374
        %v4462 = vpop.f32.mrb[0].mxu0
        %v4463 = vadd.f32 0.0, %v4462
        %v4464 = vpop.f32.mrb[0].mxu0
        %4465 = vmatprep.mubr.f32.mxu0 0.0
        %4466 = vmatmul.mubr.f32.gmra.mrb[0].mxu0 %v4376
        %v4467 = vpop.f32.mrb[0].mxu0
        %v4468 = vadd.f32 0.0, %v4467
        %v4469 = vpop.f32.mrb[0].mxu0
        %4470 = vdwg.mxu0
        %4471 = vrot.lane.b32.xlu0 %v613, 64
        %v4472 = vpop.permute.xlu0 %4471
        %4473 = vrot.lane.b32.xlu0 %v619, 64
        %v4474 = vpop.permute.xlu0 %4473
        %4475 = vrot.lane.b32.xlu0 %v625, 64
        %v4476 = vpop.permute.xlu0 %4475
        %4477 = vrot.lane.b32.xlu0 %v631, 64
        %v4478 = vpop.permute.xlu0 %4477
        %4479 = vrot.lane.b32.xlu0 %v774, 64
        %v4480 = vpop.permute.xlu0 %4479
        %4481 = vrot.lane.b32.xlu0 %v780, 64
        %v4482 = vpop.permute.xlu0 %4481
        %4483 = vrot.lane.b32.xlu0 %v786, 64
        %v4484 = vpop.permute.xlu0 %4483
        %4485 = vrot.lane.b32.xlu0 %v792, 64
        %v4486 = vpop.permute.xlu0 %4485
        %v4487 = vsel %vm966, %v4472, 0
        %v4489 = vsel %vm966, %v4474, 0
        %v4491 = vsel %vm966, %v4476, 0
        %v4493 = vsel %vm966, %v4478, 0
        %v4495 = vsel %vm966, %v4480, 0
        %v4497 = vsel %vm966, %v4482, 0
        %v4499 = vsel %vm966, %v4484, 0
        %v4501 = vsel %vm966, %v4486, 0
        %4503 = vmatprep.subr.mxu0 0.0
        %4504 = vmatpush1.xpose.msra.mxu0 %v4495
        %4505 = vmatprep.subr.mxu0 0.0
        %4506 = vmatpush1.xpose.msra.mxu0 %v4497
        %4507 = vmatprep.subr.mxu0 0.0
        %4508 = vmatpush1.xpose.msra.mxu0 %v4499
        %4509 = vmatprep.subr.mxu0 0.0
        %4510 = vmatpush1.xpose.msra.mxu0 %v4501
        %4511 = vmatprep.subr.mxu0 0.0
        %4512 = vmatpush1.xpose.msra.mxu0 0.0
        %4513 = vmatprep.subr.mxu0 0.0
        %4514 = vmatpush1.xpose.msra.mxu0 0.0
        %4515 = vmatprep.subr.mxu0 0.0
        %4516 = vmatpush1.xpose.msra.mxu0 0.0
        %4517 = vmatprep.subr.mxu0 0.0
        %4518 = vmatpush1.xpose.msra.mxu0 0.0
        %4519 = vmatprep.subr.mxu0 0.0
        %4520 = vmatpush1.xpose.msra.mxu0 0.0
        %4521 = vmatprep.subr.mxu0 0.0
        %4522 = vmatpush1.xpose.msra.mxu0 0.0
        %4523 = vmatprep.subr.mxu0 0.0
        %4524 = vmatpush1.xpose.msra.mxu0 0.0
        %4525 = vmatprep.subr.mxu0 0.0
        %4526 = vmatpush1.xpose.msra.mxu0 0.0
        %4527 = vmatprep.subr.mxu0 0.0
        %4528 = vmatpush1.xpose.msra.mxu0 0.0
        %4529 = vmatprep.subr.mxu0 0.0
        %4530 = vmatpush1.xpose.msra.mxu0 0.0
        %4531 = vmatprep.subr.mxu0 0.0
        %4532 = vmatpush1.xpose.msra.mxu0 0.0
        %4533 = vmatprep.subr.mxu0 0.0
        %4534 = vmatpush1.xpose.msra.mxu0 0.0
        %4535 = vmatprep.subr.mxu0 0.0
        %4536 = vmatpush1.xpose.msra.mxu0 0.0
        %4537 = vmatprep.subr.mxu0 0.0
        %4538 = vmatpush1.xpose.msra.mxu0 0.0
        %4539 = vmatprep.subr.mxu0 0.0
        %4540 = vmatpush1.xpose.msra.mxu0 0.0
        %4541 = vmatprep.subr.mxu0 0.0
        %4542 = vmatpush1.xpose.msra.mxu0 0.0
        %4543 = vmatprep.subr.mxu0 0.0
        %4544 = vmatpush1.xpose.msra.mxu0 0.0
        %4545 = vmatprep.subr.mxu0 0.0
        %4546 = vmatpush1.xpose.msra.mxu0 0.0
        %4547 = vmatprep.subr.mxu0 0.0
        %4548 = vmatpush1.xpose.msra.mxu0 0.0
        %4549 = vmatprep.subr.mxu0 0.0
        %4550 = vmatpush1.xpose.msra.mxu0 0.0
        %4551 = vmatprep.subr.mxu0 0.0
        %4552 = vmatpush1.xpose.msra.mxu0 0.0
        %4553 = vmatprep.subr.mxu0 0.0
        %4554 = vmatpush1.xpose.msra.mxu0 0.0
        %4555 = vmatprep.subr.mxu0 0.0
        %4556 = vmatpush1.xpose.msra.mxu0 0.0
        %4557 = vmatprep.subr.mxu0 0.0
        %4558 = vmatpush1.xpose.msra.mxu0 0.0
        %4559 = vmatprep.subr.mxu0 0.0
        %4560 = vmatpush1.xpose.msra.mxu0 0.0
        %4561 = vmatprep.subr.mxu0 0.0
        %4562 = vmatpush1.xpose.msra.mxu0 0.0
        %4563 = vmatprep.subr.mxu0 0.0
        %4564 = vmatpush1.xpose.msra.mxu0 0.0
        %4565 = vmatprep.subr.mxu0 0.0
        %4566 = vmatpush1.xpose.msra.mxu0 0.0
        %4567 = vmatprep.mubr.f32.mxu0 0.0
        %4568 = vmatmul.mubr.f32.gmra.mrb[0].mxu0 %v4487
        %v4569 = vpop.f32.mrb[0].mxu0
        %v4570 = vadd.f32 0.0, %v4569
        %v4571 = vpop.f32.mrb[0].mxu0
        %4572 = vmatprep.mubr.f32.mxu0 0.0
        %4573 = vmatmul.mubr.f32.gmra.mrb[0].mxu0 %v4489
        %v4574 = vpop.f32.mrb[0].mxu0
        %v4575 = vadd.f32 0.0, %v4574
        %v4576 = vpop.f32.mrb[0].mxu0
        %4577 = vmatprep.mubr.f32.mxu0 0.0
        %4578 = vmatmul.mubr.f32.gmra.mrb[0].mxu0 %v4491
        %v4579 = vpop.f32.mrb[0].mxu0
        %v4580 = vadd.f32 0.0, %v4579
        %v4581 = vpop.f32.mrb[0].mxu0
        %4582 = vmatprep.mubr.f32.mxu0 0.0
        %4583 = vmatmul.mubr.f32.gmra.mrb[0].mxu0 %v4493
        %v4584 = vpop.f32.mrb[0].mxu0
        %v4585 = vadd.f32 0.0, %v4584
        %v4586 = vpop.f32.mrb[0].mxu0
        %4587 = vdwg.mxu0
        %v4588 = vsel %vm1407, %v4219, -inf
        %v4589 = vsel %vm1408, %v4224, -inf
        %v4590 = vsel %vm1409, %v4229, -inf
        %v4591 = vsel %vm1410, %v4234, -inf
        %v4592 = vsel %vm1407, %v4336, -inf
        %v4593 = vsel %vm1408, %v4341, -inf
        %v4594 = vsel %vm1409, %v4346, -inf
        %v4595 = vsel %vm1410, %v4351, -inf
        %v4596 = vsel %vm1407, %v4453, -inf
        %v4597 = vsel %vm1408, %v4458, -inf
        %v4598 = vsel %vm1409, %v4463, -inf
        %v4599 = vsel %vm1410, %v4468, -inf
        %v4600 = vsel %vm1407, %v4570, -inf
        %v4601 = vsel %vm1408, %v4575, -inf
        %v4602 = vsel %vm1409, %v4580, -inf
        %v4603 = vsel %vm1410, %v4585, -inf
        %v4604 = vsel %vm1427, %v4588, -inf
        %4605 = vmax.xlane.f32.xlu0 %v4604
        %v4606 = vpop.xlane.xlu0 %4605
        %v4607 = vsel %vm1427, %v4589, -inf
        %4608 = vmax.xlane.f32.xlu0 %v4607
        %v4609 = vpop.xlane.xlu0 %4608
        %v4610 = vsel %vm1427, %v4590, -inf
        %4611 = vmax.xlane.f32.xlu0 %v4610
        %v4612 = vpop.xlane.xlu0 %4611
        %v4613 = vsel %vm1427, %v4591, -inf
        %4614 = vmax.xlane.f32.xlu0 %v4613
        %v4615 = vpop.xlane.xlu0 %4614
        %v4616 = vsel %vm1427, %v4592, -inf
        %4617 = vmax.xlane.f32.xlu0 %v4616
        %v4618 = vpop.xlane.xlu0 %4617
        %v4619 = vsel %vm1427, %v4593, -inf
        %4620 = vmax.xlane.f32.xlu0 %v4619
        %v4621 = vpop.xlane.xlu0 %4620
        %v4622 = vsel %vm1427, %v4594, -inf
        %4623 = vmax.xlane.f32.xlu0 %v4622
        %v4624 = vpop.xlane.xlu0 %4623
        %v4625 = vsel %vm1427, %v4595, -inf
        %4626 = vmax.xlane.f32.xlu0 %v4625
        %v4627 = vpop.xlane.xlu0 %4626
        %v4628 = vsel %vm1427, %v4596, -inf
        %4629 = vmax.xlane.f32.xlu0 %v4628
        %v4630 = vpop.xlane.xlu0 %4629
        %v4631 = vsel %vm1427, %v4597, -inf
        %4632 = vmax.xlane.f32.xlu0 %v4631
        %v4633 = vpop.xlane.xlu0 %4632
        %v4634 = vsel %vm1427, %v4598, -inf
        %4635 = vmax.xlane.f32.xlu0 %v4634
        %v4636 = vpop.xlane.xlu0 %4635
        %v4637 = vsel %vm1427, %v4599, -inf
        %4638 = vmax.xlane.f32.xlu0 %v4637
        %v4639 = vpop.xlane.xlu0 %4638
        %v4640 = vsel %vm1427, %v4600, -inf
        %4641 = vmax.xlane.f32.xlu0 %v4640
        %v4642 = vpop.xlane.xlu0 %4641
        %v4643 = vsel %vm1427, %v4601, -inf
        %4644 = vmax.xlane.f32.xlu0 %v4643
        %v4645 = vpop.xlane.xlu0 %4644
        %v4646 = vsel %vm1427, %v4602, -inf
        %4647 = vmax.xlane.f32.xlu0 %v4646
        %v4648 = vpop.xlane.xlu0 %4647
        %v4649 = vsel %vm1427, %v4603, -inf
        %4650 = vmax.xlane.f32.xlu0 %v4649
        %v4651 = vpop.xlane.xlu0 %4650
        %v4652 = vsub.f32 %v4588, %v4606
        %v4653 = vsub.f32 %v4589, %v4609
        %v4654 = vsub.f32 %v4590, %v4612
        %v4655 = vsub.f32 %v4591, %v4615
        %v4656 = vsub.f32 %v4592, %v4618
        %v4657 = vsub.f32 %v4593, %v4621
        %v4658 = vsub.f32 %v4594, %v4624
        %v4659 = vsub.f32 %v4595, %v4627
        %v4660 = vsub.f32 %v4596, %v4630
        %v4661 = vsub.f32 %v4597, %v4633
        %v4662 = vsub.f32 %v4598, %v4636
        %v4663 = vsub.f32 %v4599, %v4639
        %v4664 = vsub.f32 %v4600, %v4642
        %v4665 = vsub.f32 %v4601, %v4645
        %v4666 = vsub.f32 %v4602, %v4648
        %v4667 = vsub.f32 %v4603, %v4651
        %v4668 = vmul.f32 %v4652, 1.442695
        %v4669 = vpow.pop %v4668
        %v4670 = vmul.f32 %v4653, 1.442695
        %v4671 = vpow.pop %v4670
        %v4672 = vmul.f32 %v4654, 1.442695
        %v4673 = vpow.pop %v4672
        %v4674 = vmul.f32 %v4655, 1.442695
        %v4675 = vpow.pop %v4674
        %v4676 = vmul.f32 %v4656, 1.442695
        %v4677 = vpow.pop %v4676
        %v4678 = vmul.f32 %v4657, 1.442695
        %v4679 = vpow.pop %v4678
        %v4680 = vmul.f32 %v4658, 1.442695
        %v4681 = vpow.pop %v4680
        %v4682 = vmul.f32 %v4659, 1.442695
        %v4683 = vpow.pop %v4682
        %v4684 = vmul.f32 %v4660, 1.442695
        %v4685 = vpow.pop %v4684
        %v4686 = vmul.f32 %v4661, 1.442695
        %v4687 = vpow.pop %v4686
        %v4688 = vmul.f32 %v4662, 1.442695
        %v4689 = vpow.pop %v4688
        %v4690 = vmul.f32 %v4663, 1.442695
        %v4691 = vpow.pop %v4690
        %v4692 = vmul.f32 %v4664, 1.442695
        %v4693 = vpow.pop %v4692
        %v4694 = vmul.f32 %v4665, 1.442695
        %v4695 = vpow.pop %v4694
        %v4696 = vmul.f32 %v4666, 1.442695
        %v4697 = vpow.pop %v4696
        %v4698 = vmul.f32 %v4667, 1.442695
        %v4699 = vpow.pop %v4698
        %v4700 = vsel %vm1427, %v4669, 0.0
        %4701 = vadd.xlane.f32.xlu0 %v4700
        %v4702 = vpop.xlane.xlu0 %4701
        %v4703 = vsel %vm1427, %v4671, 0.0
        %4704 = vadd.xlane.f32.xlu0 %v4703
        %v4705 = vpop.xlane.xlu0 %4704
        %v4706 = vsel %vm1427, %v4673, 0.0
        %4707 = vadd.xlane.f32.xlu0 %v4706
        %v4708 = vpop.xlane.xlu0 %4707
        %v4709 = vsel %vm1427, %v4675, 0.0
        %4710 = vadd.xlane.f32.xlu0 %v4709
        %v4711 = vpop.xlane.xlu0 %4710
        %v4712 = vsel %vm1427, %v4677, 0.0
        %4713 = vadd.xlane.f32.xlu0 %v4712
        %v4714 = vpop.xlane.xlu0 %4713
        %v4715 = vsel %vm1427, %v4679, 0.0
        %4716 = vadd.xlane.f32.xlu0 %v4715
        %v4717 = vpop.xlane.xlu0 %4716
        %v4718 = vsel %vm1427, %v4681, 0.0
        %4719 = vadd.xlane.f32.xlu0 %v4718
        %v4720 = vpop.xlane.xlu0 %4719
        %v4721 = vsel %vm1427, %v4683, 0.0
        %4722 = vadd.xlane.f32.xlu0 %v4721
        %v4723 = vpop.xlane.xlu0 %4722
        %v4724 = vsel %vm1427, %v4685, 0.0
        %4725 = vadd.xlane.f32.xlu0 %v4724
        %v4726 = vpop.xlane.xlu0 %4725
        %v4727 = vsel %vm1427, %v4687, 0.0
        %4728 = vadd.xlane.f32.xlu0 %v4727
        %v4729 = vpop.xlane.xlu0 %4728
        %v4730 = vsel %vm1427, %v4689, 0.0
        %4731 = vadd.xlane.f32.xlu0 %v4730
        %v4732 = vpop.xlane.xlu0 %4731
        %v4733 = vsel %vm1427, %v4691, 0.0
        %4734 = vadd.xlane.f32.xlu0 %v4733
        %v4735 = vpop.xlane.xlu0 %4734
        %v4736 = vsel %vm1427, %v4693, 0.0
        %4737 = vadd.xlane.f32.xlu0 %v4736
        %v4738 = vpop.xlane.xlu0 %4737
        %v4739 = vsel %vm1427, %v4695, 0.0
        %4740 = vadd.xlane.f32.xlu0 %v4739
        %v4741 = vpop.xlane.xlu0 %4740
        %v4742 = vsel %vm1427, %v4697, 0.0
        %4743 = vadd.xlane.f32.xlu0 %v4742
        %v4744 = vpop.xlane.xlu0 %4743
        %v4745 = vsel %vm1427, %v4699, 0.0
        %4746 = vadd.xlane.f32.xlu0 %v4745
        %v4747 = vpop.xlane.xlu0 %4746
        %v4748 = vrcp.pop %v4702
        %v4749 = vrcp.pop %v4705
        %v4750 = vrcp.pop %v4708
        %v4751 = vrcp.pop %v4711
        %v4752 = vrcp.pop %v4714
        %v4753 = vrcp.pop %v4717
        %v4754 = vrcp.pop %v4720
        %v4755 = vrcp.pop %v4723
        %v4756 = vrcp.pop %v4726
        %v4757 = vrcp.pop %v4729
        %v4758 = vrcp.pop %v4732
        %v4759 = vrcp.pop %v4735
        %v4760 = vrcp.pop %v4738
        %v4761 = vrcp.pop %v4741
        %v4762 = vrcp.pop %v4744
        %v4763 = vrcp.pop %v4747
        %v4764 = vmul.f32 %v4669, %v4748
        %v4765 = vmul.f32 %v4671, %v4749
        %v4766 = vmul.f32 %v4673, %v4750
        %v4767 = vmul.f32 %v4675, %v4751
        %v4768 = vmul.f32 %v4677, %v4752
        %v4769 = vmul.f32 %v4679, %v4753
        %v4770 = vmul.f32 %v4681, %v4754
        %v4771 = vmul.f32 %v4683, %v4755
        %v4772 = vmul.f32 %v4685, %v4756
        %v4773 = vmul.f32 %v4687, %v4757
        %v4774 = vmul.f32 %v4689, %v4758
        %v4775 = vmul.f32 %v4691, %v4759
        %v4776 = vmul.f32 %v4693, %v4760
        %v4777 = vmul.f32 %v4695, %v4761
        %v4778 = vmul.f32 %v4697, %v4762
        %v4779 = vmul.f32 %v4699, %v4763
        %4784 = vrot.lane.b32.xlu0 %v863, 64
        %v4785 = vpop.permute.xlu0 %4784
        %4786 = vrot.lane.b32.xlu0 %v869, 64
        %v4787 = vpop.permute.xlu0 %4786
        %4788 = vrot.lane.b32.xlu0 %v875, 64
        %v4789 = vpop.permute.xlu0 %4788
        %4790 = vrot.lane.b32.xlu0 %v881, 64
        %v4791 = vpop.permute.xlu0 %4790
        %v4797 = vsel %vm1427, %v4764, 0
        %v4800 = vsel %vm1427, %v4765, 0
        %v4803 = vsel %vm1427, %v4766, 0
        %v4806 = vsel %vm1427, %v4767, 0
        %4808 = vmatprep.subr.mxu0 0.0
        %4809 = vmatpush1.msra.mxu0 %v4785
        %4810 = vmatprep.subr.mxu0 0.0
        %4811 = vmatpush1.msra.mxu0 %v4787
        %4812 = vmatprep.subr.mxu0 0.0
        %4813 = vmatpush1.msra.mxu0 %v4789
        %4814 = vmatprep.subr.mxu0 0.0
        %4815 = vmatpush1.msra.mxu0 %v4791
        %4816 = vmatprep.subr.mxu0 0.0
        %4817 = vmatpush1.msra.mxu0 0.0
        %4818 = vmatprep.subr.mxu0 0.0
        %4819 = vmatpush1.msra.mxu0 0.0
        %4820 = vmatprep.subr.mxu0 0.0
        %4821 = vmatpush1.msra.mxu0 0.0
        %4822 = vmatprep.subr.mxu0 0.0
        %4823 = vmatpush1.msra.mxu0 0.0
        %4824 = vmatprep.subr.mxu0 0.0
        %4825 = vmatpush1.msra.mxu0 0.0
        %4826 = vmatprep.subr.mxu0 0.0
        %4827 = vmatpush1.msra.mxu0 0.0
        %4828 = vmatprep.subr.mxu0 0.0
        %4829 = vmatpush1.msra.mxu0 0.0
        %4830 = vmatprep.subr.mxu0 0.0
        %4831 = vmatpush1.msra.mxu0 0.0
        %4832 = vmatprep.subr.mxu0 0.0
        %4833 = vmatpush1.msra.mxu0 0.0
        %4834 = vmatprep.subr.mxu0 0.0
        %4835 = vmatpush1.msra.mxu0 0.0
        %4836 = vmatprep.subr.mxu0 0.0
        %4837 = vmatpush1.msra.mxu0 0.0
        %4838 = vmatprep.subr.mxu0 0.0
        %4839 = vmatpush1.msra.mxu0 0.0
        %4840 = vmatprep.subr.mxu0 0.0
        %4841 = vmatpush1.msra.mxu0 0.0
        %4842 = vmatprep.subr.mxu0 0.0
        %4843 = vmatpush1.msra.mxu0 0.0
        %4844 = vmatprep.subr.mxu0 0.0
        %4845 = vmatpush1.msra.mxu0 0.0
        %4846 = vmatprep.subr.mxu0 0.0
        %4847 = vmatpush1.msra.mxu0 0.0
        %4848 = vmatprep.subr.mxu0 0.0
        %4849 = vmatpush1.msra.mxu0 0.0
        %4850 = vmatprep.subr.mxu0 0.0
        %4851 = vmatpush1.msra.mxu0 0.0
        %4852 = vmatprep.subr.mxu0 0.0
        %4853 = vmatpush1.msra.mxu0 0.0
        %4854 = vmatprep.subr.mxu0 0.0
        %4855 = vmatpush1.msra.mxu0 0.0
        %4856 = vmatprep.subr.mxu0 0.0
        %4857 = vmatpush1.msra.mxu0 0.0
        %4858 = vmatprep.subr.mxu0 0.0
        %4859 = vmatpush1.msra.mxu0 0.0
        %4860 = vmatprep.subr.mxu0 0.0
        %4861 = vmatpush1.msra.mxu0 0.0
        %4862 = vmatprep.subr.mxu0 0.0
        %4863 = vmatpush1.msra.mxu0 0.0
        %4864 = vmatprep.subr.mxu0 0.0
        %4865 = vmatpush1.msra.mxu0 0.0
        %4866 = vmatprep.subr.mxu0 0.0
        %4867 = vmatpush1.msra.mxu0 0.0
        %4868 = vmatprep.subr.mxu0 0.0
        %4869 = vmatpush1.msra.mxu0 0.0
        %4870 = vmatprep.subr.mxu0 0.0
        %4871 = vmatpush1.msra.mxu0 0.0
        %4872 = vmatprep.mubr.f32.mxu0 0.0
        %4873 = vmatmul.mubr.f32.gmra.mrb[0].mxu0 %v4797
        %v4874 = vpop.f32.mrb[0].mxu0
        %v4875 = vadd.f32 0.0, %v4874
        %v4876 = vpop.f32.mrb[0].mxu0
        %4877 = vmatprep.mubr.f32.mxu0 0.0
        %4878 = vmatmul.mubr.f32.gmra.mrb[0].mxu0 %v4800
        %v4879 = vpop.f32.mrb[0].mxu0
        %v4880 = vadd.f32 0.0, %v4879
        %v4881 = vpop.f32.mrb[0].mxu0
        %4882 = vmatprep.mubr.f32.mxu0 0.0
        %4883 = vmatmul.mubr.f32.gmra.mrb[0].mxu0 %v4803
        %v4884 = vpop.f32.mrb[0].mxu0
        %v4885 = vadd.f32 0.0, %v4884
        %v4886 = vpop.f32.mrb[0].mxu0
        %4887 = vmatprep.mubr.f32.mxu0 0.0
        %4888 = vmatmul.mubr.f32.gmra.mrb[0].mxu0 %v4806
        %v4889 = vpop.f32.mrb[0].mxu0
        %v4890 = vadd.f32 0.0, %v4889
        %v4891 = vpop.f32.mrb[0].mxu0
        %4892 = vdwg.mxu0
        %4897 = vrot.lane.b32.xlu0 %v887, 64
        %v4898 = vpop.permute.xlu0 %4897
        %4899 = vrot.lane.b32.xlu0 %v893, 64
        %v4900 = vpop.permute.xlu0 %4899
        %4901 = vrot.lane.b32.xlu0 %v899, 64
        %v4902 = vpop.permute.xlu0 %4901
        %4903 = vrot.lane.b32.xlu0 %v905, 64
        %v4904 = vpop.permute.xlu0 %4903
        %v4910 = vsel %vm1427, %v4768, 0
        %v4913 = vsel %vm1427, %v4769, 0
        %v4916 = vsel %vm1427, %v4770, 0
        %v4919 = vsel %vm1427, %v4771, 0
        %4921 = vmatprep.subr.mxu0 0.0
        %4922 = vmatpush1.msra.mxu0 %v4898
        %4923 = vmatprep.subr.mxu0 0.0
        %4924 = vmatpush1.msra.mxu0 %v4900
        %4925 = vmatprep.subr.mxu0 0.0
        %4926 = vmatpush1.msra.mxu0 %v4902
        %4927 = vmatprep.subr.mxu0 0.0
        %4928 = vmatpush1.msra.mxu0 %v4904
        %4929 = vmatprep.subr.mxu0 0.0
        %4930 = vmatpush1.msra.mxu0 0.0
        %4931 = vmatprep.subr.mxu0 0.0
        %4932 = vmatpush1.msra.mxu0 0.0
        %4933 = vmatprep.subr.mxu0 0.0
        %4934 = vmatpush1.msra.mxu0 0.0
        %4935 = vmatprep.subr.mxu0 0.0
        %4936 = vmatpush1.msra.mxu0 0.0
        %4937 = vmatprep.subr.mxu0 0.0
        %4938 = vmatpush1.msra.mxu0 0.0
        %4939 = vmatprep.subr.mxu0 0.0
        %4940 = vmatpush1.msra.mxu0 0.0
        %4941 = vmatprep.subr.mxu0 0.0
        %4942 = vmatpush1.msra.mxu0 0.0
        %4943 = vmatprep.subr.mxu0 0.0
        %4944 = vmatpush1.msra.mxu0 0.0
        %4945 = vmatprep.subr.mxu0 0.0
        %4946 = vmatpush1.msra.mxu0 0.0
        %4947 = vmatprep.subr.mxu0 0.0
        %4948 = vmatpush1.msra.mxu0 0.0
        %4949 = vmatprep.subr.mxu0 0.0
        %4950 = vmatpush1.msra.mxu0 0.0
        %4951 = vmatprep.subr.mxu0 0.0
        %4952 = vmatpush1.msra.mxu0 0.0
        %4953 = vmatprep.subr.mxu0 0.0
        %4954 = vmatpush1.msra.mxu0 0.0
        %4955 = vmatprep.subr.mxu0 0.0
        %4956 = vmatpush1.msra.mxu0 0.0
        %4957 = vmatprep.subr.mxu0 0.0
        %4958 = vmatpush1.msra.mxu0 0.0
        %4959 = vmatprep.subr.mxu0 0.0
        %4960 = vmatpush1.msra.mxu0 0.0
        %4961 = vmatprep.subr.mxu0 0.0
        %4962 = vmatpush1.msra.mxu0 0.0
        %4963 = vmatprep.subr.mxu0 0.0
        %4964 = vmatpush1.msra.mxu0 0.0
        %4965 = vmatprep.subr.mxu0 0.0
        %4966 = vmatpush1.msra.mxu0 0.0
        %4967 = vmatprep.subr.mxu0 0.0
        %4968 = vmatpush1.msra.mxu0 0.0
        %4969 = vmatprep.subr.mxu0 0.0
        %4970 = vmatpush1.msra.mxu0 0.0
        %4971 = vmatprep.subr.mxu0 0.0
        %4972 = vmatpush1.msra.mxu0 0.0
        %4973 = vmatprep.subr.mxu0 0.0
        %4974 = vmatpush1.msra.mxu0 0.0
        %4975 = vmatprep.subr.mxu0 0.0
        %4976 = vmatpush1.msra.mxu0 0.0
        %4977 = vmatprep.subr.mxu0 0.0
        %4978 = vmatpush1.msra.mxu0 0.0
        %4979 = vmatprep.subr.mxu0 0.0
        %4980 = vmatpush1.msra.mxu0 0.0
        %4981 = vmatprep.subr.mxu0 0.0
        %4982 = vmatpush1.msra.mxu0 0.0
        %4983 = vmatprep.subr.mxu0 0.0
        %4984 = vmatpush1.msra.mxu0 0.0
        %4985 = vmatprep.mubr.f32.mxu0 0.0
        %4986 = vmatmul.mubr.f32.gmra.mrb[0].mxu0 %v4910
        %v4987 = vpop.f32.mrb[0].mxu0
        %v4988 = vadd.f32 0.0, %v4987
        %v4989 = vpop.f32.mrb[0].mxu0
        %4990 = vmatprep.mubr.f32.mxu0 0.0
        %4991 = vmatmul.mubr.f32.gmra.mrb[0].mxu0 %v4913
        %v4992 = vpop.f32.mrb[0].mxu0
        %v4993 = vadd.f32 0.0, %v4992
        %v4994 = vpop.f32.mrb[0].mxu0
        %4995 = vmatprep.mubr.f32.mxu0 0.0
        %4996 = vmatmul.mubr.f32.gmra.mrb[0].mxu0 %v4916
        %v4997 = vpop.f32.mrb[0].mxu0
        %v4998 = vadd.f32 0.0, %v4997
        %v4999 = vpop.f32.mrb[0].mxu0
        %5000 = vmatprep.mubr.f32.mxu0 0.0
        %5001 = vmatmul.mubr.f32.gmra.mrb[0].mxu0 %v4919
        %v5002 = vpop.f32.mrb[0].mxu0
        %v5003 = vadd.f32 0.0, %v5002
        %v5004 = vpop.f32.mrb[0].mxu0
        %5005 = vdwg.mxu0
        %5010 = vrot.lane.b32.xlu0 %v911, 64
        %v5011 = vpop.permute.xlu0 %5010
        %5012 = vrot.lane.b32.xlu0 %v917, 64
        %v5013 = vpop.permute.xlu0 %5012
        %5014 = vrot.lane.b32.xlu0 %v923, 64
        %v5015 = vpop.permute.xlu0 %5014
        %5016 = vrot.lane.b32.xlu0 %v929, 64
        %v5017 = vpop.permute.xlu0 %5016
        %v5023 = vsel %vm1427, %v4772, 0
        %v5026 = vsel %vm1427, %v4773, 0
        %v5029 = vsel %vm1427, %v4774, 0
        %v5032 = vsel %vm1427, %v4775, 0
        %5034 = vmatprep.subr.mxu0 0.0
        %5035 = vmatpush1.msra.mxu0 %v5011
        %5036 = vmatprep.subr.mxu0 0.0
        %5037 = vmatpush1.msra.mxu0 %v5013
        %5038 = vmatprep.subr.mxu0 0.0
        %5039 = vmatpush1.msra.mxu0 %v5015
        %5040 = vmatprep.subr.mxu0 0.0
        %5041 = vmatpush1.msra.mxu0 %v5017
        %5042 = vmatprep.subr.mxu0 0.0
        %5043 = vmatpush1.msra.mxu0 0.0
        %5044 = vmatprep.subr.mxu0 0.0
        %5045 = vmatpush1.msra.mxu0 0.0
        %5046 = vmatprep.subr.mxu0 0.0
        %5047 = vmatpush1.msra.mxu0 0.0
        %5048 = vmatprep.subr.mxu0 0.0
        %5049 = vmatpush1.msra.mxu0 0.0
        %5050 = vmatprep.subr.mxu0 0.0
        %5051 = vmatpush1.msra.mxu0 0.0
        %5052 = vmatprep.subr.mxu0 0.0
        %5053 = vmatpush1.msra.mxu0 0.0
        %5054 = vmatprep.subr.mxu0 0.0
        %5055 = vmatpush1.msra.mxu0 0.0
        %5056 = vmatprep.subr.mxu0 0.0
        %5057 = vmatpush1.msra.mxu0 0.0
        %5058 = vmatprep.subr.mxu0 0.0
        %5059 = vmatpush1.msra.mxu0 0.0
        %5060 = vmatprep.subr.mxu0 0.0
        %5061 = vmatpush1.msra.mxu0 0.0
        %5062 = vmatprep.subr.mxu0 0.0
        %5063 = vmatpush1.msra.mxu0 0.0
        %5064 = vmatprep.subr.mxu0 0.0
        %5065 = vmatpush1.msra.mxu0 0.0
        %5066 = vmatprep.subr.mxu0 0.0
        %5067 = vmatpush1.msra.mxu0 0.0
        %5068 = vmatprep.subr.mxu0 0.0
        %5069 = vmatpush1.msra.mxu0 0.0
        %5070 = vmatprep.subr.mxu0 0.0
        %5071 = vmatpush1.msra.mxu0 0.0
        %5072 = vmatprep.subr.mxu0 0.0
        %5073 = vmatpush1.msra.mxu0 0.0
        %5074 = vmatprep.subr.mxu0 0.0
        %5075 = vmatpush1.msra.mxu0 0.0
        %5076 = vmatprep.subr.mxu0 0.0
        %5077 = vmatpush1.msra.mxu0 0.0
        %5078 = vmatprep.subr.mxu0 0.0
        %5079 = vmatpush1.msra.mxu0 0.0
        %5080 = vmatprep.subr.mxu0 0.0
        %5081 = vmatpush1.msra.mxu0 0.0
        %5082 = vmatprep.subr.mxu0 0.0
        %5083 = vmatpush1.msra.mxu0 0.0
        %5084 = vmatprep.subr.mxu0 0.0
        %5085 = vmatpush1.msra.mxu0 0.0
        %5086 = vmatprep.subr.mxu0 0.0
        %5087 = vmatpush1.msra.mxu0 0.0
        %5088 = vmatprep.subr.mxu0 0.0
        %5089 = vmatpush1.msra.mxu0 0.0
        %5090 = vmatprep.subr.mxu0 0.0
        %5091 = vmatpush1.msra.mxu0 0.0
        %5092 = vmatprep.subr.mxu0 0.0
        %5093 = vmatpush1.msra.mxu0 0.0
        %5094 = vmatprep.subr.mxu0 0.0
        %5095 = vmatpush1.msra.mxu0 0.0
        %5096 = vmatprep.subr.mxu0 0.0
        %5097 = vmatpush1.msra.mxu0 0.0
        %5098 = vmatprep.mubr.f32.mxu0 0.0
        %5099 = vmatmul.mubr.f32.gmra.mrb[0].mxu0 %v5023
        %v5100 = vpop.f32.mrb[0].mxu0
        %v5101 = vadd.f32 0.0, %v5100
        %v5102 = vpop.f32.mrb[0].mxu0
        %5103 = vmatprep.mubr.f32.mxu0 0.0
        %5104 = vmatmul.mubr.f32.gmra.mrb[0].mxu0 %v5026
        %v5105 = vpop.f32.mrb[0].mxu0
        %v5106 = vadd.f32 0.0, %v5105
        %v5107 = vpop.f32.mrb[0].mxu0
        %5108 = vmatprep.mubr.f32.mxu0 0.0
        %5109 = vmatmul.mubr.f32.gmra.mrb[0].mxu0 %v5029
        %v5110 = vpop.f32.mrb[0].mxu0
        %v5111 = vadd.f32 0.0, %v5110
        %v5112 = vpop.f32.mrb[0].mxu0
        %5113 = vmatprep.mubr.f32.mxu0 0.0
        %5114 = vmatmul.mubr.f32.gmra.mrb[0].mxu0 %v5032
        %v5115 = vpop.f32.mrb[0].mxu0
        %v5116 = vadd.f32 0.0, %v5115
        %v5117 = vpop.f32.mrb[0].mxu0
        %5118 = vdwg.mxu0
        %5123 = vrot.lane.b32.xlu0 %v935, 64
        %v5124 = vpop.permute.xlu0 %5123
        %5125 = vrot.lane.b32.xlu0 %v941, 64
        %v5126 = vpop.permute.xlu0 %5125
        %5127 = vrot.lane.b32.xlu0 %v947, 64
        %v5128 = vpop.permute.xlu0 %5127
        %5129 = vrot.lane.b32.xlu0 %v953, 64
        %v5130 = vpop.permute.xlu0 %5129
        %v5136 = vsel %vm1427, %v4776, 0
        %v5139 = vsel %vm1427, %v4777, 0
        %v5142 = vsel %vm1427, %v4778, 0
        %v5145 = vsel %vm1427, %v4779, 0
        %5147 = vmatprep.subr.mxu0 0.0
        %5148 = vmatpush1.msra.mxu0 %v5124
        %5149 = vmatprep.subr.mxu0 0.0
        %5150 = vmatpush1.msra.mxu0 %v5126
        %5151 = vmatprep.subr.mxu0 0.0
        %5152 = vmatpush1.msra.mxu0 %v5128
        %5153 = vmatprep.subr.mxu0 0.0
        %5154 = vmatpush1.msra.mxu0 %v5130
        %5155 = vmatprep.subr.mxu0 0.0
        %5156 = vmatpush1.msra.mxu0 0.0
        %5157 = vmatprep.subr.mxu0 0.0
        %5158 = vmatpush1.msra.mxu0 0.0
        %5159 = vmatprep.subr.mxu0 0.0
        %5160 = vmatpush1.msra.mxu0 0.0
        %5161 = vmatprep.subr.mxu0 0.0
        %5162 = vmatpush1.msra.mxu0 0.0
        %5163 = vmatprep.subr.mxu0 0.0
        %5164 = vmatpush1.msra.mxu0 0.0
        %5165 = vmatprep.subr.mxu0 0.0
        %5166 = vmatpush1.msra.mxu0 0.0
        %5167 = vmatprep.subr.mxu0 0.0
        %5168 = vmatpush1.msra.mxu0 0.0
        %5169 = vmatprep.subr.mxu0 0.0
        %5170 = vmatpush1.msra.mxu0 0.0
        %5171 = vmatprep.subr.mxu0 0.0
        %5172 = vmatpush1.msra.mxu0 0.0
        %5173 = vmatprep.subr.mxu0 0.0
        %5174 = vmatpush1.msra.mxu0 0.0
        %5175 = vmatprep.subr.mxu0 0.0
        %5176 = vmatpush1.msra.mxu0 0.0
        %5177 = vmatprep.subr.mxu0 0.0
        %5178 = vmatpush1.msra.mxu0 0.0
        %5179 = vmatprep.subr.mxu0 0.0
        %5180 = vmatpush1.msra.mxu0 0.0
        %5181 = vmatprep.subr.mxu0 0.0
        %5182 = vmatpush1.msra.mxu0 0.0
        %5183 = vmatprep.subr.mxu0 0.0
        %5184 = vmatpush1.msra.mxu0 0.0
        %5185 = vmatprep.subr.mxu0 0.0
        %5186 = vmatpush1.msra.mxu0 0.0
        %5187 = vmatprep.subr.mxu0 0.0
        %5188 = vmatpush1.msra.mxu0 0.0
        %5189 = vmatprep.subr.mxu0 0.0
        %5190 = vmatpush1.msra.mxu0 0.0
        %5191 = vmatprep.subr.mxu0 0.0
        %5192 = vmatpush1.msra.mxu0 0.0
        %5193 = vmatprep.subr.mxu0 0.0
        %5194 = vmatpush1.msra.mxu0 0.0
        %5195 = vmatprep.subr.mxu0 0.0
        %5196 = vmatpush1.msra.mxu0 0.0
        %5197 = vmatprep.subr.mxu0 0.0
        %5198 = vmatpush1.msra.mxu0 0.0
        %5199 = vmatprep.subr.mxu0 0.0
        %5200 = vmatpush1.msra.mxu0 0.0
        %5201 = vmatprep.subr.mxu0 0.0
        %5202 = vmatpush1.msra.mxu0 0.0
        %5203 = vmatprep.subr.mxu0 0.0
        %5204 = vmatpush1.msra.mxu0 0.0
        %5205 = vmatprep.subr.mxu0 0.0
        %5206 = vmatpush1.msra.mxu0 0.0
        %5207 = vmatprep.subr.mxu0 0.0
        %5208 = vmatpush1.msra.mxu0 0.0
        %5209 = vmatprep.subr.mxu0 0.0
        %5210 = vmatpush1.msra.mxu0 0.0
        %5211 = vmatprep.mubr.f32.mxu0 0.0
        %5212 = vmatmul.mubr.f32.gmra.mrb[0].mxu0 %v5136
        %v5213 = vpop.f32.mrb[0].mxu0
        %v5214 = vadd.f32 0.0, %v5213
        %v5215 = vpop.f32.mrb[0].mxu0
        %5216 = vmatprep.mubr.f32.mxu0 0.0
        %5217 = vmatmul.mubr.f32.gmra.mrb[0].mxu0 %v5139
        %v5218 = vpop.f32.mrb[0].mxu0
        %v5219 = vadd.f32 0.0, %v5218
        %v5220 = vpop.f32.mrb[0].mxu0
        %5221 = vmatprep.mubr.f32.mxu0 0.0
        %5222 = vmatmul.mubr.f32.gmra.mrb[0].mxu0 %v5142
        %v5223 = vpop.f32.mrb[0].mxu0
        %v5224 = vadd.f32 0.0, %v5223
        %v5225 = vpop.f32.mrb[0].mxu0
        %5226 = vmatprep.mubr.f32.mxu0 0.0
        %5227 = vmatmul.mubr.f32.gmra.mrb[0].mxu0 %v5145
        %v5228 = vpop.f32.mrb[0].mxu0
        %v5229 = vadd.f32 0.0, %v5228
        %v5230 = vpop.f32.mrb[0].mxu0
        %5231 = vdwg.mxu0
        %5248 = vrot.lane.b32.xlu0 %v2747, 64
        %v5249 = vpop.permute.xlu0 %5248
        %5250 = vrot.lane.b32.xlu0 %v2752, 64
        %v5251 = vpop.permute.xlu0 %5250
        %5252 = vrot.lane.b32.xlu0 %v2757, 64
        %v5253 = vpop.permute.xlu0 %5252
        %5254 = vrot.lane.b32.xlu0 %v2762, 64
        %v5255 = vpop.permute.xlu0 %5254
        %5256 = vrot.lane.b32.xlu0 %v2860, 64
        %v5257 = vpop.permute.xlu0 %5256
        %5258 = vrot.lane.b32.xlu0 %v2865, 64
        %v5259 = vpop.permute.xlu0 %5258
        %5260 = vrot.lane.b32.xlu0 %v2870, 64
        %v5261 = vpop.permute.xlu0 %5260
        %5262 = vrot.lane.b32.xlu0 %v2875, 64
        %v5263 = vpop.permute.xlu0 %5262
        %5264 = vrot.lane.b32.xlu0 %v2973, 64
        %v5265 = vpop.permute.xlu0 %5264
        %5266 = vrot.lane.b32.xlu0 %v2978, 64
        %v5267 = vpop.permute.xlu0 %5266
        %5268 = vrot.lane.b32.xlu0 %v2983, 64
        %v5269 = vpop.permute.xlu0 %5268
        %5270 = vrot.lane.b32.xlu0 %v2988, 64
        %v5271 = vpop.permute.xlu0 %5270
        %5272 = vrot.lane.b32.xlu0 %v3086, 64
        %v5273 = vpop.permute.xlu0 %5272
        %5274 = vrot.lane.b32.xlu0 %v3091, 64
        %v5275 = vpop.permute.xlu0 %5274
        %5276 = vrot.lane.b32.xlu0 %v3096, 64
        %v5277 = vpop.permute.xlu0 %5276
        %5278 = vrot.lane.b32.xlu0 %v3101, 64
        %v5279 = vpop.permute.xlu0 %5278
        %5312 = vrot.lane.b32.xlu0 %v4875, 64
        %v5313 = vpop.permute.xlu0 %5312
        %5314 = vrot.lane.b32.xlu0 %v4880, 64
        %v5315 = vpop.permute.xlu0 %5314
        %5316 = vrot.lane.b32.xlu0 %v4885, 64
        %v5317 = vpop.permute.xlu0 %5316
        %5318 = vrot.lane.b32.xlu0 %v4890, 64
        %v5319 = vpop.permute.xlu0 %5318
        %5320 = vrot.lane.b32.xlu0 %v4988, 64
        %v5321 = vpop.permute.xlu0 %5320
        %5322 = vrot.lane.b32.xlu0 %v4993, 64
        %v5323 = vpop.permute.xlu0 %5322
        %5324 = vrot.lane.b32.xlu0 %v4998, 64
        %v5325 = vpop.permute.xlu0 %5324
        %5326 = vrot.lane.b32.xlu0 %v5003, 64
        %v5327 = vpop.permute.xlu0 %5326
        %5328 = vrot.lane.b32.xlu0 %v5101, 64
        %v5329 = vpop.permute.xlu0 %5328
        %5330 = vrot.lane.b32.xlu0 %v5106, 64
        %v5331 = vpop.permute.xlu0 %5330
        %5332 = vrot.lane.b32.xlu0 %v5111, 64
        %v5333 = vpop.permute.xlu0 %5332
        %5334 = vrot.lane.b32.xlu0 %v5116, 64
        %v5335 = vpop.permute.xlu0 %5334
        %5336 = vrot.lane.b32.xlu0 %v5214, 64
        %v5337 = vpop.permute.xlu0 %5336
        %5338 = vrot.lane.b32.xlu0 %v5219, 64
        %v5339 = vpop.permute.xlu0 %5338
        %5340 = vrot.lane.b32.xlu0 %v5224, 64
        %v5341 = vpop.permute.xlu0 %5340
        %5342 = vrot.lane.b32.xlu0 %v5229, 64
        %v5343 = vpop.permute.xlu0 %5342
        %v5360 = vsel %vm966, %v1683, %v5249
        %v5361 = vsel %vm966, %v1688, %v5251
        %v5362 = vsel %vm966, %v1693, %v5253
        %v5363 = vsel %vm966, %v1698, %v5255
        %v5364 = vsel %vm966, %v1780, %v5257
        %v5365 = vsel %vm966, %v1785, %v5259
        %v5366 = vsel %vm966, %v1790, %v5261
        %v5367 = vsel %vm966, %v1795, %v5263
        %v5368 = vsel %vm966, %v1877, %v5265
        %v5369 = vsel %vm966, %v1882, %v5267
        %v5370 = vsel %vm966, %v1887, %v5269
        %v5371 = vsel %vm966, %v1892, %v5271
        %v5372 = vsel %vm966, %v1974, %v5273
        %v5373 = vsel %vm966, %v1979, %v5275
        %v5374 = vsel %vm966, %v1984, %v5277
        %v5375 = vsel %vm966, %v1989, %v5279
        %v5376 = vsel %vm966, %v3811, %v5313
        %v5377 = vsel %vm966, %v3816, %v5315
        %v5378 = vsel %vm966, %v3821, %v5317
        %v5379 = vsel %vm966, %v3826, %v5319
        %v5380 = vsel %vm966, %v3908, %v5321
        %v5381 = vsel %vm966, %v3913, %v5323
        %v5382 = vsel %vm966, %v3918, %v5325
        %v5383 = vsel %vm966, %v3923, %v5327
        %v5384 = vsel %vm966, %v4005, %v5329
        %v5385 = vsel %vm966, %v4010, %v5331
        %v5386 = vsel %vm966, %v4015, %v5333
        %v5387 = vsel %vm966, %v4020, %v5335
        %v5388 = vsel %vm966, %v4102, %v5337
        %v5389 = vsel %vm966, %v4107, %v5339
        %v5390 = vsel %vm966, %v4112, %v5341
        %v5391 = vsel %vm966, %v4117, %v5343
        %v5392 = vld [vmem:[#allocation7] sm:$0xff]
        %v5393 = vld [vmem:[#allocation7 + $0x8] sm:$0xff]
        %v5394 = vld [vmem:[#allocation7 + $0x10] sm:$0xff]
        %v5395 = vld [vmem:[#allocation7 + $0x18] sm:$0xff]
        %v5396 = vld [vmem:[#allocation7 + $0x20] sm:$0xff]
        %v5397 = vld [vmem:[#allocation7 + $0x28] sm:$0xff]
        %v5398 = vld [vmem:[#allocation7 + $0x30] sm:$0xff]
        %v5399 = vld [vmem:[#allocation7 + $0x38] sm:$0xff]
        %v5400 = vld [vmem:[#allocation7 + $0x40] sm:$0xff]
        %v5401 = vld [vmem:[#allocation7 + $0x48] sm:$0xff]
        %v5402 = vld [vmem:[#allocation7 + $0x50] sm:$0xff]
        %v5403 = vld [vmem:[#allocation7 + $0x58] sm:$0xff]
        %v5404 = vld [vmem:[#allocation7 + $0x60] sm:$0xff]
        %v5405 = vld [vmem:[#allocation7 + $0x68] sm:$0xff]
        %v5406 = vld [vmem:[#allocation7 + $0x70] sm:$0xff]
        %v5407 = vld [vmem:[#allocation7 + $0x78] sm:$0xff]
        %v5408 = vld [vmem:[#allocation7 + $0x80] sm:$0xff]
        %v5409 = vld [vmem:[#allocation7 + $0x88] sm:$0xff]
        %v5410 = vld [vmem:[#allocation7 + $0x90] sm:$0xff]
        %v5411 = vld [vmem:[#allocation7 + $0x98] sm:$0xff]
        %v5412 = vld [vmem:[#allocation7 + $0xa0] sm:$0xff]
        %v5413 = vld [vmem:[#allocation7 + $0xa8] sm:$0xff]
        %v5414 = vld [vmem:[#allocation7 + $0xb0] sm:$0xff]
        %v5415 = vld [vmem:[#allocation7 + $0xb8] sm:$0xff]
        %v5416 = vld [vmem:[#allocation7 + $0xc0] sm:$0xff]
        %v5417 = vld [vmem:[#allocation7 + $0xc8] sm:$0xff]
        %v5418 = vld [vmem:[#allocation7 + $0xd0] sm:$0xff]
        %v5419 = vld [vmem:[#allocation7 + $0xd8] sm:$0xff]
        %v5420 = vld [vmem:[#allocation7 + $0xe0] sm:$0xff]
        %v5421 = vld [vmem:[#allocation7 + $0xe8] sm:$0xff]
        %v5422 = vld [vmem:[#allocation7 + $0xf0] sm:$0xff]
        %v5423 = vld [vmem:[#allocation7 + $0xf8] sm:$0xff]
        %v5424 = vld [vmem:[#allocation7 + $0x100] sm:$0xff]
        %v5425 = vld [vmem:[#allocation7 + $0x108] sm:$0xff]
        %v5426 = vld [vmem:[#allocation7 + $0x110] sm:$0xff]
        %v5427 = vld [vmem:[#allocation7 + $0x118] sm:$0xff]
        %v5428 = vld [vmem:[#allocation7 + $0x120] sm:$0xff]
        %v5429 = vld [vmem:[#allocation7 + $0x128] sm:$0xff]
        %v5430 = vld [vmem:[#allocation7 + $0x130] sm:$0xff]
        %v5431 = vld [vmem:[#allocation7 + $0x138] sm:$0xff]
        %v5432 = vld [vmem:[#allocation7 + $0x140] sm:$0xff]
        %v5433 = vld [vmem:[#allocation7 + $0x148] sm:$0xff]
        %v5434 = vld [vmem:[#allocation7 + $0x150] sm:$0xff]
        %v5435 = vld [vmem:[#allocation7 + $0x158] sm:$0xff]
        %v5436 = vld [vmem:[#allocation7 + $0x160] sm:$0xff]
        %v5437 = vld [vmem:[#allocation7 + $0x168] sm:$0xff]
        %v5438 = vld [vmem:[#allocation7 + $0x170] sm:$0xff]
        %v5439 = vld [vmem:[#allocation7 + $0x178] sm:$0xff]
        %v5440 = vld [vmem:[#allocation7 + $0x180] sm:$0xff]
        %v5441 = vld [vmem:[#allocation7 + $0x188] sm:$0xff]
        %v5442 = vld [vmem:[#allocation7 + $0x190] sm:$0xff]
        %v5443 = vld [vmem:[#allocation7 + $0x198] sm:$0xff]
        %v5444 = vld [vmem:[#allocation7 + $0x1a0] sm:$0xff]
        %v5445 = vld [vmem:[#allocation7 + $0x1a8] sm:$0xff]
        %v5446 = vld [vmem:[#allocation7 + $0x1b0] sm:$0xff]
        %v5447 = vld [vmem:[#allocation7 + $0x1b8] sm:$0xff]
        %v5448 = vld [vmem:[#allocation7 + $0x1c0] sm:$0xff]
        %v5449 = vld [vmem:[#allocation7 + $0x1c8] sm:$0xff]
        %v5450 = vld [vmem:[#allocation7 + $0x1d0] sm:$0xff]
        %v5451 = vld [vmem:[#allocation7 + $0x1d8] sm:$0xff]
        %v5452 = vld [vmem:[#allocation7 + $0x1e0] sm:$0xff]
        %v5453 = vld [vmem:[#allocation7 + $0x1e8] sm:$0xff]
        %v5454 = vld [vmem:[#allocation7 + $0x1f0] sm:$0xff]
        %v5455 = vld [vmem:[#allocation7 + $0x1f8] sm:$0xff]
        %v5456 = vld [vmem:[%s3] sm:$0x3]
        %v5458 = vlaneseq
        %v5459 = vshrl.u32 %v5458, 7
        %v5460 = vsub.s32 0, %v5459
        %v5461 = vrot.slane %v5456, %v5460
        %v5462 = vlaneseq
        %v5463 = vshrl.u32 %v5462, 7
        %v5464 = vsub.s32 1, %v5463
        %v5465 = vrot.slane %v5456, %v5464
        %5468 = vmatprep.subr.mxu0 %v5393
        %5469 = vmatpush1.msra.mxu0 %v5392
        %5470 = vmatprep.subr.mxu0 %v5395
        %5471 = vmatpush1.msra.mxu0 %v5394
        %5472 = vmatprep.subr.mxu0 %v5397
        %5473 = vmatpush1.msra.mxu0 %v5396
        %5474 = vmatprep.subr.mxu0 %v5399
        %5475 = vmatpush1.msra.mxu0 %v5398
        %5476 = vmatprep.subr.mxu0 %v5401
        %5477 = vmatpush1.msra.mxu0 %v5400
        %5478 = vmatprep.subr.mxu0 %v5403
        %5479 = vmatpush1.msra.mxu0 %v5402
        %5480 = vmatprep.subr.mxu0 %v5405
        %5481 = vmatpush1.msra.mxu0 %v5404
        %5482 = vmatprep.subr.mxu0 %v5407
        %5483 = vmatpush1.msra.mxu0 %v5406
        %5484 = vmatprep.subr.mxu0 %v5409
        %5485 = vmatpush1.msra.mxu0 %v5408
        %5486 = vmatprep.subr.mxu0 %v5411
        %5487 = vmatpush1.msra.mxu0 %v5410
        %5488 = vmatprep.subr.mxu0 %v5413
        %5489 = vmatpush1.msra.mxu0 %v5412
        %5490 = vmatprep.subr.mxu0 %v5415
        %5491 = vmatpush1.msra.mxu0 %v5414
        %5492 = vmatprep.subr.mxu0 %v5417
        %5493 = vmatpush1.msra.mxu0 %v5416
        %5494 = vmatprep.subr.mxu0 %v5419
        %5495 = vmatpush1.msra.mxu0 %v5418
        %5496 = vmatprep.subr.mxu0 %v5421
        %5497 = vmatpush1.msra.mxu0 %v5420
        %5498 = vmatprep.subr.mxu0 %v5423
        %5499 = vmatpush1.msra.mxu0 %v5422
        %5500 = vmatprep.subr.mxu0 %v5425
        %5501 = vmatpush1.msra.mxu0 %v5424
        %5502 = vmatprep.subr.mxu0 %v5427
        %5503 = vmatpush1.msra.mxu0 %v5426
        %5504 = vmatprep.subr.mxu0 %v5429
        %5505 = vmatpush1.msra.mxu0 %v5428
        %5506 = vmatprep.subr.mxu0 %v5431
        %5507 = vmatpush1.msra.mxu0 %v5430
        %5508 = vmatprep.subr.mxu0 %v5433
        %5509 = vmatpush1.msra.mxu0 %v5432
        %5510 = vmatprep.subr.mxu0 %v5435
        %5511 = vmatpush1.msra.mxu0 %v5434
        %5512 = vmatprep.subr.mxu0 %v5437
        %5513 = vmatpush1.msra.mxu0 %v5436
        %5514 = vmatprep.subr.mxu0 %v5439
        %5515 = vmatpush1.msra.mxu0 %v5438
        %5516 = vmatprep.subr.mxu0 %v5441
        %5517 = vmatpush1.msra.mxu0 %v5440
        %5518 = vmatprep.subr.mxu0 %v5443
        %5519 = vmatpush1.msra.mxu0 %v5442
        %5520 = vmatprep.subr.mxu0 %v5445
        %5521 = vmatpush1.msra.mxu0 %v5444
        %5522 = vmatprep.subr.mxu0 %v5447
        %5523 = vmatpush1.msra.mxu0 %v5446
        %5524 = vmatprep.subr.mxu0 %v5449
        %5525 = vmatpush1.msra.mxu0 %v5448
        %5526 = vmatprep.subr.mxu0 %v5451
        %5527 = vmatpush1.msra.mxu0 %v5450
        %5528 = vmatprep.subr.mxu0 %v5453
        %5529 = vmatpush1.msra.mxu0 %v5452
        %5530 = vmatprep.subr.mxu0 %v5455
        %5531 = vmatpush1.msra.mxu0 %v5454
        %5532 = vmatprep.mubr.f32.mxu0 %v5376
        %5533 = vmatmul.mubr.f32.gmra.mrb[0].mxu0 %v5360
        %v5534 = vpop.f32.mrb[0].mxu0
        %v5535 = vadd.f32 %v5461, %v5534
        %v5536 = vpop.f32.mrb[0].mxu0
        %v5537 = vadd.f32 %v5465, %v5536
        %5538 = vmatprep.mubr.f32.mxu0 %v5377
        %5539 = vmatmul.mubr.f32.gmra.mrb[0].mxu0 %v5361
        %v5540 = vpop.f32.mrb[0].mxu0
        %v5541 = vadd.f32 %v5461, %v5540
        %v5542 = vpop.f32.mrb[0].mxu0
        %v5543 = vadd.f32 %v5465, %v5542
        %5544 = vmatprep.mubr.f32.mxu0 %v5378
        %5545 = vmatmul.mubr.f32.gmra.mrb[0].mxu0 %v5362
        %v5546 = vpop.f32.mrb[0].mxu0
        %v5547 = vadd.f32 %v5461, %v5546
        %v5548 = vpop.f32.mrb[0].mxu0
        %v5549 = vadd.f32 %v5465, %v5548
        %5550 = vmatprep.mubr.f32.mxu0 %v5379
        %5551 = vmatmul.mubr.f32.gmra.mrb[0].mxu0 %v5363
        %v5552 = vpop.f32.mrb[0].mxu0
        %v5553 = vadd.f32 %v5461, %v5552
        %v5554 = vpop.f32.mrb[0].mxu0
        %v5555 = vadd.f32 %v5465, %v5554
        %5556 = vmatprep.mubr.f32.mxu0 %v5380
        %5557 = vmatmul.mubr.f32.gmra.mrb[0].mxu0 %v5364
        %v5558 = vpop.f32.mrb[0].mxu0
        %v5559 = vadd.f32 %v5461, %v5558
        %v5560 = vpop.f32.mrb[0].mxu0
        %v5561 = vadd.f32 %v5465, %v5560
        %5562 = vmatprep.mubr.f32.mxu0 %v5381
        %5563 = vmatmul.mubr.f32.gmra.mrb[0].mxu0 %v5365
        %v5564 = vpop.f32.mrb[0].mxu0
        %v5565 = vadd.f32 %v5461, %v5564
        %v5566 = vpop.f32.mrb[0].mxu0
        %v5567 = vadd.f32 %v5465, %v5566
        %5568 = vmatprep.mubr.f32.mxu0 %v5382
        %5569 = vmatmul.mubr.f32.gmra.mrb[0].mxu0 %v5366
        %v5570 = vpop.f32.mrb[0].mxu0
        %v5571 = vadd.f32 %v5461, %v5570
        %v5572 = vpop.f32.mrb[0].mxu0
        %v5573 = vadd.f32 %v5465, %v5572
        %5574 = vmatprep.mubr.f32.mxu0 %v5383
        %5575 = vmatmul.mubr.f32.gmra.mrb[0].mxu0 %v5367
        %v5576 = vpop.f32.mrb[0].mxu0
        %v5577 = vadd.f32 %v5461, %v5576
        %v5578 = vpop.f32.mrb[0].mxu0
        %v5579 = vadd.f32 %v5465, %v5578
        %5580 = vmatprep.mubr.f32.mxu0 %v5384
        %5581 = vmatmul.mubr.f32.gmra.mrb[0].mxu0 %v5368
        %v5582 = vpop.f32.mrb[0].mxu0
        %v5583 = vadd.f32 %v5461, %v5582
        %v5584 = vpop.f32.mrb[0].mxu0
        %v5585 = vadd.f32 %v5465, %v5584
        %5586 = vmatprep.mubr.f32.mxu0 %v5385
        %5587 = vmatmul.mubr.f32.gmra.mrb[0].mxu0 %v5369
        %v5588 = vpop.f32.mrb[0].mxu0
        %v5589 = vadd.f32 %v5461, %v5588
        %v5590 = vpop.f32.mrb[0].mxu0
        %v5591 = vadd.f32 %v5465, %v5590
        %5592 = vmatprep.mubr.f32.mxu0 %v5386
        %5593 = vmatmul.mubr.f32.gmra.mrb[0].mxu0 %v5370
        %v5594 = vpop.f32.mrb[0].mxu0
        %v5595 = vadd.f32 %v5461, %v5594
        %v5596 = vpop.f32.mrb[0].mxu0
        %v5597 = vadd.f32 %v5465, %v5596
        %5598 = vmatprep.mubr.f32.mxu0 %v5387
        %5599 = vmatmul.mubr.f32.gmra.mrb[0].mxu0 %v5371
        %v5600 = vpop.f32.mrb[0].mxu0
        %v5601 = vadd.f32 %v5461, %v5600
        %v5602 = vpop.f32.mrb[0].mxu0
        %v5603 = vadd.f32 %v5465, %v5602
        %5604 = vmatprep.mubr.f32.mxu0 %v5388
        %5605 = vmatmul.mubr.f32.gmra.mrb[0].mxu0 %v5372
        %v5606 = vpop.f32.mrb[0].mxu0
        %v5607 = vadd.f32 %v5461, %v5606
        %v5608 = vpop.f32.mrb[0].mxu0
        %v5609 = vadd.f32 %v5465, %v5608
        %5610 = vmatprep.mubr.f32.mxu0 %v5389
        %5611 = vmatmul.mubr.f32.gmra.mrb[0].mxu0 %v5373
        %v5612 = vpop.f32.mrb[0].mxu0
        %v5613 = vadd.f32 %v5461, %v5612
        %v5614 = vpop.f32.mrb[0].mxu0
        %v5615 = vadd.f32 %v5465, %v5614
        %5616 = vmatprep.mubr.f32.mxu0 %v5390
        %5617 = vmatmul.mubr.f32.gmra.mrb[0].mxu0 %v5374
        %v5618 = vpop.f32.mrb[0].mxu0
        %v5619 = vadd.f32 %v5461, %v5618
        %v5620 = vpop.f32.mrb[0].mxu0
        %v5621 = vadd.f32 %v5465, %v5620
        %5622 = vmatprep.mubr.f32.mxu0 %v5391
        %5623 = vmatmul.mubr.f32.gmra.mrb[0].mxu0 %v5375
        %v5624 = vpop.f32.mrb[0].mxu0
        %v5625 = vadd.f32 %v5461, %v5624
        %v5626 = vpop.f32.mrb[0].mxu0
        %v5627 = vadd.f32 %v5465, %v5626
        %5628 = vdwg.mxu0
        %5629 = vst [vmem:[%s245] sm:$0xff] %v5535
        %5630 = vst [vmem:[%s245 + $0x8] sm:$0xff] %v5537
        %5631 = vst [vmem:[%s245 + $0x10] sm:$0xff] %v5541
        %5632 = vst [vmem:[%s245 + $0x18] sm:$0xff] %v5543
        %5633 = vst [vmem:[%s245 + $0x20] sm:$0xff] %v5547
        %5634 = vst [vmem:[%s245 + $0x28] sm:$0xff] %v5549
        %5635 = vst [vmem:[%s245 + $0x30] sm:$0xff] %v5553
        %5636 = vst [vmem:[%s245 + $0x38] sm:$0xff] %v5555
        %5637 = vst [vmem:[%s245 + $0x40] sm:$0xff] %v5559
        %5638 = vst [vmem:[%s245 + $0x48] sm:$0xff] %v5561
        %5639 = vst [vmem:[%s245 + $0x50] sm:$0xff] %v5565
        %5640 = vst [vmem:[%s245 + $0x58] sm:$0xff] %v5567
        %5641 = vst [vmem:[%s245 + $0x60] sm:$0xff] %v5571
        %5642 = vst [vmem:[%s245 + $0x68] sm:$0xff] %v5573
        %5643 = vst [vmem:[%s245 + $0x70] sm:$0xff] %v5577
        %5644 = vst [vmem:[%s245 + $0x78] sm:$0xff] %v5579
        %5645 = vst [vmem:[%s245 + $0x80] sm:$0xff] %v5583
        %5646 = vst [vmem:[%s245 + $0x88] sm:$0xff] %v5585
        %5647 = vst [vmem:[%s245 + $0x90] sm:$0xff] %v5589
        %5648 = vst [vmem:[%s245 + $0x98] sm:$0xff] %v5591
        %5649 = vst [vmem:[%s245 + $0xa0] sm:$0xff] %v5595
        %5650 = vst [vmem:[%s245 + $0xa8] sm:$0xff] %v5597
        %5651 = vst [vmem:[%s245 + $0xb0] sm:$0xff] %v5601
        %5652 = vst [vmem:[%s245 + $0xb8] sm:$0xff] %v5603
        %5653 = vst [vmem:[%s245 + $0xc0] sm:$0xff] %v5607
        %5654 = vst [vmem:[%s245 + $0xc8] sm:$0xff] %v5609
        %5655 = vst [vmem:[%s245 + $0xd0] sm:$0xff] %v5613
        %5656 = vst [vmem:[%s245 + $0xd8] sm:$0xff] %v5615
        %5657 = vst [vmem:[%s245 + $0xe0] sm:$0xff] %v5619
        %5658 = vst [vmem:[%s245 + $0xe8] sm:$0xff] %v5621
        %5659 = vst [vmem:[%s245 + $0xf0] sm:$0xff] %v5625
        %5660 = vst [vmem:[%s245 + $0xf8] sm:$0xff] %v5627
        %s5661 = sand.u32 %s119, 1
        %s5662 = scalar_lea.sflag [#allocation4], %s5661
        %s5663 = sand.u32 %s119, 1
        %s5664 = smul.addr %s5663, 256
        %s5665 = scalar_lea.vmem [#allocation8], %s5664
        // Predicated region
        $region49: #{tpu_custom_call.1} parent=35 // pred_check
          %p5666 = pneg %p129
        $region50: #{tpu_custom_call.1} parent=35 // pred_check_branch
          %5668 = sbr.rel (%p5666) target = $region52
        $region51: #{tpu_custom_call.1} parent=35 // pred_region
          %s5669 = smul.u32 4, %s22
          %s5671 = ssub.s32 4096, 4096
          %5672 = vsyncadd %s5662, %s5671
          %s5673 = smul.addr %s5669, 8
          %s5674 = smul.addr %s5673, 128
          %s5675 = scalar_lea.hbm %s4, %s5674
          %s5676 = sshll.u32 %s5665, 4
          %s5677 = int_to_ptr.vmem [resolvable:$true] %s5676
          %5682 = dma.vmem_to_hbm [thread:$0]  %s5677, 4096, %s5675, %s5662, 256, 256, 16
        $region52: #{tpu_custom_call.1} parent=35 // pred_fallthru
          _
      $region36: #{tpu_custom_call.1} parent=5 // pred_fallthru
        _
      %p5683 = scmp.le.s32.totalorder 2, %s17
      // Predicated region
      $region53: #{tpu_custom_call.1} parent=5 // pred_check
        %p5684 = pneg %p5683
      $region54: #{tpu_custom_call.1} parent=5 // pred_check_branch
        %5686 = sbr.rel (%p5684) target = $region56
      $region55: #{tpu_custom_call.1} parent=5 // pred_region
        %s5687 = ssub.s32 %s17, 2
        // Predicated region
        $region57: #{tpu_custom_call.1} parent=55 // pred_check
          %p5688 = pneg %p135
        $region58: #{tpu_custom_call.1} parent=55 // pred_check_branch
          %5690 = sbr.rel (%p5688) target = $region60
        $region59: #{tpu_custom_call.1} parent=55 // pred_region
          %s5691 = sand.u32 %s120, 1
          %s5692 = scalar_lea.sflag [#allocation4], %s5691
          %s5693 = sand.u32 %s120, 1
          %s5694 = smul.addr %s5693, 256
          %s5695 = scalar_lea.vmem [#allocation8], %s5694
          %5696 = dma.done %s5692, 4096
        $region60: #{tpu_custom_call.1} parent=55 // pred_fallthru
          _
      $region56: #{tpu_custom_call.1} parent=5 // pred_fallthru
        _
    $region6: #{tpu_custom_call.1} parent=1 // loop_footer
      %s21 = sadd.s32 1, %s17
    $region7: #{tpu_custom_call.1} parent=1 // loop_footer_branch
      %16 = sbr.rel target = $region3
    $region8: #{tpu_custom_call.1} parent=1 // loop_exit
      _
    %5697 = vsyncpa [#allocation3], 1
    %s5698 = scalar_lea.sflag [#allocation3], 1
    %5699 = vsyncpa %s5698, 1
    %5700 = vsyncpa [#allocation6], 1
    %5701 = vsyncpa [#allocation4], 1
    %s5702 = scalar_lea.sflag [#allocation4], 1
    %5703 = vsyncpa %s5702, 1

</llo_original>
